<compile_context>
chip_gen: v5e
topology: v5e:2x2
jax: 0.10.0
libtpu: 0.0.40
codegen_flags: <defaults>
</compile_context>

<pallas_src>
import numpy as np
import jax
import jax.numpy as jnp
from jax import lax
from jax.experimental import pallas as pl
from jax.experimental.pallas import tpu as pltpu

# --- config (small synthetic shapes consistent with the module) -------------
HEAD_NUM = 4
HEAD_DIM = 16
NEWS_DIM = HEAD_NUM * HEAD_DIM          # 64
ATT_HID = 32                            # cfg.model.attention_hidden_dim
BATCH = 16                              # batch of users
SEQ = 8                                 # number of clicked news per user


def user_encoder_kernel(x_ref, lens_ref, wqkv_ref, fc1_w_ref, fc1b_fc2w_ref,
                        fc2_b_ref, out_ref):
    tb, seq, d = x_ref.shape
    m = tb * seq
    x = x_ref[...].reshape(m, d)                          # (M, D)

    # --- fused QKV projection: one MXU matmul with M = tb*seq rows ---
    qkv = jnp.dot(x, wqkv_ref[...],
                  preferred_element_type=jnp.float32)     # (M, 3D)
    qkv3 = qkv.reshape(tb, seq, 3 * d)                    # leading-dim split (layout-free)

    # --- masks rebuilt in-kernel from per-user lengths (no mask DMAs) ---
    lens = lens_ref[...]                                  # (tb, 1) int32
    key_iota = lax.broadcasted_iota(jnp.int32, (tb, 1, seq), 2)
    key_mask = (key_iota < lens[:, :, None]).astype(jnp.float32)   # (tb, 1, S)
    seq_iota = lax.broadcasted_iota(jnp.int32, (tb, seq, 1), 1)
    seq_mask = (seq_iota < lens[:, :, None]).astype(jnp.float32)   # (tb, S, 1)

    scale = 1.0 / float(np.sqrt(HEAD_DIM))

    # --- per-head attention, batched over the tb users of this block ---
    # (Static H=4 unroll; single-leading-batch einsums are the Mosaic-friendly
    #  form.  Head slices are plain lane slices of the hoisted qkv3.)
    ctx_parts = []
    for h in range(HEAD_NUM):
        lo = h * HEAD_DIM
        q_h = qkv3[..., lo:lo + HEAD_DIM]                         # (tb, S, hd)
        k_h = qkv3[..., d + lo:d + lo + HEAD_DIM]
        v_h = qkv3[..., 2 * d + lo:2 * d + lo + HEAD_DIM]
        sc = jnp.einsum('tqd,tkd->tqk', q_h, k_h,
                        preferred_element_type=jnp.float32) * scale
        sc = jnp.exp(sc) * key_mask                               # (tb,S,S)*(tb,1,S)
        a = sc * pl.reciprocal(jnp.sum(sc, axis=-1, keepdims=True) + 1e-8)
        ctx_parts.append(jnp.einsum('tqk,tkd->tqd', a, v_h,
                                    preferred_element_type=jnp.float32))
    ctx = jnp.concatenate(ctx_parts, axis=-1)                     # (tb, S, D)

    # --- attention pooling over the sequence ---
    fc1_b = fc1b_fc2w_ref[0:1, :]                                 # (1, ATT_HID)
    fc2_w = fc1b_fc2w_ref[1:2, :]                                 # (1, ATT_HID)
    e = jnp.tanh(jnp.dot(ctx.reshape(m, d), fc1_w_ref[...],
                         preferred_element_type=jnp.float32) + fc1_b)
    # fc2 has a 1-wide output: VPU multiply + lane reduction, not the MXU.
    logits = jnp.sum(e * fc2_w, axis=-1, keepdims=True) + fc2_b_ref[0]
    alpha = jnp.exp(logits).reshape(tb, seq, 1) * seq_mask        # (tb, S, 1)
    alpha = alpha * pl.reciprocal(jnp.sum(alpha, axis=1, keepdims=True) + 1e-8)
    out_ref[...] = jnp.sum(ctx * alpha, axis=1)                   # (tb, D)


def _choose_tb(B, S):
    """Pick the per-step user block.

    Small batches run as ONE grid step (per-step fixed cost ~0.35 us dominates
    and single-TC chips (v5e/v6e) gain nothing from splitting).  Only when
    B*S is large enough for a second TensorCore (v7x) to amortize the split do
    we use >= 2 "parallel" steps, capping the per-step rows so the VMEM
    footprint stays well under the 32 MiB scoped default (64 MiB v7x physical).
    """
    rows = B * S
    if B < 2 or B % 2 != 0 or rows < 2048:
        return B
    tb = B // 2
    while tb % 2 == 0 and tb * S > 8192:
        tb //= 2
    return tb


def user_encoder(clicked_news, clicked_mask, params, *, tb=None):
    """clicked_news: (B, S, D) f32, clicked_mask: (B, S) -> (B, D) f32."""
    B, S, D = clicked_news.shape
    wq, wk, wv, fc1_w, fc1_b, fc2_w, fc2_b = params

    if tb is None:
        tb = _choose_tb(B, S)
    assert B % tb == 0

    # Per-user valid-click lengths (GLORY's clicked_mask is a prefix mask).
    # Masks are regenerated in-kernel from this (B,1) int32 column, replacing
    # two lane-sparse mask DMA streams with a few bytes.
    lens = jnp.sum(clicked_mask.astype(jnp.int32), axis=1, keepdims=True)

    wqkv = jnp.concatenate([wq, wk, wv], axis=1)                  # (D, 3D)
    fc1b_fc2w = jnp.concatenate([fc1_b.reshape(1, ATT_HID),
                                 fc2_w.reshape(1, ATT_HID)], axis=0)  # (2, ATT_HID)
    fc2_b_s = fc2_b.reshape(1)                                    # scalar -> SMEM

    grid_spec = pltpu.PrefetchScalarGridSpec(
        num_scalar_prefetch=0,
        grid=(B // tb,),
        in_specs=[
            pl.BlockSpec((tb, S, D), lambda b: (b, 0, 0)),        # x
            pl.BlockSpec((tb, 1), lambda b: (b, 0)),              # lengths (int32)
            pl.BlockSpec((D, 3 * D), lambda b: (0, 0)),           # fused Wqkv
            pl.BlockSpec((D, ATT_HID), lambda b: (0, 0)),         # att_fc1 W
            pl.BlockSpec((2, ATT_HID), lambda b: (0, 0)),         # [fc1_b ; fc2_w]
            pl.BlockSpec(memory_space=pltpu.MemorySpace.SMEM),    # fc2_b scalar
        ],
        out_specs=pl.BlockSpec((tb, D), lambda b: (b, 0)),
    )
    return pl.pallas_call(
        user_encoder_kernel,
        out_shape=jax.ShapeDtypeStruct((B, D), jnp.float32),
        grid_spec=grid_spec,
        compiler_params=pltpu.CompilerParams(dimension_semantics=("parallel",)),
    )(clicked_news, lens, wqkv, fc1_w, fc1b_fc2w, fc2_b_s)


def user_encoder_reference(x, mask, params):
    """Pure-JAX reference mirroring the PyTorch forward."""
    wq, wk, wv, fc1_w, fc1_b, fc2_w, fc2_b = params
    B, S, D = x.shape
    q = (x @ wq).reshape(B, S, HEAD_NUM, HEAD_DIM).transpose(0, 2, 1, 3)
    k = (x @ wk).reshape(B, S, HEAD_NUM, HEAD_DIM).transpose(0, 2, 1, 3)
    v = (x @ wv).reshape(B, S, HEAD_NUM, HEAD_DIM).transpose(0, 2, 1, 3)
    s = jnp.einsum('bhqd,bhkd->bhqk', q, k) / np.sqrt(HEAD_DIM)
    s = jnp.exp(s) * mask[:, None, None, :]
    a = s / (jnp.sum(s, axis=-1, keepdims=True) + 1e-8)
    ctx = jnp.einsum('bhqk,bhkd->bhqd', a, v).transpose(0, 2, 1, 3).reshape(B, S, D)
    e = jnp.tanh(ctx @ fc1_w + fc1_b)
    alpha = jnp.exp(e @ fc2_w + fc2_b) * mask[..., None]
    alpha = alpha / (jnp.sum(alpha, axis=1, keepdims=True) + 1e-8)
    return jnp.sum(alpha * ctx, axis=1)


def init_params(key):
    ks = jax.random.split(key, 7)
    wq = 0.05 * jax.random.normal(ks[0], (NEWS_DIM, NEWS_DIM), jnp.float32)
    wk = 0.05 * jax.random.normal(ks[1], (NEWS_DIM, NEWS_DIM), jnp.float32)
    wv = 0.05 * jax.random.normal(ks[2], (NEWS_DIM, NEWS_DIM), jnp.float32)
    fc1_w = 0.05 * jax.random.normal(ks[3], (NEWS_DIM, ATT_HID), jnp.float32)
    fc1_b = 0.05 * jax.random.normal(ks[4], (1, ATT_HID), jnp.float32)
    fc2_w = 0.05 * jax.random.normal(ks[5], (ATT_HID, 1), jnp.float32)
    fc2_b = 0.05 * jax.random.normal(ks[6], (1, 1), jnp.float32)
    return (wq, wk, wv, fc1_w, fc1_b, fc2_w, fc2_b)


if __name__ == "__main__":
    root = jax.random.PRNGKey(0)
    k_param, k_x = jax.random.split(root)
    params = init_params(k_param)

    clicked_news = jax.random.normal(k_x, (BATCH, SEQ, NEWS_DIM), jnp.float32)
    # per-user valid-click lengths (prefix mask over the sequence axis), all >= 1
    lengths = 1 + (jnp.arange(BATCH, dtype=jnp.int32) % SEQ)
    clicked_mask = (jnp.arange(SEQ)[None, :] < lengths[:, None]).astype(jnp.float32)

    out = jax.block_until_ready(user_encoder(clicked_news, clicked_mask, params))

    ref = user_encoder_reference(clicked_news, clicked_mask, params)
    np.testing.assert_allclose(np.asarray(out), np.asarray(ref),
                               rtol=1e-5, atol=1e-5)
    print("KERNEL_OK")
</pallas_src>

<mosaic_0001>
module attributes {stable_mosaic.version = 11 : i64} {
  func.func @user_encoder_kernel(%arg0: i32, %arg1: memref<16x8x64xf32, #tpu.memory_space<vmem>>, %arg2: memref<16x1xi32, #tpu.memory_space<vmem>>, %arg3: memref<64x192xf32, #tpu.memory_space<vmem>>, %arg4: memref<64x32xf32, #tpu.memory_space<vmem>>, %arg5: memref<2x32xf32, #tpu.memory_space<vmem>>, %arg6: memref<1xf32, #tpu.memory_space<smem>>, %arg7: memref<16x64xf32, #tpu.memory_space<vmem>>) attributes {dimension_semantics = [#tpu.dimension_semantics<parallel>], iteration_bounds = array<i64: 1>, scalar_prefetch = 0 : i64, scratch_operands = 0 : i64, tpu.core_type = #tpu.core_type<tc>, window_params = [{transform_indices = @transform_0, window_bounds = array<i64: 16, 8, 64>}, {transform_indices = @transform_1, window_bounds = array<i64: 16, 1>}, {pipeline_mode = #tpu.pipeline_mode<synchronous>, transform_indices = @transform_2, window_bounds = array<i64: 64, 192>}, {pipeline_mode = #tpu.pipeline_mode<synchronous>, transform_indices = @transform_3, window_bounds = array<i64: 64, 32>}, {pipeline_mode = #tpu.pipeline_mode<synchronous>, transform_indices = @transform_4, window_bounds = array<i64: 2, 32>}, {transform_indices = @transform_5, window_bounds = array<i64: 1>}, {transform_indices = @transform_6, window_bounds = array<i64: 16, 64>}]} {
    %c0 = arith.constant 0 : index
    %c0_0 = arith.constant 0 : index
    %c0_1 = arith.constant 0 : index
    %0 = vector.load %arg1[%c0, %c0_0, %c0_1] : memref<16x8x64xf32, #tpu.memory_space<vmem>>, vector<16x8x64xf32>
    %1 = vector.shape_cast %0 : vector<16x8x64xf32> to vector<128x64xf32>
    %c0_2 = arith.constant 0 : index
    %c0_3 = arith.constant 0 : index
    %2 = vector.load %arg3[%c0_2, %c0_3] : memref<64x192xf32, #tpu.memory_space<vmem>>, vector<64x192xf32>
    %cst = arith.constant dense<0.000000e+00> : vector<128x192xf32>
    %3 = tpu.matmul %1, %2, %cst {dimension_numbers = #tpu.dot_dimension_numbers<[1], [0], [0], [1], [0, 0, 1, 1], [], []>} : vector<128x64xf32>, vector<64x192xf32>, vector<128x192xf32> -> vector<128x192xf32>
    %4 = vector.shape_cast %3 : vector<128x192xf32> to vector<16x8x192xf32>
    %c0_4 = arith.constant 0 : index
    %c0_5 = arith.constant 0 : index
    %5 = vector.load %arg2[%c0_4, %c0_5] : memref<16x1xi32, #tpu.memory_space<vmem>>, vector<16x1xi32>
    %6 = tpu.iota {dimensions = array<i32: 2>} : vector<16x1x8xi32>
    %7 = vector.shape_cast %5 : vector<16x1xi32> to vector<16x1x1xi32>
    %8 = vector.broadcast %7 : vector<16x1x1xi32> to vector<16x1x8xi32>
    %9 = arith.cmpi slt, %6, %8 : vector<16x1x8xi32>
    %10 = arith.extui %9 : vector<16x1x8xi1> to vector<16x1x8xi32>
    %11 = arith.sitofp %10 : vector<16x1x8xi32> to vector<16x1x8xf32>
    %12 = tpu.iota {dimensions = array<i32: 1>} : vector<16x8x1xi32>
    %13 = vector.shape_cast %5 : vector<16x1xi32> to vector<16x1x1xi32>
    %14 = vector.broadcast %13 : vector<16x1x1xi32> to vector<16x8x1xi32>
    %15 = arith.cmpi slt, %12, %14 : vector<16x8x1xi32>
    %16 = arith.extui %15 : vector<16x8x1xi1> to vector<16x8x1xi32>
    %17 = arith.sitofp %16 : vector<16x8x1xi32> to vector<16x8x1xf32>
    %18 = vector.extract_strided_slice %4 {offsets = [0, 0, 0], sizes = [16, 8, 16], strides = [1, 1, 1]} : vector<16x8x192xf32> to vector<16x8x16xf32>
    %19 = vector.extract_strided_slice %4 {offsets = [0, 0, 64], sizes = [16, 8, 16], strides = [1, 1, 1]} : vector<16x8x192xf32> to vector<16x8x16xf32>
    %20 = vector.extract_strided_slice %4 {offsets = [0, 0, 128], sizes = [16, 8, 16], strides = [1, 1, 1]} : vector<16x8x192xf32> to vector<16x8x16xf32>
    "tpu.trace_start"() <{level = 10 : i32, message = "tqd,tkd->tqk"}> : () -> ()
    %cst_6 = arith.constant dense<0.000000e+00> : vector<16x8x8xf32>
    %21 = tpu.matmul %18, %19, %cst_6 {dimension_numbers = #tpu.dot_dimension_numbers<[2], [2], [1], [1], [0, 0, 0, 1, 1, 1], [0], [0]>} : vector<16x8x16xf32>, vector<16x8x16xf32>, vector<16x8x8xf32> -> vector<16x8x8xf32>
    "tpu.trace_stop"() : () -> ()
    %cst_7 = arith.constant 2.500000e-01 : f32
    %22 = vector.broadcast %cst_7 : f32 to vector<16x8x8xf32>
    %23 = arith.mulf %21, %22 : vector<16x8x8xf32>
    %24 = math.exp %23 : vector<16x8x8xf32>
    %25 = vector.broadcast %11 : vector<16x1x8xf32> to vector<16x8x8xf32>
    %26 = arith.mulf %24, %25 : vector<16x8x8xf32>
    %cst_8 = arith.constant dense<0.000000e+00> : vector<16x8xf32>
    %27 = vector.multi_reduction <add>, %26, %cst_8 [2] : vector<16x8x8xf32> to vector<16x8xf32>
    %28 = vector.shape_cast %27 : vector<16x8xf32> to vector<16x8x1xf32>
    %cst_9 = arith.constant 9.99999993E-9 : f32
    %29 = vector.broadcast %cst_9 : f32 to vector<16x8x1xf32>
    %30 = arith.addf %28, %29 : vector<16x8x1xf32>
    %31 = tpu.reciprocal %30 : vector<16x8x1xf32> -> vector<16x8x1xf32>
    %32 = vector.broadcast %31 : vector<16x8x1xf32> to vector<16x8x8xf32>
    %33 = arith.mulf %26, %32 : vector<16x8x8xf32>
    "tpu.trace_start"() <{level = 10 : i32, message = "tqk,tkd->tqd"}> : () -> ()
    %cst_10 = arith.constant dense<0.000000e+00> : vector<16x8x16xf32>
    %34 = tpu.matmul %33, %20, %cst_10 {dimension_numbers = #tpu.dot_dimension_numbers<[2], [1], [1], [2], [0, 0, 0, 1, 1, 2], [0], [0]>} : vector<16x8x8xf32>, vector<16x8x16xf32>, vector<16x8x16xf32> -> vector<16x8x16xf32>
    "tpu.trace_stop"() : () -> ()
    %35 = vector.extract_strided_slice %4 {offsets = [0, 0, 16], sizes = [16, 8, 16], strides = [1, 1, 1]} : vector<16x8x192xf32> to vector<16x8x16xf32>
    %36 = vector.extract_strided_slice %4 {offsets = [0, 0, 80], sizes = [16, 8, 16], strides = [1, 1, 1]} : vector<16x8x192xf32> to vector<16x8x16xf32>
    %37 = vector.extract_strided_slice %4 {offsets = [0, 0, 144], sizes = [16, 8, 16], strides = [1, 1, 1]} : vector<16x8x192xf32> to vector<16x8x16xf32>
    "tpu.trace_start"() <{level = 10 : i32, message = "tqd,tkd->tqk"}> : () -> ()
    %cst_11 = arith.constant dense<0.000000e+00> : vector<16x8x8xf32>
    %38 = tpu.matmul %35, %36, %cst_11 {dimension_numbers = #tpu.dot_dimension_numbers<[2], [2], [1], [1], [0, 0, 0, 1, 1, 1], [0], [0]>} : vector<16x8x16xf32>, vector<16x8x16xf32>, vector<16x8x8xf32> -> vector<16x8x8xf32>
    "tpu.trace_stop"() : () -> ()
    %cst_12 = arith.constant 2.500000e-01 : f32
    %39 = vector.broadcast %cst_12 : f32 to vector<16x8x8xf32>
    %40 = arith.mulf %38, %39 : vector<16x8x8xf32>
    %41 = math.exp %40 : vector<16x8x8xf32>
    %42 = vector.broadcast %11 : vector<16x1x8xf32> to vector<16x8x8xf32>
    %43 = arith.mulf %41, %42 : vector<16x8x8xf32>
    %cst_13 = arith.constant dense<0.000000e+00> : vector<16x8xf32>
    %44 = vector.multi_reduction <add>, %43, %cst_13 [2] : vector<16x8x8xf32> to vector<16x8xf32>
    %45 = vector.shape_cast %44 : vector<16x8xf32> to vector<16x8x1xf32>
    %cst_14 = arith.constant 9.99999993E-9 : f32
    %46 = vector.broadcast %cst_14 : f32 to vector<16x8x1xf32>
    %47 = arith.addf %45, %46 : vector<16x8x1xf32>
    %48 = tpu.reciprocal %47 : vector<16x8x1xf32> -> vector<16x8x1xf32>
    %49 = vector.broadcast %48 : vector<16x8x1xf32> to vector<16x8x8xf32>
    %50 = arith.mulf %43, %49 : vector<16x8x8xf32>
    "tpu.trace_start"() <{level = 10 : i32, message = "tqk,tkd->tqd"}> : () -> ()
    %cst_15 = arith.constant dense<0.000000e+00> : vector<16x8x16xf32>
    %51 = tpu.matmul %50, %37, %cst_15 {dimension_numbers = #tpu.dot_dimension_numbers<[2], [1], [1], [2], [0, 0, 0, 1, 1, 2], [0], [0]>} : vector<16x8x8xf32>, vector<16x8x16xf32>, vector<16x8x16xf32> -> vector<16x8x16xf32>
    "tpu.trace_stop"() : () -> ()
    %52 = vector.extract_strided_slice %4 {offsets = [0, 0, 32], sizes = [16, 8, 16], strides = [1, 1, 1]} : vector<16x8x192xf32> to vector<16x8x16xf32>
    %53 = vector.extract_strided_slice %4 {offsets = [0, 0, 96], sizes = [16, 8, 16], strides = [1, 1, 1]} : vector<16x8x192xf32> to vector<16x8x16xf32>
    %54 = vector.extract_strided_slice %4 {offsets = [0, 0, 160], sizes = [16, 8, 16], strides = [1, 1, 1]} : vector<16x8x192xf32> to vector<16x8x16xf32>
    "tpu.trace_start"() <{level = 10 : i32, message = "tqd,tkd->tqk"}> : () -> ()
    %cst_16 = arith.constant dense<0.000000e+00> : vector<16x8x8xf32>
    %55 = tpu.matmul %52, %53, %cst_16 {dimension_numbers = #tpu.dot_dimension_numbers<[2], [2], [1], [1], [0, 0, 0, 1, 1, 1], [0], [0]>} : vector<16x8x16xf32>, vector<16x8x16xf32>, vector<16x8x8xf32> -> vector<16x8x8xf32>
    "tpu.trace_stop"() : () -> ()
    %cst_17 = arith.constant 2.500000e-01 : f32
    %56 = vector.broadcast %cst_17 : f32 to vector<16x8x8xf32>
    %57 = arith.mulf %55, %56 : vector<16x8x8xf32>
    %58 = math.exp %57 : vector<16x8x8xf32>
    %59 = vector.broadcast %11 : vector<16x1x8xf32> to vector<16x8x8xf32>
    %60 = arith.mulf %58, %59 : vector<16x8x8xf32>
    %cst_18 = arith.constant dense<0.000000e+00> : vector<16x8xf32>
    %61 = vector.multi_reduction <add>, %60, %cst_18 [2] : vector<16x8x8xf32> to vector<16x8xf32>
    %62 = vector.shape_cast %61 : vector<16x8xf32> to vector<16x8x1xf32>
    %cst_19 = arith.constant 9.99999993E-9 : f32
    %63 = vector.broadcast %cst_19 : f32 to vector<16x8x1xf32>
    %64 = arith.addf %62, %63 : vector<16x8x1xf32>
    %65 = tpu.reciprocal %64 : vector<16x8x1xf32> -> vector<16x8x1xf32>
    %66 = vector.broadcast %65 : vector<16x8x1xf32> to vector<16x8x8xf32>
    %67 = arith.mulf %60, %66 : vector<16x8x8xf32>
    "tpu.trace_start"() <{level = 10 : i32, message = "tqk,tkd->tqd"}> : () -> ()
    %cst_20 = arith.constant dense<0.000000e+00> : vector<16x8x16xf32>
    %68 = tpu.matmul %67, %54, %cst_20 {dimension_numbers = #tpu.dot_dimension_numbers<[2], [1], [1], [2], [0, 0, 0, 1, 1, 2], [0], [0]>} : vector<16x8x8xf32>, vector<16x8x16xf32>, vector<16x8x16xf32> -> vector<16x8x16xf32>
    "tpu.trace_stop"() : () -> ()
    %69 = vector.extract_strided_slice %4 {offsets = [0, 0, 48], sizes = [16, 8, 16], strides = [1, 1, 1]} : vector<16x8x192xf32> to vector<16x8x16xf32>
    %70 = vector.extract_strided_slice %4 {offsets = [0, 0, 112], sizes = [16, 8, 16], strides = [1, 1, 1]} : vector<16x8x192xf32> to vector<16x8x16xf32>
    %71 = vector.extract_strided_slice %4 {offsets = [0, 0, 176], sizes = [16, 8, 16], strides = [1, 1, 1]} : vector<16x8x192xf32> to vector<16x8x16xf32>
    "tpu.trace_start"() <{level = 10 : i32, message = "tqd,tkd->tqk"}> : () -> ()
    %cst_21 = arith.constant dense<0.000000e+00> : vector<16x8x8xf32>
    %72 = tpu.matmul %69, %70, %cst_21 {dimension_numbers = #tpu.dot_dimension_numbers<[2], [2], [1], [1], [0, 0, 0, 1, 1, 1], [0], [0]>} : vector<16x8x16xf32>, vector<16x8x16xf32>, vector<16x8x8xf32> -> vector<16x8x8xf32>
    "tpu.trace_stop"() : () -> ()
    %cst_22 = arith.constant 2.500000e-01 : f32
    %73 = vector.broadcast %cst_22 : f32 to vector<16x8x8xf32>
    %74 = arith.mulf %72, %73 : vector<16x8x8xf32>
    %75 = math.exp %74 : vector<16x8x8xf32>
    %76 = vector.broadcast %11 : vector<16x1x8xf32> to vector<16x8x8xf32>
    %77 = arith.mulf %75, %76 : vector<16x8x8xf32>
    %cst_23 = arith.constant dense<0.000000e+00> : vector<16x8xf32>
    %78 = vector.multi_reduction <add>, %77, %cst_23 [2] : vector<16x8x8xf32> to vector<16x8xf32>
    %79 = vector.shape_cast %78 : vector<16x8xf32> to vector<16x8x1xf32>
    %cst_24 = arith.constant 9.99999993E-9 : f32
    %80 = vector.broadcast %cst_24 : f32 to vector<16x8x1xf32>
    %81 = arith.addf %79, %80 : vector<16x8x1xf32>
    %82 = tpu.reciprocal %81 : vector<16x8x1xf32> -> vector<16x8x1xf32>
    %83 = vector.broadcast %82 : vector<16x8x1xf32> to vector<16x8x8xf32>
    %84 = arith.mulf %77, %83 : vector<16x8x8xf32>
    "tpu.trace_start"() <{level = 10 : i32, message = "tqk,tkd->tqd"}> : () -> ()
    %cst_25 = arith.constant dense<0.000000e+00> : vector<16x8x16xf32>
    %85 = tpu.matmul %84, %71, %cst_25 {dimension_numbers = #tpu.dot_dimension_numbers<[2], [1], [1], [2], [0, 0, 0, 1, 1, 2], [0], [0]>} : vector<16x8x8xf32>, vector<16x8x16xf32>, vector<16x8x16xf32> -> vector<16x8x16xf32>
    "tpu.trace_stop"() : () -> ()
    %86 = tpu.concatenate %34, %51, %68, %85 in 2 : vector<16x8x16xf32>, vector<16x8x16xf32>, vector<16x8x16xf32>, vector<16x8x16xf32> -> vector<16x8x64xf32>
    %c0_26 = arith.constant 0 : index
    %c0_27 = arith.constant 0 : index
    %87 = vector.load %arg5[%c0_26, %c0_27] : memref<2x32xf32, #tpu.memory_space<vmem>>, vector<1x32xf32>
    %c1 = arith.constant 1 : index
    %c0_28 = arith.constant 0 : index
    %88 = vector.load %arg5[%c1, %c0_28] : memref<2x32xf32, #tpu.memory_space<vmem>>, vector<1x32xf32>
    %89 = vector.shape_cast %86 : vector<16x8x64xf32> to vector<128x64xf32>
    %c0_29 = arith.constant 0 : index
    %c0_30 = arith.constant 0 : index
    %90 = vector.load %arg4[%c0_29, %c0_30] : memref<64x32xf32, #tpu.memory_space<vmem>>, vector<64x32xf32>
    %cst_31 = arith.constant dense<0.000000e+00> : vector<128x32xf32>
    %91 = tpu.matmul %89, %90, %cst_31 {dimension_numbers = #tpu.dot_dimension_numbers<[1], [0], [0], [1], [0, 0, 1, 1], [], []>} : vector<128x64xf32>, vector<64x32xf32>, vector<128x32xf32> -> vector<128x32xf32>
    %92 = vector.broadcast %87 : vector<1x32xf32> to vector<128x32xf32>
    %93 = arith.addf %91, %92 : vector<128x32xf32>
    %94 = math.tanh %93 : vector<128x32xf32>
    %95 = vector.broadcast %88 : vector<1x32xf32> to vector<128x32xf32>
    %96 = arith.mulf %94, %95 : vector<128x32xf32>
    %cst_32 = arith.constant dense<0.000000e+00> : vector<128xf32>
    %97 = vector.multi_reduction <add>, %96, %cst_32 [1] : vector<128x32xf32> to vector<128xf32>
    %98 = vector.shape_cast %97 : vector<128xf32> to vector<128x1xf32>
    %c0_33 = arith.constant 0 : index
    %99 = memref.load %arg6[%c0_33] : memref<1xf32, #tpu.memory_space<smem>>
    %100 = vector.broadcast %99 : f32 to vector<128x1xf32>
    %101 = arith.addf %98, %100 : vector<128x1xf32>
    %102 = math.exp %101 : vector<128x1xf32>
    %103 = vector.shape_cast %102 : vector<128x1xf32> to vector<16x8x1xf32>
    %104 = arith.mulf %103, %17 : vector<16x8x1xf32>
    %cst_34 = arith.constant dense<0.000000e+00> : vector<16x1xf32>
    %105 = vector.multi_reduction <add>, %104, %cst_34 [1] : vector<16x8x1xf32> to vector<16x1xf32>
    %106 = vector.shape_cast %105 : vector<16x1xf32> to vector<16x1x1xf32>
    %cst_35 = arith.constant 9.99999993E-9 : f32
    %107 = vector.broadcast %cst_35 : f32 to vector<16x1x1xf32>
    %108 = arith.addf %106, %107 : vector<16x1x1xf32>
    %109 = tpu.reciprocal %108 : vector<16x1x1xf32> -> vector<16x1x1xf32>
    %110 = vector.broadcast %109 : vector<16x1x1xf32> to vector<16x8x1xf32>
    %111 = arith.mulf %104, %110 : vector<16x8x1xf32>
    %112 = vector.broadcast %111 : vector<16x8x1xf32> to vector<16x8x64xf32>
    %113 = arith.mulf %86, %112 : vector<16x8x64xf32>
    %cst_36 = arith.constant dense<0.000000e+00> : vector<16x64xf32>
    %114 = vector.multi_reduction <add>, %113, %cst_36 [1] : vector<16x8x64xf32> to vector<16x64xf32>
    %c0_37 = arith.constant 0 : index
    %c0_38 = arith.constant 0 : index
    %115 = vector.load %arg7[%c0_37, %c0_38] : memref<16x64xf32, #tpu.memory_space<vmem>>, vector<16x64xf32>
    tpu.vector_store %arg7[%c0_37, %c0_38], %114 {strides = array<i32>} : memref<16x64xf32, #tpu.memory_space<vmem>>, vector<16x64xf32>,
    return
  }
  func.func @transform_0(%arg0: i32) -> (i32, i32, i32) {
    %c0_i32 = arith.constant 0 : i32
    %c0_i32_0 = arith.constant 0 : i32
    %c0_i32_1 = arith.constant 0 : i32
    return %arg0, %c0_i32, %c0_i32_0 : i32, i32, i32
  }
  func.func @transform_1(%arg0: i32) -> (i32, i32) {
    %c0_i32 = arith.constant 0 : i32
    %c0_i32_0 = arith.constant 0 : i32
    return %arg0, %c0_i32 : i32, i32
  }
  func.func @transform_2(%arg0: i32) -> (i32, i32) {
    %c0_i32 = arith.constant 0 : i32
    %c0_i32_0 = arith.constant 0 : i32
    %c0_i32_1 = arith.constant 0 : i32
    return %c0_i32, %c0_i32_0 : i32, i32
  }
  func.func @transform_3(%arg0: i32) -> (i32, i32) {
    %c0_i32 = arith.constant 0 : i32
    %c0_i32_0 = arith.constant 0 : i32
    %c0_i32_1 = arith.constant 0 : i32
    return %c0_i32, %c0_i32_0 : i32, i32
  }
  func.func @transform_4(%arg0: i32) -> (i32, i32) {
    %c0_i32 = arith.constant 0 : i32
    %c0_i32_0 = arith.constant 0 : i32
    %c0_i32_1 = arith.constant 0 : i32
    return %c0_i32, %c0_i32_0 : i32, i32
  }
  func.func @transform_5(%arg0: i32) -> i32 {
    %c0_i32 = arith.constant 0 : i32
    %c0_i32_0 = arith.constant 0 : i32
    return %c0_i32 : i32
  }
  func.func @transform_6(%arg0: i32) -> (i32, i32) {
    %c0_i32 = arith.constant 0 : i32
    %c0_i32_0 = arith.constant 0 : i32
    return %arg0, %c0_i32 : i32, i32
  }
}

</mosaic_0001>

<llo_original>
// kernel: tpu_custom_call.1
$region0: #{tpu_custom_call.1}
  #allocation0 [shape = 'u32[]', space=smem, size = 0x4, offset = 0x4, fixed_abs, tag = 'smem constant byte address 0x4 - core index']
  #allocation1 [shape = 'u32[72,128]{1,0:T(1,128)}', space=vmem, size = 0x9000, scoped, tag = 'internal scratch']
  #allocation2 [shape = 'f32[1]{0:T(128)S(6)}', space=smem, size = 0x200, scoped, tag = 'scoped memory for tpu_custom_call.1']
  %s0 = inlined_call_operand.hbm [shape: f32[16,8,64], index: 0, kind: input, shape index: {}]
  %s1 = inlined_call_operand.vmem [shape: s32[16,1], index: 1, kind: input, shape index: {}]
  %s2 = inlined_call_operand.hbm [shape: f32[64,192], index: 2, kind: input, shape index: {}]
  %s3 = inlined_call_operand.vmem [shape: f32[64,32], index: 3, kind: input, shape index: {}]
  %s4 = inlined_call_operand.vmem [shape: f32[2,32], index: 4, kind: input, shape index: {}]
  %s5 = inlined_call_operand.<no memory space> [shape: f32[1], index: 5, kind: input, shape index: {}]
  %s6 = inlined_call_operand.hbm [shape: f32[16,64], index: 6, kind: output, shape index: {}]
  %s7 = sld [smem:[#allocation0]]
  $region42: #{tpu_custom_call.1} parent=0
    _
  %s9 = ssub.s32 1, %s7
  %s10 = scalar_select 0, %s9, %s7
  %11 = sst [smem:[#allocation2]] %s5
  $region1: #{tpu_custom_call.1} parent=0
    #allocation3 [shape = 'u8[65536]{0}', space=vmem, size = 0x10000, scoped, tag = 'input window, operand 0, single buffered']
    #allocation4 [shape = 's32[1]{0}', space=sflag, size = 0x4, scoped, tag = 'scoped memory for tpu_custom_call.1']
    #allocation5 [shape = 's32[1]{0}', space=sflag, size = 0x4, scoped, tag = 'scoped memory for tpu_custom_call.1']
    #allocation6 [shape = 'u8[65536]{0}', space=vmem, size = 0x10000, scoped, tag = 'input window, operand 2, single buffered']
    #allocation7 [shape = 's32[1]{0}', space=sflag, size = 0x4, scoped, tag = 'scoped memory for tpu_custom_call.1']
    #allocation8 [shape = 'u8[8192]{0}', space=vmem, size = 0x2000, scoped, tag = 'output window, operand 0, single buffered']
    %12 = vsyncpa [#allocation4], 0
    %13 = vsyncpa [#allocation7], 0
    %14 = vsyncpa [#allocation5], 0
    // Predicated region
    $region2: #{tpu_custom_call.1} parent=1 // pred_check
      _
    $region3: #{tpu_custom_call.1} parent=1 // pred_check_branch
      %16 = sbr.rel (0) target = $region5
    $region4: #{tpu_custom_call.1} parent=1 // pred_region
      %18 = vsyncadd [#allocation4], 0
      %s19 = sshll.u32 %s0, 4
      %s20 = int_to_ptr.hbm [resolvable:$true] %s19
      %s21 = sshll.u32 [#allocation3], 4
      %s22 = int_to_ptr.vmem [resolvable:$true] %s21
      %27 = dma.hbm_to_vmem [thread:$0]  %s20, 2048, %s22, [#allocation4], 128, 128, 8
    $region5: #{tpu_custom_call.1} parent=1 // pred_fallthru
      _
    // Predicated region
    $region6: #{tpu_custom_call.1} parent=1 // pred_check
      _
    $region7: #{tpu_custom_call.1} parent=1 // pred_check_branch
      %29 = sbr.rel (0) target = $region9
    $region8: #{tpu_custom_call.1} parent=1 // pred_region
      _
    $region9: #{tpu_custom_call.1} parent=1 // pred_fallthru
      _
    // Predicated region
    $region10: #{tpu_custom_call.1} parent=1 // pred_check
      _
    $region11: #{tpu_custom_call.1} parent=1 // pred_check_branch
      %31 = sbr.rel (0) target = $region13
    $region12: #{tpu_custom_call.1} parent=1 // pred_region
      %33 = vsyncadd [#allocation7], 0
      %s34 = sshll.u32 %s2, 4
      %s35 = int_to_ptr.hbm [resolvable:$true] %s34
      %s36 = sshll.u32 [#allocation6], 4
      %s37 = int_to_ptr.vmem [resolvable:$true] %s36
      %42 = dma.hbm_to_vmem [thread:$0]  %s35, 2048, %s37, [#allocation7], 256, 256, 16
    $region13: #{tpu_custom_call.1} parent=1 // pred_fallthru
      _
    // Predicated region
    $region14: #{tpu_custom_call.1} parent=1 // pred_check
      _
    $region15: #{tpu_custom_call.1} parent=1 // pred_check_branch
      %44 = sbr.rel (0) target = $region17
    $region16: #{tpu_custom_call.1} parent=1 // pred_region
      _
    $region17: #{tpu_custom_call.1} parent=1 // pred_fallthru
      _
    // Predicated region
    $region18: #{tpu_custom_call.1} parent=1 // pred_check
      _
    $region19: #{tpu_custom_call.1} parent=1 // pred_check_branch
      %46 = sbr.rel (0) target = $region21
    $region20: #{tpu_custom_call.1} parent=1 // pred_region
      _
    $region21: #{tpu_custom_call.1} parent=1 // pred_fallthru
      _
    // Predicated region
    $region22: #{tpu_custom_call.1} parent=1 // pred_check
      _
    $region23: #{tpu_custom_call.1} parent=1 // pred_check_branch
      %48 = sbr.rel (0) target = $region25
    $region24: #{tpu_custom_call.1} parent=1 // pred_region
      _
    $region25: #{tpu_custom_call.1} parent=1 // pred_fallthru
      _
    // Predicated region
    $region26: #{tpu_custom_call.1} parent=1 // pred_check
      _
    $region27: #{tpu_custom_call.1} parent=1 // pred_check_branch
      %50 = sbr.rel (0) target = $region29
    $region28: #{tpu_custom_call.1} parent=1 // pred_region
      %52 = dma.done [#allocation4], 2048
    $region29: #{tpu_custom_call.1} parent=1 // pred_fallthru
      _
    // Predicated region
    $region30: #{tpu_custom_call.1} parent=1 // pred_check
      _
    $region31: #{tpu_custom_call.1} parent=1 // pred_check_branch
      %54 = sbr.rel (0) target = $region33
    $region32: #{tpu_custom_call.1} parent=1 // pred_region
      %56 = dma.done [#allocation7], 2048
    $region33: #{tpu_custom_call.1} parent=1 // pred_fallthru
      _
    %v57 = vld [vmem:[#allocation3] sm:$0xff]
    %v58 = vld [vmem:[#allocation3 + $0x8] sm:$0xff]
    %v59 = vld [vmem:[#allocation3 + $0x10] sm:$0xff]
    %v60 = vld [vmem:[#allocation3 + $0x18] sm:$0xff]
    %v61 = vld [vmem:[#allocation3 + $0x20] sm:$0xff]
    %v62 = vld [vmem:[#allocation3 + $0x28] sm:$0xff]
    %v63 = vld [vmem:[#allocation3 + $0x30] sm:$0xff]
    %v64 = vld [vmem:[#allocation3 + $0x38] sm:$0xff]
    %v65 = vld [vmem:[#allocation3 + $0x40] sm:$0xff]
    %v66 = vld [vmem:[#allocation3 + $0x48] sm:$0xff]
    %v67 = vld [vmem:[#allocation3 + $0x50] sm:$0xff]
    %v68 = vld [vmem:[#allocation3 + $0x58] sm:$0xff]
    %v69 = vld [vmem:[#allocation3 + $0x60] sm:$0xff]
    %v70 = vld [vmem:[#allocation3 + $0x68] sm:$0xff]
    %v71 = vld [vmem:[#allocation3 + $0x70] sm:$0xff]
    %v72 = vld [vmem:[#allocation3 + $0x78] sm:$0xff]
    %v73 = vld [vmem:[#allocation6] sm:$0xff]
    %v74 = vld [vmem:[#allocation6 + $0x8] sm:$0xff]
    %v75 = vld [vmem:[#allocation6 + $0x10] sm:$0xff]
    %v76 = vld [vmem:[#allocation6 + $0x18] sm:$0xff]
    %v77 = vld [vmem:[#allocation6 + $0x20] sm:$0xff]
    %v78 = vld [vmem:[#allocation6 + $0x28] sm:$0xff]
    %v79 = vld [vmem:[#allocation6 + $0x30] sm:$0xff]
    %v80 = vld [vmem:[#allocation6 + $0x38] sm:$0xff]
    %v81 = vld [vmem:[#allocation6 + $0x40] sm:$0xff]
    %v82 = vld [vmem:[#allocation6 + $0x48] sm:$0xff]
    %v83 = vld [vmem:[#allocation6 + $0x50] sm:$0xff]
    %v84 = vld [vmem:[#allocation6 + $0x58] sm:$0xff]
    %v85 = vld [vmem:[#allocation6 + $0x60] sm:$0xff]
    %v86 = vld [vmem:[#allocation6 + $0x68] sm:$0xff]
    %v87 = vld [vmem:[#allocation6 + $0x70] sm:$0xff]
    %v88 = vld [vmem:[#allocation6 + $0x78] sm:$0xff]
    %vm89 = vcmask 523264
    %v91 = vsel %vm89, %v57, 0
    %v94 = vsel %vm89, %v58, 0
    %v97 = vsel %vm89, %v59, 0
    %v100 = vsel %vm89, %v60, 0
    %v103 = vsel %vm89, %v61, 0
    %v106 = vsel %vm89, %v62, 0
    %v109 = vsel %vm89, %v63, 0
    %v112 = vsel %vm89, %v64, 0
    %v115 = vsel %vm89, %v65, 0
    %v118 = vsel %vm89, %v66, 0
    %v121 = vsel %vm89, %v67, 0
    %v124 = vsel %vm89, %v68, 0
    %v127 = vsel %vm89, %v69, 0
    %v130 = vsel %vm89, %v70, 0
    %v133 = vsel %vm89, %v71, 0
    %v136 = vsel %vm89, %v72, 0
    %138 = vmatpush.msra.mxu0 0.0
    %139 = vmatpush.msra.mxu0 0.0
    %140 = vmatpush.msra.mxu0 0.0
    %141 = vmatpush.msra.mxu0 0.0
    %142 = vmatpush.msra.mxu0 0.0
    %143 = vmatpush.msra.mxu0 0.0
    %144 = vmatpush.msra.mxu0 0.0
    %145 = vmatpush.msra.mxu0 0.0
    %146 = vmatpush.msra.mxu0 %v87
    %147 = vmatpush.msra.mxu0 %v85
    %148 = vmatpush.msra.mxu0 %v83
    %149 = vmatpush.msra.mxu0 %v81
    %150 = vmatpush.msra.mxu0 %v79
    %151 = vmatpush.msra.mxu0 %v77
    %152 = vmatpush.msra.mxu0 %v75
    %153 = vmatpush.msra.mxu0 %v73
    %154 = vmatmul.f32.gmra.mxu0 %v91
    %v155 = vpop.f32.mrf.mxu0
    %v156 = vadd.f32 0.0, %v155
    %157 = vmatmul.f32.gmra.mxu0 %v94
    %v158 = vpop.f32.mrf.mxu0
    %v159 = vadd.f32 0.0, %v158
    %160 = vmatmul.f32.gmra.mxu0 %v97
    %v161 = vpop.f32.mrf.mxu0
    %v162 = vadd.f32 0.0, %v161
    %163 = vmatmul.f32.gmra.mxu0 %v100
    %v164 = vpop.f32.mrf.mxu0
    %v165 = vadd.f32 0.0, %v164
    %166 = vmatmul.f32.gmra.mxu0 %v103
    %v167 = vpop.f32.mrf.mxu0
    %v168 = vadd.f32 0.0, %v167
    %169 = vmatmul.f32.gmra.mxu0 %v106
    %v170 = vpop.f32.mrf.mxu0
    %v171 = vadd.f32 0.0, %v170
    %172 = vmatmul.f32.gmra.mxu0 %v109
    %v173 = vpop.f32.mrf.mxu0
    %v174 = vadd.f32 0.0, %v173
    %175 = vmatmul.f32.gmra.mxu0 %v112
    %v176 = vpop.f32.mrf.mxu0
    %v177 = vadd.f32 0.0, %v176
    %178 = vmatmul.f32.gmra.mxu0 %v115
    %v179 = vpop.f32.mrf.mxu0
    %v180 = vadd.f32 0.0, %v179
    %181 = vmatmul.f32.gmra.mxu0 %v118
    %v182 = vpop.f32.mrf.mxu0
    %v183 = vadd.f32 0.0, %v182
    %184 = vmatmul.f32.gmra.mxu0 %v121
    %v185 = vpop.f32.mrf.mxu0
    %v186 = vadd.f32 0.0, %v185
    %187 = vmatmul.f32.gmra.mxu0 %v124
    %v188 = vpop.f32.mrf.mxu0
    %v189 = vadd.f32 0.0, %v188
    %190 = vmatmul.f32.gmra.mxu0 %v127
    %v191 = vpop.f32.mrf.mxu0
    %v192 = vadd.f32 0.0, %v191
    %193 = vmatmul.f32.gmra.mxu0 %v130
    %v194 = vpop.f32.mrf.mxu0
    %v195 = vadd.f32 0.0, %v194
    %196 = vmatmul.f32.gmra.mxu0 %v133
    %v197 = vpop.f32.mrf.mxu0
    %v198 = vadd.f32 0.0, %v197
    %199 = vmatmul.f32.gmra.mxu0 %v136
    %v200 = vpop.f32.mrf.mxu0
    %v201 = vadd.f32 0.0, %v200
    %202 = vdwg.mxu0
    %203 = vmatpush.msra.mxu0 0.0
    %204 = vmatpush.msra.mxu0 0.0
    %205 = vmatpush.msra.mxu0 0.0
    %206 = vmatpush.msra.mxu0 0.0
    %207 = vmatpush.msra.mxu0 0.0
    %208 = vmatpush.msra.mxu0 0.0
    %209 = vmatpush.msra.mxu0 0.0
    %210 = vmatpush.msra.mxu0 0.0
    %211 = vmatpush.msra.mxu0 %v88
    %212 = vmatpush.msra.mxu0 %v86
    %213 = vmatpush.msra.mxu0 %v84
    %214 = vmatpush.msra.mxu0 %v82
    %215 = vmatpush.msra.mxu0 %v80
    %216 = vmatpush.msra.mxu0 %v78
    %217 = vmatpush.msra.mxu0 %v76
    %218 = vmatpush.msra.mxu0 %v74
    %219 = vmatmul.f32.gmra.mxu0 %v91
    %v220 = vpop.f32.mrf.mxu0
    %v221 = vadd.f32 0.0, %v220
    %222 = vmatmul.f32.gmra.mxu0 %v94
    %v223 = vpop.f32.mrf.mxu0
    %v224 = vadd.f32 0.0, %v223
    %225 = vmatmul.f32.gmra.mxu0 %v97
    %v226 = vpop.f32.mrf.mxu0
    %v227 = vadd.f32 0.0, %v226
    %228 = vmatmul.f32.gmra.mxu0 %v100
    %v229 = vpop.f32.mrf.mxu0
    %v230 = vadd.f32 0.0, %v229
    %231 = vmatmul.f32.gmra.mxu0 %v103
    %v232 = vpop.f32.mrf.mxu0
    %v233 = vadd.f32 0.0, %v232
    %234 = vmatmul.f32.gmra.mxu0 %v106
    %v235 = vpop.f32.mrf.mxu0
    %v236 = vadd.f32 0.0, %v235
    %237 = vmatmul.f32.gmra.mxu0 %v109
    %v238 = vpop.f32.mrf.mxu0
    %v239 = vadd.f32 0.0, %v238
    %240 = vmatmul.f32.gmra.mxu0 %v112
    %v241 = vpop.f32.mrf.mxu0
    %v242 = vadd.f32 0.0, %v241
    %243 = vmatmul.f32.gmra.mxu0 %v115
    %v244 = vpop.f32.mrf.mxu0
    %v245 = vadd.f32 0.0, %v244
    %246 = vmatmul.f32.gmra.mxu0 %v118
    %v247 = vpop.f32.mrf.mxu0
    %v248 = vadd.f32 0.0, %v247
    %249 = vmatmul.f32.gmra.mxu0 %v121
    %v250 = vpop.f32.mrf.mxu0
    %v251 = vadd.f32 0.0, %v250
    %252 = vmatmul.f32.gmra.mxu0 %v124
    %v253 = vpop.f32.mrf.mxu0
    %v254 = vadd.f32 0.0, %v253
    %255 = vmatmul.f32.gmra.mxu0 %v127
    %v256 = vpop.f32.mrf.mxu0
    %v257 = vadd.f32 0.0, %v256
    %258 = vmatmul.f32.gmra.mxu0 %v130
    %v259 = vpop.f32.mrf.mxu0
    %v260 = vadd.f32 0.0, %v259
    %261 = vmatmul.f32.gmra.mxu0 %v133
    %v262 = vpop.f32.mrf.mxu0
    %v263 = vadd.f32 0.0, %v262
    %264 = vmatmul.f32.gmra.mxu0 %v136
    %v265 = vpop.f32.mrf.mxu0
    %v266 = vadd.f32 0.0, %v265
    %267 = vdwg.mxu0
    %v268 = vld [vmem:[%s1] sm:$0xff]
    %v269 = vld [vmem:[%s1 + $0x8] sm:$0xff]
    %v270 = vlaneseq
    %v271 = vand.u32 %v270, 127
    %v272 = vrot.slane %v268, 1
    %v273 = vrot.slane %v268, 2
    %v274 = vrot.slane %v268, 3
    %v275 = vrot.slane %v268, 4
    %v276 = vrot.slane %v268, 5
    %v277 = vrot.slane %v268, 6
    %v278 = vrot.slane %v268, 7
    %v279 = vrot.slane %v269, 1
    %v280 = vrot.slane %v269, 2
    %v281 = vrot.slane %v269, 3
    %v282 = vrot.slane %v269, 4
    %v283 = vrot.slane %v269, 5
    %v284 = vrot.slane %v269, 6
    %v285 = vrot.slane %v269, 7
    %286 = vset.pattern.permute.xlu0 0
    %287 = vperm.xlu0 %286, %v268
    %v288 = vpop.permute.xlu0 %287
    %v289 = vperm.slane %v288, 0
    %290 = vset.pattern.permute.xlu0 0
    %291 = vperm.xlu0 %290, %v272
    %v292 = vpop.permute.xlu0 %291
    %v293 = vperm.slane %v292, 0
    %294 = vset.pattern.permute.xlu0 0
    %295 = vperm.xlu0 %294, %v273
    %v296 = vpop.permute.xlu0 %295
    %v297 = vperm.slane %v296, 0
    %298 = vset.pattern.permute.xlu0 0
    %299 = vperm.xlu0 %298, %v274
    %v300 = vpop.permute.xlu0 %299
    %v301 = vperm.slane %v300, 0
    %302 = vset.pattern.permute.xlu0 0
    %303 = vperm.xlu0 %302, %v275
    %v304 = vpop.permute.xlu0 %303
    %v305 = vperm.slane %v304, 0
    %306 = vset.pattern.permute.xlu0 0
    %307 = vperm.xlu0 %306, %v276
    %v308 = vpop.permute.xlu0 %307
    %v309 = vperm.slane %v308, 0
    %310 = vset.pattern.permute.xlu0 0
    %311 = vperm.xlu0 %310, %v277
    %v312 = vpop.permute.xlu0 %311
    %v313 = vperm.slane %v312, 0
    %314 = vset.pattern.permute.xlu0 0
    %315 = vperm.xlu0 %314, %v278
    %v316 = vpop.permute.xlu0 %315
    %v317 = vperm.slane %v316, 0
    %318 = vset.pattern.permute.xlu0 0
    %319 = vperm.xlu0 %318, %v269
    %v320 = vpop.permute.xlu0 %319
    %v321 = vperm.slane %v320, 0
    %322 = vset.pattern.permute.xlu0 0
    %323 = vperm.xlu0 %322, %v279
    %v324 = vpop.permute.xlu0 %323
    %v325 = vperm.slane %v324, 0
    %326 = vset.pattern.permute.xlu0 0
    %327 = vperm.xlu0 %326, %v280
    %v328 = vpop.permute.xlu0 %327
    %v329 = vperm.slane %v328, 0
    %330 = vset.pattern.permute.xlu0 0
    %331 = vperm.xlu0 %330, %v281
    %v332 = vpop.permute.xlu0 %331
    %v333 = vperm.slane %v332, 0
    %334 = vset.pattern.permute.xlu0 0
    %335 = vperm.xlu0 %334, %v282
    %v336 = vpop.permute.xlu0 %335
    %v337 = vperm.slane %v336, 0
    %338 = vset.pattern.permute.xlu0 0
    %339 = vperm.xlu0 %338, %v283
    %v340 = vpop.permute.xlu0 %339
    %v341 = vperm.slane %v340, 0
    %342 = vset.pattern.permute.xlu0 0
    %343 = vperm.xlu0 %342, %v284
    %v344 = vpop.permute.xlu0 %343
    %v345 = vperm.slane %v344, 0
    %346 = vset.pattern.permute.xlu0 0
    %347 = vperm.xlu0 %346, %v285
    %v348 = vpop.permute.xlu0 %347
    %v349 = vperm.slane %v348, 0
    %vm350 = vcmp.lt.s32.totalorder %v271, %v289
    %vm351 = vcmp.lt.s32.totalorder %v271, %v293
    %vm352 = vcmp.lt.s32.totalorder %v271, %v297
    %vm353 = vcmp.lt.s32.totalorder %v271, %v301
    %vm354 = vcmp.lt.s32.totalorder %v271, %v305
    %vm355 = vcmp.lt.s32.totalorder %v271, %v309
    %vm356 = vcmp.lt.s32.totalorder %v271, %v313
    %vm357 = vcmp.lt.s32.totalorder %v271, %v317
    %vm358 = vcmp.lt.s32.totalorder %v271, %v321
    %vm359 = vcmp.lt.s32.totalorder %v271, %v325
    %vm360 = vcmp.lt.s32.totalorder %v271, %v329
    %vm361 = vcmp.lt.s32.totalorder %v271, %v333
    %vm362 = vcmp.lt.s32.totalorder %v271, %v337
    %vm363 = vcmp.lt.s32.totalorder %v271, %v341
    %vm364 = vcmp.lt.s32.totalorder %v271, %v345
    %vm365 = vcmp.lt.s32.totalorder %v271, %v349
    %v366 = vsel %vm350, 1, 0
    %v367 = vsel %vm351, 1, 0
    %v368 = vsel %vm352, 1, 0
    %v369 = vsel %vm353, 1, 0
    %v370 = vsel %vm354, 1, 0
    %v371 = vsel %vm355, 1, 0
    %v372 = vsel %vm356, 1, 0
    %v373 = vsel %vm357, 1, 0
    %v374 = vsel %vm358, 1, 0
    %v375 = vsel %vm359, 1, 0
    %v376 = vsel %vm360, 1, 0
    %v377 = vsel %vm361, 1, 0
    %v378 = vsel %vm362, 1, 0
    %v379 = vsel %vm363, 1, 0
    %v380 = vsel %vm364, 1, 0
    %v381 = vsel %vm365, 1, 0
    %v382 = vcvt.s32.f32 %v366
    %v383 = vcvt.s32.f32 %v367
    %v384 = vcvt.s32.f32 %v368
    %v385 = vcvt.s32.f32 %v369
    %v386 = vcvt.s32.f32 %v370
    %v387 = vcvt.s32.f32 %v371
    %v388 = vcvt.s32.f32 %v372
    %v389 = vcvt.s32.f32 %v373
    %v390 = vcvt.s32.f32 %v374
    %v391 = vcvt.s32.f32 %v375
    %v392 = vcvt.s32.f32 %v376
    %v393 = vcvt.s32.f32 %v377
    %v394 = vcvt.s32.f32 %v378
    %v395 = vcvt.s32.f32 %v379
    %v396 = vcvt.s32.f32 %v380
    %v397 = vcvt.s32.f32 %v381
    %v398 = vlaneseq
    %v399 = vshrl.u32 %v398, 7
    %v400 = vperm.slane %v268, 0
    %v401 = vperm.slane %v272, 0
    %v402 = vperm.slane %v273, 0
    %v403 = vperm.slane %v274, 0
    %v404 = vperm.slane %v275, 0
    %v405 = vperm.slane %v276, 0
    %v406 = vperm.slane %v277, 0
    %v407 = vperm.slane %v278, 0
    %v408 = vperm.slane %v269, 0
    %v409 = vperm.slane %v279, 0
    %v410 = vperm.slane %v280, 0
    %v411 = vperm.slane %v281, 0
    %v412 = vperm.slane %v282, 0
    %v413 = vperm.slane %v283, 0
    %v414 = vperm.slane %v284, 0
    %v415 = vperm.slane %v285, 0
    %vm416 = vcmp.lt.s32.totalorder %v399, %v400
    %vm417 = vcmp.lt.s32.totalorder %v399, %v401
    %vm418 = vcmp.lt.s32.totalorder %v399, %v402
    %vm419 = vcmp.lt.s32.totalorder %v399, %v403
    %vm420 = vcmp.lt.s32.totalorder %v399, %v404
    %vm421 = vcmp.lt.s32.totalorder %v399, %v405
    %vm422 = vcmp.lt.s32.totalorder %v399, %v406
    %vm423 = vcmp.lt.s32.totalorder %v399, %v407
    %vm424 = vcmp.lt.s32.totalorder %v399, %v408
    %vm425 = vcmp.lt.s32.totalorder %v399, %v409
    %vm426 = vcmp.lt.s32.totalorder %v399, %v410
    %vm427 = vcmp.lt.s32.totalorder %v399, %v411
    %vm428 = vcmp.lt.s32.totalorder %v399, %v412
    %vm429 = vcmp.lt.s32.totalorder %v399, %v413
    %vm430 = vcmp.lt.s32.totalorder %v399, %v414
    %vm431 = vcmp.lt.s32.totalorder %v399, %v415
    %v432 = vsel %vm416, 1, 0
    %v433 = vsel %vm417, 1, 0
    %v434 = vsel %vm418, 1, 0
    %v435 = vsel %vm419, 1, 0
    %v436 = vsel %vm420, 1, 0
    %v437 = vsel %vm421, 1, 0
    %v438 = vsel %vm422, 1, 0
    %v439 = vsel %vm423, 1, 0
    %v440 = vsel %vm424, 1, 0
    %v441 = vsel %vm425, 1, 0
    %v442 = vsel %vm426, 1, 0
    %v443 = vsel %vm427, 1, 0
    %v444 = vsel %vm428, 1, 0
    %v445 = vsel %vm429, 1, 0
    %v446 = vsel %vm430, 1, 0
    %v447 = vsel %vm431, 1, 0
    %v448 = vcvt.s32.f32 %v432
    %v449 = vcvt.s32.f32 %v433
    %v450 = vcvt.s32.f32 %v434
    %v451 = vcvt.s32.f32 %v435
    %v452 = vcvt.s32.f32 %v436
    %v453 = vcvt.s32.f32 %v437
    %v454 = vcvt.s32.f32 %v438
    %v455 = vcvt.s32.f32 %v439
    %v456 = vcvt.s32.f32 %v440
    %v457 = vcvt.s32.f32 %v441
    %v458 = vcvt.s32.f32 %v442
    %v459 = vcvt.s32.f32 %v443
    %v460 = vcvt.s32.f32 %v444
    %v461 = vcvt.s32.f32 %v445
    %v462 = vcvt.s32.f32 %v446
    %v463 = vcvt.s32.f32 %v447
    %465 = vrot.lane.b32.xlu0 %v156, 64
    %v466 = vpop.permute.xlu0 %465
    %vm467 = vcmask 130048
    %v468 = vsel %vm467, %v156, 0
    %v470 = vsel %vm467, %v466, 0
    %472 = vmatpush.xpose.msra.mxu0 0.0
    %473 = vmatpush.xpose.msra.mxu0 0.0
    %474 = vmatpush.xpose.msra.mxu0 0.0
    %475 = vmatpush.xpose.msra.mxu0 0.0
    %476 = vmatpush.xpose.msra.mxu0 0.0
    %477 = vmatpush.xpose.msra.mxu0 0.0
    %478 = vmatpush.xpose.msra.mxu0 0.0
    %479 = vmatpush.xpose.msra.mxu0 0.0
    %480 = vmatpush.xpose.msra.mxu0 0.0
    %481 = vmatpush.xpose.msra.mxu0 0.0
    %482 = vmatpush.xpose.msra.mxu0 0.0
    %483 = vmatpush.xpose.msra.mxu0 0.0
    %484 = vmatpush.xpose.msra.mxu0 0.0
    %485 = vmatpush.xpose.msra.mxu0 0.0
    %486 = vmatpush.xpose.msra.mxu0 0.0
    %487 = vmatpush.xpose.msra.mxu0 %v470
    %488 = vmatmul.f32.gmra.mxu0 %v468
    %v489 = vpop.f32.mrf.mxu0
    %v490 = vadd.f32 0.0, %v489
    %491 = vdwg.mxu0
    %493 = vrot.lane.b32.xlu0 %v159, 64
    %v494 = vpop.permute.xlu0 %493
    %v495 = vsel %vm467, %v159, 0
    %v497 = vsel %vm467, %v494, 0
    %499 = vmatpush.xpose.msra.mxu0 0.0
    %500 = vmatpush.xpose.msra.mxu0 0.0
    %501 = vmatpush.xpose.msra.mxu0 0.0
    %502 = vmatpush.xpose.msra.mxu0 0.0
    %503 = vmatpush.xpose.msra.mxu0 0.0
    %504 = vmatpush.xpose.msra.mxu0 0.0
    %505 = vmatpush.xpose.msra.mxu0 0.0
    %506 = vmatpush.xpose.msra.mxu0 0.0
    %507 = vmatpush.xpose.msra.mxu0 0.0
    %508 = vmatpush.xpose.msra.mxu0 0.0
    %509 = vmatpush.xpose.msra.mxu0 0.0
    %510 = vmatpush.xpose.msra.mxu0 0.0
    %511 = vmatpush.xpose.msra.mxu0 0.0
    %512 = vmatpush.xpose.msra.mxu0 0.0
    %513 = vmatpush.xpose.msra.mxu0 0.0
    %514 = vmatpush.xpose.msra.mxu0 %v497
    %515 = vmatmul.f32.gmra.mxu0 %v495
    %v516 = vpop.f32.mrf.mxu0
    %v517 = vadd.f32 0.0, %v516
    %518 = vdwg.mxu0
    %520 = vrot.lane.b32.xlu0 %v162, 64
    %v521 = vpop.permute.xlu0 %520
    %v522 = vsel %vm467, %v162, 0
    %v524 = vsel %vm467, %v521, 0
    %526 = vmatpush.xpose.msra.mxu0 0.0
    %527 = vmatpush.xpose.msra.mxu0 0.0
    %528 = vmatpush.xpose.msra.mxu0 0.0
    %529 = vmatpush.xpose.msra.mxu0 0.0
    %530 = vmatpush.xpose.msra.mxu0 0.0
    %531 = vmatpush.xpose.msra.mxu0 0.0
    %532 = vmatpush.xpose.msra.mxu0 0.0
    %533 = vmatpush.xpose.msra.mxu0 0.0
    %534 = vmatpush.xpose.msra.mxu0 0.0
    %535 = vmatpush.xpose.msra.mxu0 0.0
    %536 = vmatpush.xpose.msra.mxu0 0.0
    %537 = vmatpush.xpose.msra.mxu0 0.0
    %538 = vmatpush.xpose.msra.mxu0 0.0
    %539 = vmatpush.xpose.msra.mxu0 0.0
    %540 = vmatpush.xpose.msra.mxu0 0.0
    %541 = vmatpush.xpose.msra.mxu0 %v524
    %542 = vmatmul.f32.gmra.mxu0 %v522
    %v543 = vpop.f32.mrf.mxu0
    %v544 = vadd.f32 0.0, %v543
    %545 = vdwg.mxu0
    %547 = vrot.lane.b32.xlu0 %v165, 64
    %v548 = vpop.permute.xlu0 %547
    %v549 = vsel %vm467, %v165, 0
    %v551 = vsel %vm467, %v548, 0
    %553 = vmatpush.xpose.msra.mxu0 0.0
    %554 = vmatpush.xpose.msra.mxu0 0.0
    %555 = vmatpush.xpose.msra.mxu0 0.0
    %556 = vmatpush.xpose.msra.mxu0 0.0
    %557 = vmatpush.xpose.msra.mxu0 0.0
    %558 = vmatpush.xpose.msra.mxu0 0.0
    %559 = vmatpush.xpose.msra.mxu0 0.0
    %560 = vmatpush.xpose.msra.mxu0 0.0
    %561 = vmatpush.xpose.msra.mxu0 0.0
    %562 = vmatpush.xpose.msra.mxu0 0.0
    %563 = vmatpush.xpose.msra.mxu0 0.0
    %564 = vmatpush.xpose.msra.mxu0 0.0
    %565 = vmatpush.xpose.msra.mxu0 0.0
    %566 = vmatpush.xpose.msra.mxu0 0.0
    %567 = vmatpush.xpose.msra.mxu0 0.0
    %568 = vmatpush.xpose.msra.mxu0 %v551
    %569 = vmatmul.f32.gmra.mxu0 %v549
    %v570 = vpop.f32.mrf.mxu0
    %v571 = vadd.f32 0.0, %v570
    %572 = vdwg.mxu0
    %574 = vrot.lane.b32.xlu0 %v168, 64
    %v575 = vpop.permute.xlu0 %574
    %v576 = vsel %vm467, %v168, 0
    %v578 = vsel %vm467, %v575, 0
    %580 = vmatpush.xpose.msra.mxu0 0.0
    %581 = vmatpush.xpose.msra.mxu0 0.0
    %582 = vmatpush.xpose.msra.mxu0 0.0
    %583 = vmatpush.xpose.msra.mxu0 0.0
    %584 = vmatpush.xpose.msra.mxu0 0.0
    %585 = vmatpush.xpose.msra.mxu0 0.0
    %586 = vmatpush.xpose.msra.mxu0 0.0
    %587 = vmatpush.xpose.msra.mxu0 0.0
    %588 = vmatpush.xpose.msra.mxu0 0.0
    %589 = vmatpush.xpose.msra.mxu0 0.0
    %590 = vmatpush.xpose.msra.mxu0 0.0
    %591 = vmatpush.xpose.msra.mxu0 0.0
    %592 = vmatpush.xpose.msra.mxu0 0.0
    %593 = vmatpush.xpose.msra.mxu0 0.0
    %594 = vmatpush.xpose.msra.mxu0 0.0
    %595 = vmatpush.xpose.msra.mxu0 %v578
    %596 = vmatmul.f32.gmra.mxu0 %v576
    %v597 = vpop.f32.mrf.mxu0
    %v598 = vadd.f32 0.0, %v597
    %599 = vdwg.mxu0
    %601 = vrot.lane.b32.xlu0 %v171, 64
    %v602 = vpop.permute.xlu0 %601
    %v603 = vsel %vm467, %v171, 0
    %v605 = vsel %vm467, %v602, 0
    %607 = vmatpush.xpose.msra.mxu0 0.0
    %608 = vmatpush.xpose.msra.mxu0 0.0
    %609 = vmatpush.xpose.msra.mxu0 0.0
    %610 = vmatpush.xpose.msra.mxu0 0.0
    %611 = vmatpush.xpose.msra.mxu0 0.0
    %612 = vmatpush.xpose.msra.mxu0 0.0
    %613 = vmatpush.xpose.msra.mxu0 0.0
    %614 = vmatpush.xpose.msra.mxu0 0.0
    %615 = vmatpush.xpose.msra.mxu0 0.0
    %616 = vmatpush.xpose.msra.mxu0 0.0
    %617 = vmatpush.xpose.msra.mxu0 0.0
    %618 = vmatpush.xpose.msra.mxu0 0.0
    %619 = vmatpush.xpose.msra.mxu0 0.0
    %620 = vmatpush.xpose.msra.mxu0 0.0
    %621 = vmatpush.xpose.msra.mxu0 0.0
    %622 = vmatpush.xpose.msra.mxu0 %v605
    %623 = vmatmul.f32.gmra.mxu0 %v603
    %v624 = vpop.f32.mrf.mxu0
    %v625 = vadd.f32 0.0, %v624
    %626 = vdwg.mxu0
    %628 = vrot.lane.b32.xlu0 %v174, 64
    %v629 = vpop.permute.xlu0 %628
    %v630 = vsel %vm467, %v174, 0
    %v632 = vsel %vm467, %v629, 0
    %634 = vmatpush.xpose.msra.mxu0 0.0
    %635 = vmatpush.xpose.msra.mxu0 0.0
    %636 = vmatpush.xpose.msra.mxu0 0.0
    %637 = vmatpush.xpose.msra.mxu0 0.0
    %638 = vmatpush.xpose.msra.mxu0 0.0
    %639 = vmatpush.xpose.msra.mxu0 0.0
    %640 = vmatpush.xpose.msra.mxu0 0.0
    %641 = vmatpush.xpose.msra.mxu0 0.0
    %642 = vmatpush.xpose.msra.mxu0 0.0
    %643 = vmatpush.xpose.msra.mxu0 0.0
    %644 = vmatpush.xpose.msra.mxu0 0.0
    %645 = vmatpush.xpose.msra.mxu0 0.0
    %646 = vmatpush.xpose.msra.mxu0 0.0
    %647 = vmatpush.xpose.msra.mxu0 0.0
    %648 = vmatpush.xpose.msra.mxu0 0.0
    %649 = vmatpush.xpose.msra.mxu0 %v632
    %650 = vmatmul.f32.gmra.mxu0 %v630
    %v651 = vpop.f32.mrf.mxu0
    %v652 = vadd.f32 0.0, %v651
    %653 = vdwg.mxu0
    %655 = vrot.lane.b32.xlu0 %v177, 64
    %v656 = vpop.permute.xlu0 %655
    %v657 = vsel %vm467, %v177, 0
    %v659 = vsel %vm467, %v656, 0
    %661 = vmatpush.xpose.msra.mxu0 0.0
    %662 = vmatpush.xpose.msra.mxu0 0.0
    %663 = vmatpush.xpose.msra.mxu0 0.0
    %664 = vmatpush.xpose.msra.mxu0 0.0
    %665 = vmatpush.xpose.msra.mxu0 0.0
    %666 = vmatpush.xpose.msra.mxu0 0.0
    %667 = vmatpush.xpose.msra.mxu0 0.0
    %668 = vmatpush.xpose.msra.mxu0 0.0
    %669 = vmatpush.xpose.msra.mxu0 0.0
    %670 = vmatpush.xpose.msra.mxu0 0.0
    %671 = vmatpush.xpose.msra.mxu0 0.0
    %672 = vmatpush.xpose.msra.mxu0 0.0
    %673 = vmatpush.xpose.msra.mxu0 0.0
    %674 = vmatpush.xpose.msra.mxu0 0.0
    %675 = vmatpush.xpose.msra.mxu0 0.0
    %676 = vmatpush.xpose.msra.mxu0 %v659
    %677 = vmatmul.f32.gmra.mxu0 %v657
    %v678 = vpop.f32.mrf.mxu0
    %v679 = vadd.f32 0.0, %v678
    %680 = vdwg.mxu0
    %682 = vrot.lane.b32.xlu0 %v180, 64
    %v683 = vpop.permute.xlu0 %682
    %v684 = vsel %vm467, %v180, 0
    %v686 = vsel %vm467, %v683, 0
    %688 = vmatpush.xpose.msra.mxu0 0.0
    %689 = vmatpush.xpose.msra.mxu0 0.0
    %690 = vmatpush.xpose.msra.mxu0 0.0
    %691 = vmatpush.xpose.msra.mxu0 0.0
    %692 = vmatpush.xpose.msra.mxu0 0.0
    %693 = vmatpush.xpose.msra.mxu0 0.0
    %694 = vmatpush.xpose.msra.mxu0 0.0
    %695 = vmatpush.xpose.msra.mxu0 0.0
    %696 = vmatpush.xpose.msra.mxu0 0.0
    %697 = vmatpush.xpose.msra.mxu0 0.0
    %698 = vmatpush.xpose.msra.mxu0 0.0
    %699 = vmatpush.xpose.msra.mxu0 0.0
    %700 = vmatpush.xpose.msra.mxu0 0.0
    %701 = vmatpush.xpose.msra.mxu0 0.0
    %702 = vmatpush.xpose.msra.mxu0 0.0
    %703 = vmatpush.xpose.msra.mxu0 %v686
    %704 = vmatmul.f32.gmra.mxu0 %v684
    %v705 = vpop.f32.mrf.mxu0
    %v706 = vadd.f32 0.0, %v705
    %707 = vdwg.mxu0
    %709 = vrot.lane.b32.xlu0 %v183, 64
    %v710 = vpop.permute.xlu0 %709
    %v711 = vsel %vm467, %v183, 0
    %v713 = vsel %vm467, %v710, 0
    %715 = vmatpush.xpose.msra.mxu0 0.0
    %716 = vmatpush.xpose.msra.mxu0 0.0
    %717 = vmatpush.xpose.msra.mxu0 0.0
    %718 = vmatpush.xpose.msra.mxu0 0.0
    %719 = vmatpush.xpose.msra.mxu0 0.0
    %720 = vmatpush.xpose.msra.mxu0 0.0
    %721 = vmatpush.xpose.msra.mxu0 0.0
    %722 = vmatpush.xpose.msra.mxu0 0.0
    %723 = vmatpush.xpose.msra.mxu0 0.0
    %724 = vmatpush.xpose.msra.mxu0 0.0
    %725 = vmatpush.xpose.msra.mxu0 0.0
    %726 = vmatpush.xpose.msra.mxu0 0.0
    %727 = vmatpush.xpose.msra.mxu0 0.0
    %728 = vmatpush.xpose.msra.mxu0 0.0
    %729 = vmatpush.xpose.msra.mxu0 0.0
    %730 = vmatpush.xpose.msra.mxu0 %v713
    %731 = vmatmul.f32.gmra.mxu0 %v711
    %v732 = vpop.f32.mrf.mxu0
    %v733 = vadd.f32 0.0, %v732
    %734 = vdwg.mxu0
    %736 = vrot.lane.b32.xlu0 %v186, 64
    %v737 = vpop.permute.xlu0 %736
    %v738 = vsel %vm467, %v186, 0
    %v740 = vsel %vm467, %v737, 0
    %742 = vmatpush.xpose.msra.mxu0 0.0
    %743 = vmatpush.xpose.msra.mxu0 0.0
    %744 = vmatpush.xpose.msra.mxu0 0.0
    %745 = vmatpush.xpose.msra.mxu0 0.0
    %746 = vmatpush.xpose.msra.mxu0 0.0
    %747 = vmatpush.xpose.msra.mxu0 0.0
    %748 = vmatpush.xpose.msra.mxu0 0.0
    %749 = vmatpush.xpose.msra.mxu0 0.0
    %750 = vmatpush.xpose.msra.mxu0 0.0
    %751 = vmatpush.xpose.msra.mxu0 0.0
    %752 = vmatpush.xpose.msra.mxu0 0.0
    %753 = vmatpush.xpose.msra.mxu0 0.0
    %754 = vmatpush.xpose.msra.mxu0 0.0
    %755 = vmatpush.xpose.msra.mxu0 0.0
    %756 = vmatpush.xpose.msra.mxu0 0.0
    %757 = vmatpush.xpose.msra.mxu0 %v740
    %758 = vmatmul.f32.gmra.mxu0 %v738
    %v759 = vpop.f32.mrf.mxu0
    %v760 = vadd.f32 0.0, %v759
    %761 = vdwg.mxu0
    %763 = vrot.lane.b32.xlu0 %v189, 64
    %v764 = vpop.permute.xlu0 %763
    %v765 = vsel %vm467, %v189, 0
    %v767 = vsel %vm467, %v764, 0
    %769 = vmatpush.xpose.msra.mxu0 0.0
    %770 = vmatpush.xpose.msra.mxu0 0.0
    %771 = vmatpush.xpose.msra.mxu0 0.0
    %772 = vmatpush.xpose.msra.mxu0 0.0
    %773 = vmatpush.xpose.msra.mxu0 0.0
    %774 = vmatpush.xpose.msra.mxu0 0.0
    %775 = vmatpush.xpose.msra.mxu0 0.0
    %776 = vmatpush.xpose.msra.mxu0 0.0
    %777 = vmatpush.xpose.msra.mxu0 0.0
    %778 = vmatpush.xpose.msra.mxu0 0.0
    %779 = vmatpush.xpose.msra.mxu0 0.0
    %780 = vmatpush.xpose.msra.mxu0 0.0
    %781 = vmatpush.xpose.msra.mxu0 0.0
    %782 = vmatpush.xpose.msra.mxu0 0.0
    %783 = vmatpush.xpose.msra.mxu0 0.0
    %784 = vmatpush.xpose.msra.mxu0 %v767
    %785 = vmatmul.f32.gmra.mxu0 %v765
    %v786 = vpop.f32.mrf.mxu0
    %v787 = vadd.f32 0.0, %v786
    %788 = vdwg.mxu0
    %790 = vrot.lane.b32.xlu0 %v192, 64
    %v791 = vpop.permute.xlu0 %790
    %v792 = vsel %vm467, %v192, 0
    %v794 = vsel %vm467, %v791, 0
    %796 = vmatpush.xpose.msra.mxu0 0.0
    %797 = vmatpush.xpose.msra.mxu0 0.0
    %798 = vmatpush.xpose.msra.mxu0 0.0
    %799 = vmatpush.xpose.msra.mxu0 0.0
    %800 = vmatpush.xpose.msra.mxu0 0.0
    %801 = vmatpush.xpose.msra.mxu0 0.0
    %802 = vmatpush.xpose.msra.mxu0 0.0
    %803 = vmatpush.xpose.msra.mxu0 0.0
    %804 = vmatpush.xpose.msra.mxu0 0.0
    %805 = vmatpush.xpose.msra.mxu0 0.0
    %806 = vmatpush.xpose.msra.mxu0 0.0
    %807 = vmatpush.xpose.msra.mxu0 0.0
    %808 = vmatpush.xpose.msra.mxu0 0.0
    %809 = vmatpush.xpose.msra.mxu0 0.0
    %810 = vmatpush.xpose.msra.mxu0 0.0
    %811 = vmatpush.xpose.msra.mxu0 %v794
    %812 = vmatmul.f32.gmra.mxu0 %v792
    %v813 = vpop.f32.mrf.mxu0
    %v814 = vadd.f32 0.0, %v813
    %815 = vdwg.mxu0
    %817 = vrot.lane.b32.xlu0 %v195, 64
    %v818 = vpop.permute.xlu0 %817
    %v819 = vsel %vm467, %v195, 0
    %v821 = vsel %vm467, %v818, 0
    %823 = vmatpush.xpose.msra.mxu0 0.0
    %824 = vmatpush.xpose.msra.mxu0 0.0
    %825 = vmatpush.xpose.msra.mxu0 0.0
    %826 = vmatpush.xpose.msra.mxu0 0.0
    %827 = vmatpush.xpose.msra.mxu0 0.0
    %828 = vmatpush.xpose.msra.mxu0 0.0
    %829 = vmatpush.xpose.msra.mxu0 0.0
    %830 = vmatpush.xpose.msra.mxu0 0.0
    %831 = vmatpush.xpose.msra.mxu0 0.0
    %832 = vmatpush.xpose.msra.mxu0 0.0
    %833 = vmatpush.xpose.msra.mxu0 0.0
    %834 = vmatpush.xpose.msra.mxu0 0.0
    %835 = vmatpush.xpose.msra.mxu0 0.0
    %836 = vmatpush.xpose.msra.mxu0 0.0
    %837 = vmatpush.xpose.msra.mxu0 0.0
    %838 = vmatpush.xpose.msra.mxu0 %v821
    %839 = vmatmul.f32.gmra.mxu0 %v819
    %v840 = vpop.f32.mrf.mxu0
    %v841 = vadd.f32 0.0, %v840
    %842 = vdwg.mxu0
    %844 = vrot.lane.b32.xlu0 %v198, 64
    %v845 = vpop.permute.xlu0 %844
    %v846 = vsel %vm467, %v198, 0
    %v848 = vsel %vm467, %v845, 0
    %850 = vmatpush.xpose.msra.mxu0 0.0
    %851 = vmatpush.xpose.msra.mxu0 0.0
    %852 = vmatpush.xpose.msra.mxu0 0.0
    %853 = vmatpush.xpose.msra.mxu0 0.0
    %854 = vmatpush.xpose.msra.mxu0 0.0
    %855 = vmatpush.xpose.msra.mxu0 0.0
    %856 = vmatpush.xpose.msra.mxu0 0.0
    %857 = vmatpush.xpose.msra.mxu0 0.0
    %858 = vmatpush.xpose.msra.mxu0 0.0
    %859 = vmatpush.xpose.msra.mxu0 0.0
    %860 = vmatpush.xpose.msra.mxu0 0.0
    %861 = vmatpush.xpose.msra.mxu0 0.0
    %862 = vmatpush.xpose.msra.mxu0 0.0
    %863 = vmatpush.xpose.msra.mxu0 0.0
    %864 = vmatpush.xpose.msra.mxu0 0.0
    %865 = vmatpush.xpose.msra.mxu0 %v848
    %866 = vmatmul.f32.gmra.mxu0 %v846
    %v867 = vpop.f32.mrf.mxu0
    %v868 = vadd.f32 0.0, %v867
    %869 = vdwg.mxu0
    %871 = vrot.lane.b32.xlu0 %v201, 64
    %v872 = vpop.permute.xlu0 %871
    %v873 = vsel %vm467, %v201, 0
    %v875 = vsel %vm467, %v872, 0
    %877 = vmatpush.xpose.msra.mxu0 0.0
    %878 = vmatpush.xpose.msra.mxu0 0.0
    %879 = vmatpush.xpose.msra.mxu0 0.0
    %880 = vmatpush.xpose.msra.mxu0 0.0
    %881 = vmatpush.xpose.msra.mxu0 0.0
    %882 = vmatpush.xpose.msra.mxu0 0.0
    %883 = vmatpush.xpose.msra.mxu0 0.0
    %884 = vmatpush.xpose.msra.mxu0 0.0
    %885 = vmatpush.xpose.msra.mxu0 0.0
    %886 = vmatpush.xpose.msra.mxu0 0.0
    %887 = vmatpush.xpose.msra.mxu0 0.0
    %888 = vmatpush.xpose.msra.mxu0 0.0
    %889 = vmatpush.xpose.msra.mxu0 0.0
    %890 = vmatpush.xpose.msra.mxu0 0.0
    %891 = vmatpush.xpose.msra.mxu0 0.0
    %892 = vmatpush.xpose.msra.mxu0 %v875
    %893 = vmatmul.f32.gmra.mxu0 %v873
    %v894 = vpop.f32.mrf.mxu0
    %v895 = vadd.f32 0.0, %v894
    %896 = vdwg.mxu0
    %v897 = vmul.f32 %v490, 0.25
    %v898 = vmul.f32 %v517, 0.25
    %v899 = vmul.f32 %v544, 0.25
    %v900 = vmul.f32 %v571, 0.25
    %v901 = vmul.f32 %v598, 0.25
    %v902 = vmul.f32 %v625, 0.25
    %v903 = vmul.f32 %v652, 0.25
    %v904 = vmul.f32 %v679, 0.25
    %v905 = vmul.f32 %v706, 0.25
    %v906 = vmul.f32 %v733, 0.25
    %v907 = vmul.f32 %v760, 0.25
    %v908 = vmul.f32 %v787, 0.25
    %v909 = vmul.f32 %v814, 0.25
    %v910 = vmul.f32 %v841, 0.25
    %v911 = vmul.f32 %v868, 0.25
    %v912 = vmul.f32 %v895, 0.25
    %v913 = vmul.f32 %v897, 1.442695
    %v914 = vpow.pop %v913
    %v915 = vmul.f32 %v898, 1.442695
    %v916 = vpow.pop %v915
    %v917 = vmul.f32 %v899, 1.442695
    %v918 = vpow.pop %v917
    %v919 = vmul.f32 %v900, 1.442695
    %v920 = vpow.pop %v919
    %v921 = vmul.f32 %v901, 1.442695
    %v922 = vpow.pop %v921
    %v923 = vmul.f32 %v902, 1.442695
    %v924 = vpow.pop %v923
    %v925 = vmul.f32 %v903, 1.442695
    %v926 = vpow.pop %v925
    %v927 = vmul.f32 %v904, 1.442695
    %v928 = vpow.pop %v927
    %v929 = vmul.f32 %v905, 1.442695
    %v930 = vpow.pop %v929
    %v931 = vmul.f32 %v906, 1.442695
    %v932 = vpow.pop %v931
    %v933 = vmul.f32 %v907, 1.442695
    %v934 = vpow.pop %v933
    %v935 = vmul.f32 %v908, 1.442695
    %v936 = vpow.pop %v935
    %v937 = vmul.f32 %v909, 1.442695
    %v938 = vpow.pop %v937
    %v939 = vmul.f32 %v910, 1.442695
    %v940 = vpow.pop %v939
    %v941 = vmul.f32 %v911, 1.442695
    %v942 = vpow.pop %v941
    %v943 = vmul.f32 %v912, 1.442695
    %v944 = vpow.pop %v943
    %v945 = vmul.f32 %v914, %v382
    %v946 = vmul.f32 %v916, %v383
    %v947 = vmul.f32 %v918, %v384
    %v948 = vmul.f32 %v920, %v385
    %v949 = vmul.f32 %v922, %v386
    %v950 = vmul.f32 %v924, %v387
    %v951 = vmul.f32 %v926, %v388
    %v952 = vmul.f32 %v928, %v389
    %v953 = vmul.f32 %v930, %v390
    %v954 = vmul.f32 %v932, %v391
    %v955 = vmul.f32 %v934, %v392
    %v956 = vmul.f32 %v936, %v393
    %v957 = vmul.f32 %v938, %v394
    %v958 = vmul.f32 %v940, %v395
    %v959 = vmul.f32 %v942, %v396
    %v960 = vmul.f32 %v944, %v397
    %vm961 = vcmask 64512
    %v962 = vsel %vm961, %v945, 0.0
    %963 = vadd.xlane.f32.xlu0 %v962
    %v964 = vpop.xlane.xlu0 %963
    %v965 = vsel %vm961, %v946, 0.0
    %966 = vadd.xlane.f32.xlu0 %v965
    %v967 = vpop.xlane.xlu0 %966
    %v968 = vsel %vm961, %v947, 0.0
    %969 = vadd.xlane.f32.xlu0 %v968
    %v970 = vpop.xlane.xlu0 %969
    %v971 = vsel %vm961, %v948, 0.0
    %972 = vadd.xlane.f32.xlu0 %v971
    %v973 = vpop.xlane.xlu0 %972
    %v974 = vsel %vm961, %v949, 0.0
    %975 = vadd.xlane.f32.xlu0 %v974
    %v976 = vpop.xlane.xlu0 %975
    %v977 = vsel %vm961, %v950, 0.0
    %978 = vadd.xlane.f32.xlu0 %v977
    %v979 = vpop.xlane.xlu0 %978
    %v980 = vsel %vm961, %v951, 0.0
    %981 = vadd.xlane.f32.xlu0 %v980
    %v982 = vpop.xlane.xlu0 %981
    %v983 = vsel %vm961, %v952, 0.0
    %984 = vadd.xlane.f32.xlu0 %v983
    %v985 = vpop.xlane.xlu0 %984
    %v986 = vsel %vm961, %v953, 0.0
    %987 = vadd.xlane.f32.xlu0 %v986
    %v988 = vpop.xlane.xlu0 %987
    %v989 = vsel %vm961, %v954, 0.0
    %990 = vadd.xlane.f32.xlu0 %v989
    %v991 = vpop.xlane.xlu0 %990
    %v992 = vsel %vm961, %v955, 0.0
    %993 = vadd.xlane.f32.xlu0 %v992
    %v994 = vpop.xlane.xlu0 %993
    %v995 = vsel %vm961, %v956, 0.0
    %996 = vadd.xlane.f32.xlu0 %v995
    %v997 = vpop.xlane.xlu0 %996
    %v998 = vsel %vm961, %v957, 0.0
    %999 = vadd.xlane.f32.xlu0 %v998
    %v1000 = vpop.xlane.xlu0 %999
    %v1001 = vsel %vm961, %v958, 0.0
    %1002 = vadd.xlane.f32.xlu0 %v1001
    %v1003 = vpop.xlane.xlu0 %1002
    %v1004 = vsel %vm961, %v959, 0.0
    %1005 = vadd.xlane.f32.xlu0 %v1004
    %v1006 = vpop.xlane.xlu0 %1005
    %v1007 = vsel %vm961, %v960, 0.0
    %1008 = vadd.xlane.f32.xlu0 %v1007
    %v1009 = vpop.xlane.xlu0 %1008
    %v1010 = vadd.f32 %v964, 1e-08
    %v1011 = vadd.f32 %v967, 1e-08
    %v1012 = vadd.f32 %v970, 1e-08
    %v1013 = vadd.f32 %v973, 1e-08
    %v1014 = vadd.f32 %v976, 1e-08
    %v1015 = vadd.f32 %v979, 1e-08
    %v1016 = vadd.f32 %v982, 1e-08
    %v1017 = vadd.f32 %v985, 1e-08
    %v1018 = vadd.f32 %v988, 1e-08
    %v1019 = vadd.f32 %v991, 1e-08
    %v1020 = vadd.f32 %v994, 1e-08
    %v1021 = vadd.f32 %v997, 1e-08
    %v1022 = vadd.f32 %v1000, 1e-08
    %v1023 = vadd.f32 %v1003, 1e-08
    %v1024 = vadd.f32 %v1006, 1e-08
    %v1025 = vadd.f32 %v1009, 1e-08
    %v1026 = vrcp.pop %v1010
    %v1027 = vmul.f32 %v1010, %v1026
    %v1028 = vsub.f32 1.0, %v1027
    %v1029 = vmul.f32 %v1026, %v1028
    %v1030 = vadd.f32 %v1026, %v1029
    %vm1031 = vweird.f32 %v1010
    %vm1032 = vweird.f32 %v1026
    %vm1033 = vmor %vm1031, %vm1032
    %v1034 = vsel %vm1033, %v1026, %v1030
    %v1035 = vand.u32 2147483647, %v1010
    %vm1036 = vcmp.eq.f32.partialorder %v1035, 8.507059e+37
    %v1037 = vand.u32 %v1010, 2147483648
    %v1038 = vor.u32 1.1754944e-38, %v1037
    %v1039 = vsel %vm1036, %v1038, %v1034
    %v1040 = vrcp.pop %v1011
    %v1041 = vmul.f32 %v1011, %v1040
    %v1042 = vsub.f32 1.0, %v1041
    %v1043 = vmul.f32 %v1040, %v1042
    %v1044 = vadd.f32 %v1040, %v1043
    %vm1045 = vweird.f32 %v1011
    %vm1046 = vweird.f32 %v1040
    %vm1047 = vmor %vm1045, %vm1046
    %v1048 = vsel %vm1047, %v1040, %v1044
    %v1049 = vand.u32 2147483647, %v1011
    %vm1050 = vcmp.eq.f32.partialorder %v1049, 8.507059e+37
    %v1051 = vand.u32 %v1011, 2147483648
    %v1052 = vor.u32 1.1754944e-38, %v1051
    %v1053 = vsel %vm1050, %v1052, %v1048
    %v1054 = vrcp.pop %v1012
    %v1055 = vmul.f32 %v1012, %v1054
    %v1056 = vsub.f32 1.0, %v1055
    %v1057 = vmul.f32 %v1054, %v1056
    %v1058 = vadd.f32 %v1054, %v1057
    %vm1059 = vweird.f32 %v1012
    %vm1060 = vweird.f32 %v1054
    %vm1061 = vmor %vm1059, %vm1060
    %v1062 = vsel %vm1061, %v1054, %v1058
    %v1063 = vand.u32 2147483647, %v1012
    %vm1064 = vcmp.eq.f32.partialorder %v1063, 8.507059e+37
    %v1065 = vand.u32 %v1012, 2147483648
    %v1066 = vor.u32 1.1754944e-38, %v1065
    %v1067 = vsel %vm1064, %v1066, %v1062
    %v1068 = vrcp.pop %v1013
    %v1069 = vmul.f32 %v1013, %v1068
    %v1070 = vsub.f32 1.0, %v1069
    %v1071 = vmul.f32 %v1068, %v1070
    %v1072 = vadd.f32 %v1068, %v1071
    %vm1073 = vweird.f32 %v1013
    %vm1074 = vweird.f32 %v1068
    %vm1075 = vmor %vm1073, %vm1074
    %v1076 = vsel %vm1075, %v1068, %v1072
    %v1077 = vand.u32 2147483647, %v1013
    %vm1078 = vcmp.eq.f32.partialorder %v1077, 8.507059e+37
    %v1079 = vand.u32 %v1013, 2147483648
    %v1080 = vor.u32 1.1754944e-38, %v1079
    %v1081 = vsel %vm1078, %v1080, %v1076
    %v1082 = vrcp.pop %v1014
    %v1083 = vmul.f32 %v1014, %v1082
    %v1084 = vsub.f32 1.0, %v1083
    %v1085 = vmul.f32 %v1082, %v1084
    %v1086 = vadd.f32 %v1082, %v1085
    %vm1087 = vweird.f32 %v1014
    %vm1088 = vweird.f32 %v1082
    %vm1089 = vmor %vm1087, %vm1088
    %v1090 = vsel %vm1089, %v1082, %v1086
    %v1091 = vand.u32 2147483647, %v1014
    %vm1092 = vcmp.eq.f32.partialorder %v1091, 8.507059e+37
    %v1093 = vand.u32 %v1014, 2147483648
    %v1094 = vor.u32 1.1754944e-38, %v1093
    %v1095 = vsel %vm1092, %v1094, %v1090
    %v1096 = vrcp.pop %v1015
    %v1097 = vmul.f32 %v1015, %v1096
    %v1098 = vsub.f32 1.0, %v1097
    %v1099 = vmul.f32 %v1096, %v1098
    %v1100 = vadd.f32 %v1096, %v1099
    %vm1101 = vweird.f32 %v1015
    %vm1102 = vweird.f32 %v1096
    %vm1103 = vmor %vm1101, %vm1102
    %v1104 = vsel %vm1103, %v1096, %v1100
    %v1105 = vand.u32 2147483647, %v1015
    %vm1106 = vcmp.eq.f32.partialorder %v1105, 8.507059e+37
    %v1107 = vand.u32 %v1015, 2147483648
    %v1108 = vor.u32 1.1754944e-38, %v1107
    %v1109 = vsel %vm1106, %v1108, %v1104
    %v1110 = vrcp.pop %v1016
    %v1111 = vmul.f32 %v1016, %v1110
    %v1112 = vsub.f32 1.0, %v1111
    %v1113 = vmul.f32 %v1110, %v1112
    %v1114 = vadd.f32 %v1110, %v1113
    %vm1115 = vweird.f32 %v1016
    %vm1116 = vweird.f32 %v1110
    %vm1117 = vmor %vm1115, %vm1116
    %v1118 = vsel %vm1117, %v1110, %v1114
    %v1119 = vand.u32 2147483647, %v1016
    %vm1120 = vcmp.eq.f32.partialorder %v1119, 8.507059e+37
    %v1121 = vand.u32 %v1016, 2147483648
    %v1122 = vor.u32 1.1754944e-38, %v1121
    %v1123 = vsel %vm1120, %v1122, %v1118
    %v1124 = vrcp.pop %v1017
    %v1125 = vmul.f32 %v1017, %v1124
    %v1126 = vsub.f32 1.0, %v1125
    %v1127 = vmul.f32 %v1124, %v1126
    %v1128 = vadd.f32 %v1124, %v1127
    %vm1129 = vweird.f32 %v1017
    %vm1130 = vweird.f32 %v1124
    %vm1131 = vmor %vm1129, %vm1130
    %v1132 = vsel %vm1131, %v1124, %v1128
    %v1133 = vand.u32 2147483647, %v1017
    %vm1134 = vcmp.eq.f32.partialorder %v1133, 8.507059e+37
    %v1135 = vand.u32 %v1017, 2147483648
    %v1136 = vor.u32 1.1754944e-38, %v1135
    %v1137 = vsel %vm1134, %v1136, %v1132
    %v1138 = vrcp.pop %v1018
    %v1139 = vmul.f32 %v1018, %v1138
    %v1140 = vsub.f32 1.0, %v1139
    %v1141 = vmul.f32 %v1138, %v1140
    %v1142 = vadd.f32 %v1138, %v1141
    %vm1143 = vweird.f32 %v1018
    %vm1144 = vweird.f32 %v1138
    %vm1145 = vmor %vm1143, %vm1144
    %v1146 = vsel %vm1145, %v1138, %v1142
    %v1147 = vand.u32 2147483647, %v1018
    %vm1148 = vcmp.eq.f32.partialorder %v1147, 8.507059e+37
    %v1149 = vand.u32 %v1018, 2147483648
    %v1150 = vor.u32 1.1754944e-38, %v1149
    %v1151 = vsel %vm1148, %v1150, %v1146
    %v1152 = vrcp.pop %v1019
    %v1153 = vmul.f32 %v1019, %v1152
    %v1154 = vsub.f32 1.0, %v1153
    %v1155 = vmul.f32 %v1152, %v1154
    %v1156 = vadd.f32 %v1152, %v1155
    %vm1157 = vweird.f32 %v1019
    %vm1158 = vweird.f32 %v1152
    %vm1159 = vmor %vm1157, %vm1158
    %v1160 = vsel %vm1159, %v1152, %v1156
    %v1161 = vand.u32 2147483647, %v1019
    %vm1162 = vcmp.eq.f32.partialorder %v1161, 8.507059e+37
    %v1163 = vand.u32 %v1019, 2147483648
    %v1164 = vor.u32 1.1754944e-38, %v1163
    %v1165 = vsel %vm1162, %v1164, %v1160
    %v1166 = vrcp.pop %v1020
    %v1167 = vmul.f32 %v1020, %v1166
    %v1168 = vsub.f32 1.0, %v1167
    %v1169 = vmul.f32 %v1166, %v1168
    %v1170 = vadd.f32 %v1166, %v1169
    %vm1171 = vweird.f32 %v1020
    %vm1172 = vweird.f32 %v1166
    %vm1173 = vmor %vm1171, %vm1172
    %v1174 = vsel %vm1173, %v1166, %v1170
    %v1175 = vand.u32 2147483647, %v1020
    %vm1176 = vcmp.eq.f32.partialorder %v1175, 8.507059e+37
    %v1177 = vand.u32 %v1020, 2147483648
    %v1178 = vor.u32 1.1754944e-38, %v1177
    %v1179 = vsel %vm1176, %v1178, %v1174
    %v1180 = vrcp.pop %v1021
    %v1181 = vmul.f32 %v1021, %v1180
    %v1182 = vsub.f32 1.0, %v1181
    %v1183 = vmul.f32 %v1180, %v1182
    %v1184 = vadd.f32 %v1180, %v1183
    %vm1185 = vweird.f32 %v1021
    %vm1186 = vweird.f32 %v1180
    %vm1187 = vmor %vm1185, %vm1186
    %v1188 = vsel %vm1187, %v1180, %v1184
    %v1189 = vand.u32 2147483647, %v1021
    %vm1190 = vcmp.eq.f32.partialorder %v1189, 8.507059e+37
    %v1191 = vand.u32 %v1021, 2147483648
    %v1192 = vor.u32 1.1754944e-38, %v1191
    %v1193 = vsel %vm1190, %v1192, %v1188
    %v1194 = vrcp.pop %v1022
    %v1195 = vmul.f32 %v1022, %v1194
    %v1196 = vsub.f32 1.0, %v1195
    %v1197 = vmul.f32 %v1194, %v1196
    %v1198 = vadd.f32 %v1194, %v1197
    %vm1199 = vweird.f32 %v1022
    %vm1200 = vweird.f32 %v1194
    %vm1201 = vmor %vm1199, %vm1200
    %v1202 = vsel %vm1201, %v1194, %v1198
    %v1203 = vand.u32 2147483647, %v1022
    %vm1204 = vcmp.eq.f32.partialorder %v1203, 8.507059e+37
    %v1205 = vand.u32 %v1022, 2147483648
    %v1206 = vor.u32 1.1754944e-38, %v1205
    %v1207 = vsel %vm1204, %v1206, %v1202
    %v1208 = vrcp.pop %v1023
    %v1209 = vmul.f32 %v1023, %v1208
    %v1210 = vsub.f32 1.0, %v1209
    %v1211 = vmul.f32 %v1208, %v1210
    %v1212 = vadd.f32 %v1208, %v1211
    %vm1213 = vweird.f32 %v1023
    %vm1214 = vweird.f32 %v1208
    %vm1215 = vmor %vm1213, %vm1214
    %v1216 = vsel %vm1215, %v1208, %v1212
    %v1217 = vand.u32 2147483647, %v1023
    %vm1218 = vcmp.eq.f32.partialorder %v1217, 8.507059e+37
    %v1219 = vand.u32 %v1023, 2147483648
    %v1220 = vor.u32 1.1754944e-38, %v1219
    %v1221 = vsel %vm1218, %v1220, %v1216
    %v1222 = vrcp.pop %v1024
    %v1223 = vmul.f32 %v1024, %v1222
    %v1224 = vsub.f32 1.0, %v1223
    %v1225 = vmul.f32 %v1222, %v1224
    %v1226 = vadd.f32 %v1222, %v1225
    %vm1227 = vweird.f32 %v1024
    %vm1228 = vweird.f32 %v1222
    %vm1229 = vmor %vm1227, %vm1228
    %v1230 = vsel %vm1229, %v1222, %v1226
    %v1231 = vand.u32 2147483647, %v1024
    %vm1232 = vcmp.eq.f32.partialorder %v1231, 8.507059e+37
    %v1233 = vand.u32 %v1024, 2147483648
    %v1234 = vor.u32 1.1754944e-38, %v1233
    %v1235 = vsel %vm1232, %v1234, %v1230
    %v1236 = vrcp.pop %v1025
    %v1237 = vmul.f32 %v1025, %v1236
    %v1238 = vsub.f32 1.0, %v1237
    %v1239 = vmul.f32 %v1236, %v1238
    %v1240 = vadd.f32 %v1236, %v1239
    %vm1241 = vweird.f32 %v1025
    %vm1242 = vweird.f32 %v1236
    %vm1243 = vmor %vm1241, %vm1242
    %v1244 = vsel %vm1243, %v1236, %v1240
    %v1245 = vand.u32 2147483647, %v1025
    %vm1246 = vcmp.eq.f32.partialorder %v1245, 8.507059e+37
    %v1247 = vand.u32 %v1025, 2147483648
    %v1248 = vor.u32 1.1754944e-38, %v1247
    %v1249 = vsel %vm1246, %v1248, %v1244
    %v1250 = vmul.f32 %v945, %v1039
    %v1251 = vmul.f32 %v946, %v1053
    %v1252 = vmul.f32 %v947, %v1067
    %v1253 = vmul.f32 %v948, %v1081
    %v1254 = vmul.f32 %v949, %v1095
    %v1255 = vmul.f32 %v950, %v1109
    %v1256 = vmul.f32 %v951, %v1123
    %v1257 = vmul.f32 %v952, %v1137
    %v1258 = vmul.f32 %v953, %v1151
    %v1259 = vmul.f32 %v954, %v1165
    %v1260 = vmul.f32 %v955, %v1179
    %v1261 = vmul.f32 %v956, %v1193
    %v1262 = vmul.f32 %v957, %v1207
    %v1263 = vmul.f32 %v958, %v1221
    %v1264 = vmul.f32 %v959, %v1235
    %v1265 = vmul.f32 %v960, %v1249
    %v1267 = vsel %vm961, %v1250, 0
    %1269 = vmatpush.msra.mxu0 0.0
    %1270 = vmatpush.msra.mxu0 0.0
    %1271 = vmatpush.msra.mxu0 0.0
    %1272 = vmatpush.msra.mxu0 0.0
    %1273 = vmatpush.msra.mxu0 0.0
    %1274 = vmatpush.msra.mxu0 0.0
    %1275 = vmatpush.msra.mxu0 0.0
    %1276 = vmatpush.msra.mxu0 0.0
    %1277 = vmatpush.msra.mxu0 0.0
    %1278 = vmatpush.msra.mxu0 0.0
    %1279 = vmatpush.msra.mxu0 0.0
    %1280 = vmatpush.msra.mxu0 0.0
    %1281 = vmatpush.msra.mxu0 0.0
    %1282 = vmatpush.msra.mxu0 0.0
    %1283 = vmatpush.msra.mxu0 0.0
    %1284 = vmatpush.msra.mxu0 %v221
    %1285 = vmatmul.f32.gmra.mxu0 %v1267
    %v1286 = vpop.f32.mrf.mxu0
    %v1287 = vadd.f32 0.0, %v1286
    %1288 = vdwg.mxu0
    %v1290 = vsel %vm961, %v1251, 0
    %1292 = vmatpush.msra.mxu0 0.0
    %1293 = vmatpush.msra.mxu0 0.0
    %1294 = vmatpush.msra.mxu0 0.0
    %1295 = vmatpush.msra.mxu0 0.0
    %1296 = vmatpush.msra.mxu0 0.0
    %1297 = vmatpush.msra.mxu0 0.0
    %1298 = vmatpush.msra.mxu0 0.0
    %1299 = vmatpush.msra.mxu0 0.0
    %1300 = vmatpush.msra.mxu0 0.0
    %1301 = vmatpush.msra.mxu0 0.0
    %1302 = vmatpush.msra.mxu0 0.0
    %1303 = vmatpush.msra.mxu0 0.0
    %1304 = vmatpush.msra.mxu0 0.0
    %1305 = vmatpush.msra.mxu0 0.0
    %1306 = vmatpush.msra.mxu0 0.0
    %1307 = vmatpush.msra.mxu0 %v224
    %1308 = vmatmul.f32.gmra.mxu0 %v1290
    %v1309 = vpop.f32.mrf.mxu0
    %v1310 = vadd.f32 0.0, %v1309
    %1311 = vdwg.mxu0
    %v1313 = vsel %vm961, %v1252, 0
    %1315 = vmatpush.msra.mxu0 0.0
    %1316 = vmatpush.msra.mxu0 0.0
    %1317 = vmatpush.msra.mxu0 0.0
    %1318 = vmatpush.msra.mxu0 0.0
    %1319 = vmatpush.msra.mxu0 0.0
    %1320 = vmatpush.msra.mxu0 0.0
    %1321 = vmatpush.msra.mxu0 0.0
    %1322 = vmatpush.msra.mxu0 0.0
    %1323 = vmatpush.msra.mxu0 0.0
    %1324 = vmatpush.msra.mxu0 0.0
    %1325 = vmatpush.msra.mxu0 0.0
    %1326 = vmatpush.msra.mxu0 0.0
    %1327 = vmatpush.msra.mxu0 0.0
    %1328 = vmatpush.msra.mxu0 0.0
    %1329 = vmatpush.msra.mxu0 0.0
    %1330 = vmatpush.msra.mxu0 %v227
    %1331 = vmatmul.f32.gmra.mxu0 %v1313
    %v1332 = vpop.f32.mrf.mxu0
    %v1333 = vadd.f32 0.0, %v1332
    %1334 = vdwg.mxu0
    %v1336 = vsel %vm961, %v1253, 0
    %1338 = vmatpush.msra.mxu0 0.0
    %1339 = vmatpush.msra.mxu0 0.0
    %1340 = vmatpush.msra.mxu0 0.0
    %1341 = vmatpush.msra.mxu0 0.0
    %1342 = vmatpush.msra.mxu0 0.0
    %1343 = vmatpush.msra.mxu0 0.0
    %1344 = vmatpush.msra.mxu0 0.0
    %1345 = vmatpush.msra.mxu0 0.0
    %1346 = vmatpush.msra.mxu0 0.0
    %1347 = vmatpush.msra.mxu0 0.0
    %1348 = vmatpush.msra.mxu0 0.0
    %1349 = vmatpush.msra.mxu0 0.0
    %1350 = vmatpush.msra.mxu0 0.0
    %1351 = vmatpush.msra.mxu0 0.0
    %1352 = vmatpush.msra.mxu0 0.0
    %1353 = vmatpush.msra.mxu0 %v230
    %1354 = vmatmul.f32.gmra.mxu0 %v1336
    %v1355 = vpop.f32.mrf.mxu0
    %v1356 = vadd.f32 0.0, %v1355
    %1357 = vdwg.mxu0
    %v1359 = vsel %vm961, %v1254, 0
    %1361 = vmatpush.msra.mxu0 0.0
    %1362 = vmatpush.msra.mxu0 0.0
    %1363 = vmatpush.msra.mxu0 0.0
    %1364 = vmatpush.msra.mxu0 0.0
    %1365 = vmatpush.msra.mxu0 0.0
    %1366 = vmatpush.msra.mxu0 0.0
    %1367 = vmatpush.msra.mxu0 0.0
    %1368 = vmatpush.msra.mxu0 0.0
    %1369 = vmatpush.msra.mxu0 0.0
    %1370 = vmatpush.msra.mxu0 0.0
    %1371 = vmatpush.msra.mxu0 0.0
    %1372 = vmatpush.msra.mxu0 0.0
    %1373 = vmatpush.msra.mxu0 0.0
    %1374 = vmatpush.msra.mxu0 0.0
    %1375 = vmatpush.msra.mxu0 0.0
    %1376 = vmatpush.msra.mxu0 %v233
    %1377 = vmatmul.f32.gmra.mxu0 %v1359
    %v1378 = vpop.f32.mrf.mxu0
    %v1379 = vadd.f32 0.0, %v1378
    %1380 = vdwg.mxu0
    %v1382 = vsel %vm961, %v1255, 0
    %1384 = vmatpush.msra.mxu0 0.0
    %1385 = vmatpush.msra.mxu0 0.0
    %1386 = vmatpush.msra.mxu0 0.0
    %1387 = vmatpush.msra.mxu0 0.0
    %1388 = vmatpush.msra.mxu0 0.0
    %1389 = vmatpush.msra.mxu0 0.0
    %1390 = vmatpush.msra.mxu0 0.0
    %1391 = vmatpush.msra.mxu0 0.0
    %1392 = vmatpush.msra.mxu0 0.0
    %1393 = vmatpush.msra.mxu0 0.0
    %1394 = vmatpush.msra.mxu0 0.0
    %1395 = vmatpush.msra.mxu0 0.0
    %1396 = vmatpush.msra.mxu0 0.0
    %1397 = vmatpush.msra.mxu0 0.0
    %1398 = vmatpush.msra.mxu0 0.0
    %1399 = vmatpush.msra.mxu0 %v236
    %1400 = vmatmul.f32.gmra.mxu0 %v1382
    %v1401 = vpop.f32.mrf.mxu0
    %v1402 = vadd.f32 0.0, %v1401
    %1403 = vdwg.mxu0
    %v1405 = vsel %vm961, %v1256, 0
    %1407 = vmatpush.msra.mxu0 0.0
    %1408 = vmatpush.msra.mxu0 0.0
    %1409 = vmatpush.msra.mxu0 0.0
    %1410 = vmatpush.msra.mxu0 0.0
    %1411 = vmatpush.msra.mxu0 0.0
    %1412 = vmatpush.msra.mxu0 0.0
    %1413 = vmatpush.msra.mxu0 0.0
    %1414 = vmatpush.msra.mxu0 0.0
    %1415 = vmatpush.msra.mxu0 0.0
    %1416 = vmatpush.msra.mxu0 0.0
    %1417 = vmatpush.msra.mxu0 0.0
    %1418 = vmatpush.msra.mxu0 0.0
    %1419 = vmatpush.msra.mxu0 0.0
    %1420 = vmatpush.msra.mxu0 0.0
    %1421 = vmatpush.msra.mxu0 0.0
    %1422 = vmatpush.msra.mxu0 %v239
    %1423 = vmatmul.f32.gmra.mxu0 %v1405
    %v1424 = vpop.f32.mrf.mxu0
    %v1425 = vadd.f32 0.0, %v1424
    %1426 = vdwg.mxu0
    %v1428 = vsel %vm961, %v1257, 0
    %1430 = vmatpush.msra.mxu0 0.0
    %1431 = vmatpush.msra.mxu0 0.0
    %1432 = vmatpush.msra.mxu0 0.0
    %1433 = vmatpush.msra.mxu0 0.0
    %1434 = vmatpush.msra.mxu0 0.0
    %1435 = vmatpush.msra.mxu0 0.0
    %1436 = vmatpush.msra.mxu0 0.0
    %1437 = vmatpush.msra.mxu0 0.0
    %1438 = vmatpush.msra.mxu0 0.0
    %1439 = vmatpush.msra.mxu0 0.0
    %1440 = vmatpush.msra.mxu0 0.0
    %1441 = vmatpush.msra.mxu0 0.0
    %1442 = vmatpush.msra.mxu0 0.0
    %1443 = vmatpush.msra.mxu0 0.0
    %1444 = vmatpush.msra.mxu0 0.0
    %1445 = vmatpush.msra.mxu0 %v242
    %1446 = vmatmul.f32.gmra.mxu0 %v1428
    %v1447 = vpop.f32.mrf.mxu0
    %v1448 = vadd.f32 0.0, %v1447
    %1449 = vdwg.mxu0
    %v1451 = vsel %vm961, %v1258, 0
    %1453 = vmatpush.msra.mxu0 0.0
    %1454 = vmatpush.msra.mxu0 0.0
    %1455 = vmatpush.msra.mxu0 0.0
    %1456 = vmatpush.msra.mxu0 0.0
    %1457 = vmatpush.msra.mxu0 0.0
    %1458 = vmatpush.msra.mxu0 0.0
    %1459 = vmatpush.msra.mxu0 0.0
    %1460 = vmatpush.msra.mxu0 0.0
    %1461 = vmatpush.msra.mxu0 0.0
    %1462 = vmatpush.msra.mxu0 0.0
    %1463 = vmatpush.msra.mxu0 0.0
    %1464 = vmatpush.msra.mxu0 0.0
    %1465 = vmatpush.msra.mxu0 0.0
    %1466 = vmatpush.msra.mxu0 0.0
    %1467 = vmatpush.msra.mxu0 0.0
    %1468 = vmatpush.msra.mxu0 %v245
    %1469 = vmatmul.f32.gmra.mxu0 %v1451
    %v1470 = vpop.f32.mrf.mxu0
    %v1471 = vadd.f32 0.0, %v1470
    %1472 = vdwg.mxu0
    %v1474 = vsel %vm961, %v1259, 0
    %1476 = vmatpush.msra.mxu0 0.0
    %1477 = vmatpush.msra.mxu0 0.0
    %1478 = vmatpush.msra.mxu0 0.0
    %1479 = vmatpush.msra.mxu0 0.0
    %1480 = vmatpush.msra.mxu0 0.0
    %1481 = vmatpush.msra.mxu0 0.0
    %1482 = vmatpush.msra.mxu0 0.0
    %1483 = vmatpush.msra.mxu0 0.0
    %1484 = vmatpush.msra.mxu0 0.0
    %1485 = vmatpush.msra.mxu0 0.0
    %1486 = vmatpush.msra.mxu0 0.0
    %1487 = vmatpush.msra.mxu0 0.0
    %1488 = vmatpush.msra.mxu0 0.0
    %1489 = vmatpush.msra.mxu0 0.0
    %1490 = vmatpush.msra.mxu0 0.0
    %1491 = vmatpush.msra.mxu0 %v248
    %1492 = vmatmul.f32.gmra.mxu0 %v1474
    %v1493 = vpop.f32.mrf.mxu0
    %v1494 = vadd.f32 0.0, %v1493
    %1495 = vdwg.mxu0
    %v1497 = vsel %vm961, %v1260, 0
    %1499 = vmatpush.msra.mxu0 0.0
    %1500 = vmatpush.msra.mxu0 0.0
    %1501 = vmatpush.msra.mxu0 0.0
    %1502 = vmatpush.msra.mxu0 0.0
    %1503 = vmatpush.msra.mxu0 0.0
    %1504 = vmatpush.msra.mxu0 0.0
    %1505 = vmatpush.msra.mxu0 0.0
    %1506 = vmatpush.msra.mxu0 0.0
    %1507 = vmatpush.msra.mxu0 0.0
    %1508 = vmatpush.msra.mxu0 0.0
    %1509 = vmatpush.msra.mxu0 0.0
    %1510 = vmatpush.msra.mxu0 0.0
    %1511 = vmatpush.msra.mxu0 0.0
    %1512 = vmatpush.msra.mxu0 0.0
    %1513 = vmatpush.msra.mxu0 0.0
    %1514 = vmatpush.msra.mxu0 %v251
    %1515 = vmatmul.f32.gmra.mxu0 %v1497
    %v1516 = vpop.f32.mrf.mxu0
    %v1517 = vadd.f32 0.0, %v1516
    %1518 = vdwg.mxu0
    %v1520 = vsel %vm961, %v1261, 0
    %1522 = vmatpush.msra.mxu0 0.0
    %1523 = vmatpush.msra.mxu0 0.0
    %1524 = vmatpush.msra.mxu0 0.0
    %1525 = vmatpush.msra.mxu0 0.0
    %1526 = vmatpush.msra.mxu0 0.0
    %1527 = vmatpush.msra.mxu0 0.0
    %1528 = vmatpush.msra.mxu0 0.0
    %1529 = vmatpush.msra.mxu0 0.0
    %1530 = vmatpush.msra.mxu0 0.0
    %1531 = vmatpush.msra.mxu0 0.0
    %1532 = vmatpush.msra.mxu0 0.0
    %1533 = vmatpush.msra.mxu0 0.0
    %1534 = vmatpush.msra.mxu0 0.0
    %1535 = vmatpush.msra.mxu0 0.0
    %1536 = vmatpush.msra.mxu0 0.0
    %1537 = vmatpush.msra.mxu0 %v254
    %1538 = vmatmul.f32.gmra.mxu0 %v1520
    %v1539 = vpop.f32.mrf.mxu0
    %v1540 = vadd.f32 0.0, %v1539
    %1541 = vdwg.mxu0
    %v1543 = vsel %vm961, %v1262, 0
    %1545 = vmatpush.msra.mxu0 0.0
    %1546 = vmatpush.msra.mxu0 0.0
    %1547 = vmatpush.msra.mxu0 0.0
    %1548 = vmatpush.msra.mxu0 0.0
    %1549 = vmatpush.msra.mxu0 0.0
    %1550 = vmatpush.msra.mxu0 0.0
    %1551 = vmatpush.msra.mxu0 0.0
    %1552 = vmatpush.msra.mxu0 0.0
    %1553 = vmatpush.msra.mxu0 0.0
    %1554 = vmatpush.msra.mxu0 0.0
    %1555 = vmatpush.msra.mxu0 0.0
    %1556 = vmatpush.msra.mxu0 0.0
    %1557 = vmatpush.msra.mxu0 0.0
    %1558 = vmatpush.msra.mxu0 0.0
    %1559 = vmatpush.msra.mxu0 0.0
    %1560 = vmatpush.msra.mxu0 %v257
    %1561 = vmatmul.f32.gmra.mxu0 %v1543
    %v1562 = vpop.f32.mrf.mxu0
    %v1563 = vadd.f32 0.0, %v1562
    %1564 = vdwg.mxu0
    %v1566 = vsel %vm961, %v1263, 0
    %1568 = vmatpush.msra.mxu0 0.0
    %1569 = vmatpush.msra.mxu0 0.0
    %1570 = vmatpush.msra.mxu0 0.0
    %1571 = vmatpush.msra.mxu0 0.0
    %1572 = vmatpush.msra.mxu0 0.0
    %1573 = vmatpush.msra.mxu0 0.0
    %1574 = vmatpush.msra.mxu0 0.0
    %1575 = vmatpush.msra.mxu0 0.0
    %1576 = vmatpush.msra.mxu0 0.0
    %1577 = vmatpush.msra.mxu0 0.0
    %1578 = vmatpush.msra.mxu0 0.0
    %1579 = vmatpush.msra.mxu0 0.0
    %1580 = vmatpush.msra.mxu0 0.0
    %1581 = vmatpush.msra.mxu0 0.0
    %1582 = vmatpush.msra.mxu0 0.0
    %1583 = vmatpush.msra.mxu0 %v260
    %1584 = vmatmul.f32.gmra.mxu0 %v1566
    %v1585 = vpop.f32.mrf.mxu0
    %v1586 = vadd.f32 0.0, %v1585
    %1587 = vdwg.mxu0
    %v1589 = vsel %vm961, %v1264, 0
    %1591 = vmatpush.msra.mxu0 0.0
    %1592 = vmatpush.msra.mxu0 0.0
    %1593 = vmatpush.msra.mxu0 0.0
    %1594 = vmatpush.msra.mxu0 0.0
    %1595 = vmatpush.msra.mxu0 0.0
    %1596 = vmatpush.msra.mxu0 0.0
    %1597 = vmatpush.msra.mxu0 0.0
    %1598 = vmatpush.msra.mxu0 0.0
    %1599 = vmatpush.msra.mxu0 0.0
    %1600 = vmatpush.msra.mxu0 0.0
    %1601 = vmatpush.msra.mxu0 0.0
    %1602 = vmatpush.msra.mxu0 0.0
    %1603 = vmatpush.msra.mxu0 0.0
    %1604 = vmatpush.msra.mxu0 0.0
    %1605 = vmatpush.msra.mxu0 0.0
    %1606 = vmatpush.msra.mxu0 %v263
    %1607 = vmatmul.f32.gmra.mxu0 %v1589
    %v1608 = vpop.f32.mrf.mxu0
    %v1609 = vadd.f32 0.0, %v1608
    %1610 = vdwg.mxu0
    %v1612 = vsel %vm961, %v1265, 0
    %1614 = vmatpush.msra.mxu0 0.0
    %1615 = vmatpush.msra.mxu0 0.0
    %1616 = vmatpush.msra.mxu0 0.0
    %1617 = vmatpush.msra.mxu0 0.0
    %1618 = vmatpush.msra.mxu0 0.0
    %1619 = vmatpush.msra.mxu0 0.0
    %1620 = vmatpush.msra.mxu0 0.0
    %1621 = vmatpush.msra.mxu0 0.0
    %1622 = vmatpush.msra.mxu0 0.0
    %1623 = vmatpush.msra.mxu0 0.0
    %1624 = vmatpush.msra.mxu0 0.0
    %1625 = vmatpush.msra.mxu0 0.0
    %1626 = vmatpush.msra.mxu0 0.0
    %1627 = vmatpush.msra.mxu0 0.0
    %1628 = vmatpush.msra.mxu0 0.0
    %1629 = vmatpush.msra.mxu0 %v266
    %1630 = vmatmul.f32.gmra.mxu0 %v1612
    %v1631 = vpop.f32.mrf.mxu0
    %v1632 = vadd.f32 0.0, %v1631
    %1633 = vdwg.mxu0
    %1634 = vrot.lane.b32.xlu0 %v156, 112
    %v1635 = vpop.permute.xlu0 %1634
    %1636 = vrot.lane.b32.xlu0 %v156, 48
    %v1637 = vpop.permute.xlu0 %1636
    %v1638 = vsel %vm467, %v1635, 0
    %v1640 = vsel %vm467, %v1637, 0
    %1642 = vmatpush.xpose.msra.mxu0 0.0
    %1643 = vmatpush.xpose.msra.mxu0 0.0
    %1644 = vmatpush.xpose.msra.mxu0 0.0
    %1645 = vmatpush.xpose.msra.mxu0 0.0
    %1646 = vmatpush.xpose.msra.mxu0 0.0
    %1647 = vmatpush.xpose.msra.mxu0 0.0
    %1648 = vmatpush.xpose.msra.mxu0 0.0
    %1649 = vmatpush.xpose.msra.mxu0 0.0
    %1650 = vmatpush.xpose.msra.mxu0 0.0
    %1651 = vmatpush.xpose.msra.mxu0 0.0
    %1652 = vmatpush.xpose.msra.mxu0 0.0
    %1653 = vmatpush.xpose.msra.mxu0 0.0
    %1654 = vmatpush.xpose.msra.mxu0 0.0
    %1655 = vmatpush.xpose.msra.mxu0 0.0
    %1656 = vmatpush.xpose.msra.mxu0 0.0
    %1657 = vmatpush.xpose.msra.mxu0 %v1640
    %1658 = vmatmul.f32.gmra.mxu0 %v1638
    %v1659 = vpop.f32.mrf.mxu0
    %v1660 = vadd.f32 0.0, %v1659
    %1661 = vdwg.mxu0
    %1662 = vrot.lane.b32.xlu0 %v159, 112
    %v1663 = vpop.permute.xlu0 %1662
    %1664 = vrot.lane.b32.xlu0 %v159, 48
    %v1665 = vpop.permute.xlu0 %1664
    %v1666 = vsel %vm467, %v1663, 0
    %v1668 = vsel %vm467, %v1665, 0
    %1670 = vmatpush.xpose.msra.mxu0 0.0
    %1671 = vmatpush.xpose.msra.mxu0 0.0
    %1672 = vmatpush.xpose.msra.mxu0 0.0
    %1673 = vmatpush.xpose.msra.mxu0 0.0
    %1674 = vmatpush.xpose.msra.mxu0 0.0
    %1675 = vmatpush.xpose.msra.mxu0 0.0
    %1676 = vmatpush.xpose.msra.mxu0 0.0
    %1677 = vmatpush.xpose.msra.mxu0 0.0
    %1678 = vmatpush.xpose.msra.mxu0 0.0
    %1679 = vmatpush.xpose.msra.mxu0 0.0
    %1680 = vmatpush.xpose.msra.mxu0 0.0
    %1681 = vmatpush.xpose.msra.mxu0 0.0
    %1682 = vmatpush.xpose.msra.mxu0 0.0
    %1683 = vmatpush.xpose.msra.mxu0 0.0
    %1684 = vmatpush.xpose.msra.mxu0 0.0
    %1685 = vmatpush.xpose.msra.mxu0 %v1668
    %1686 = vmatmul.f32.gmra.mxu0 %v1666
    %v1687 = vpop.f32.mrf.mxu0
    %v1688 = vadd.f32 0.0, %v1687
    %1689 = vdwg.mxu0
    %1690 = vrot.lane.b32.xlu0 %v162, 112
    %v1691 = vpop.permute.xlu0 %1690
    %1692 = vrot.lane.b32.xlu0 %v162, 48
    %v1693 = vpop.permute.xlu0 %1692
    %v1694 = vsel %vm467, %v1691, 0
    %v1696 = vsel %vm467, %v1693, 0
    %1698 = vmatpush.xpose.msra.mxu0 0.0
    %1699 = vmatpush.xpose.msra.mxu0 0.0
    %1700 = vmatpush.xpose.msra.mxu0 0.0
    %1701 = vmatpush.xpose.msra.mxu0 0.0
    %1702 = vmatpush.xpose.msra.mxu0 0.0
    %1703 = vmatpush.xpose.msra.mxu0 0.0
    %1704 = vmatpush.xpose.msra.mxu0 0.0
    %1705 = vmatpush.xpose.msra.mxu0 0.0
    %1706 = vmatpush.xpose.msra.mxu0 0.0
    %1707 = vmatpush.xpose.msra.mxu0 0.0
    %1708 = vmatpush.xpose.msra.mxu0 0.0
    %1709 = vmatpush.xpose.msra.mxu0 0.0
    %1710 = vmatpush.xpose.msra.mxu0 0.0
    %1711 = vmatpush.xpose.msra.mxu0 0.0
    %1712 = vmatpush.xpose.msra.mxu0 0.0
    %1713 = vmatpush.xpose.msra.mxu0 %v1696
    %1714 = vmatmul.f32.gmra.mxu0 %v1694
    %v1715 = vpop.f32.mrf.mxu0
    %v1716 = vadd.f32 0.0, %v1715
    %1717 = vdwg.mxu0
    %1718 = vrot.lane.b32.xlu0 %v165, 112
    %v1719 = vpop.permute.xlu0 %1718
    %1720 = vrot.lane.b32.xlu0 %v165, 48
    %v1721 = vpop.permute.xlu0 %1720
    %v1722 = vsel %vm467, %v1719, 0
    %v1724 = vsel %vm467, %v1721, 0
    %1726 = vmatpush.xpose.msra.mxu0 0.0
    %1727 = vmatpush.xpose.msra.mxu0 0.0
    %1728 = vmatpush.xpose.msra.mxu0 0.0
    %1729 = vmatpush.xpose.msra.mxu0 0.0
    %1730 = vmatpush.xpose.msra.mxu0 0.0
    %1731 = vmatpush.xpose.msra.mxu0 0.0
    %1732 = vmatpush.xpose.msra.mxu0 0.0
    %1733 = vmatpush.xpose.msra.mxu0 0.0
    %1734 = vmatpush.xpose.msra.mxu0 0.0
    %1735 = vmatpush.xpose.msra.mxu0 0.0
    %1736 = vmatpush.xpose.msra.mxu0 0.0
    %1737 = vmatpush.xpose.msra.mxu0 0.0
    %1738 = vmatpush.xpose.msra.mxu0 0.0
    %1739 = vmatpush.xpose.msra.mxu0 0.0
    %1740 = vmatpush.xpose.msra.mxu0 0.0
    %1741 = vmatpush.xpose.msra.mxu0 %v1724
    %1742 = vmatmul.f32.gmra.mxu0 %v1722
    %v1743 = vpop.f32.mrf.mxu0
    %v1744 = vadd.f32 0.0, %v1743
    %1745 = vdwg.mxu0
    %1746 = vrot.lane.b32.xlu0 %v168, 112
    %v1747 = vpop.permute.xlu0 %1746
    %1748 = vrot.lane.b32.xlu0 %v168, 48
    %v1749 = vpop.permute.xlu0 %1748
    %v1750 = vsel %vm467, %v1747, 0
    %v1752 = vsel %vm467, %v1749, 0
    %1754 = vmatpush.xpose.msra.mxu0 0.0
    %1755 = vmatpush.xpose.msra.mxu0 0.0
    %1756 = vmatpush.xpose.msra.mxu0 0.0
    %1757 = vmatpush.xpose.msra.mxu0 0.0
    %1758 = vmatpush.xpose.msra.mxu0 0.0
    %1759 = vmatpush.xpose.msra.mxu0 0.0
    %1760 = vmatpush.xpose.msra.mxu0 0.0
    %1761 = vmatpush.xpose.msra.mxu0 0.0
    %1762 = vmatpush.xpose.msra.mxu0 0.0
    %1763 = vmatpush.xpose.msra.mxu0 0.0
    %1764 = vmatpush.xpose.msra.mxu0 0.0
    %1765 = vmatpush.xpose.msra.mxu0 0.0
    %1766 = vmatpush.xpose.msra.mxu0 0.0
    %1767 = vmatpush.xpose.msra.mxu0 0.0
    %1768 = vmatpush.xpose.msra.mxu0 0.0
    %1769 = vmatpush.xpose.msra.mxu0 %v1752
    %1770 = vmatmul.f32.gmra.mxu0 %v1750
    %v1771 = vpop.f32.mrf.mxu0
    %v1772 = vadd.f32 0.0, %v1771
    %1773 = vdwg.mxu0
    %1774 = vrot.lane.b32.xlu0 %v171, 112
    %v1775 = vpop.permute.xlu0 %1774
    %1776 = vrot.lane.b32.xlu0 %v171, 48
    %v1777 = vpop.permute.xlu0 %1776
    %v1778 = vsel %vm467, %v1775, 0
    %v1780 = vsel %vm467, %v1777, 0
    %1782 = vmatpush.xpose.msra.mxu0 0.0
    %1783 = vmatpush.xpose.msra.mxu0 0.0
    %1784 = vmatpush.xpose.msra.mxu0 0.0
    %1785 = vmatpush.xpose.msra.mxu0 0.0
    %1786 = vmatpush.xpose.msra.mxu0 0.0
    %1787 = vmatpush.xpose.msra.mxu0 0.0
    %1788 = vmatpush.xpose.msra.mxu0 0.0
    %1789 = vmatpush.xpose.msra.mxu0 0.0
    %1790 = vmatpush.xpose.msra.mxu0 0.0
    %1791 = vmatpush.xpose.msra.mxu0 0.0
    %1792 = vmatpush.xpose.msra.mxu0 0.0
    %1793 = vmatpush.xpose.msra.mxu0 0.0
    %1794 = vmatpush.xpose.msra.mxu0 0.0
    %1795 = vmatpush.xpose.msra.mxu0 0.0
    %1796 = vmatpush.xpose.msra.mxu0 0.0
    %1797 = vmatpush.xpose.msra.mxu0 %v1780
    %1798 = vmatmul.f32.gmra.mxu0 %v1778
    %v1799 = vpop.f32.mrf.mxu0
    %v1800 = vadd.f32 0.0, %v1799
    %1801 = vdwg.mxu0
    %1802 = vrot.lane.b32.xlu0 %v174, 112
    %v1803 = vpop.permute.xlu0 %1802
    %1804 = vrot.lane.b32.xlu0 %v174, 48
    %v1805 = vpop.permute.xlu0 %1804
    %v1806 = vsel %vm467, %v1803, 0
    %v1808 = vsel %vm467, %v1805, 0
    %1810 = vmatpush.xpose.msra.mxu0 0.0
    %1811 = vmatpush.xpose.msra.mxu0 0.0
    %1812 = vmatpush.xpose.msra.mxu0 0.0
    %1813 = vmatpush.xpose.msra.mxu0 0.0
    %1814 = vmatpush.xpose.msra.mxu0 0.0
    %1815 = vmatpush.xpose.msra.mxu0 0.0
    %1816 = vmatpush.xpose.msra.mxu0 0.0
    %1817 = vmatpush.xpose.msra.mxu0 0.0
    %1818 = vmatpush.xpose.msra.mxu0 0.0
    %1819 = vmatpush.xpose.msra.mxu0 0.0
    %1820 = vmatpush.xpose.msra.mxu0 0.0
    %1821 = vmatpush.xpose.msra.mxu0 0.0
    %1822 = vmatpush.xpose.msra.mxu0 0.0
    %1823 = vmatpush.xpose.msra.mxu0 0.0
    %1824 = vmatpush.xpose.msra.mxu0 0.0
    %1825 = vmatpush.xpose.msra.mxu0 %v1808
    %1826 = vmatmul.f32.gmra.mxu0 %v1806
    %v1827 = vpop.f32.mrf.mxu0
    %v1828 = vadd.f32 0.0, %v1827
    %1829 = vdwg.mxu0
    %1830 = vrot.lane.b32.xlu0 %v177, 112
    %v1831 = vpop.permute.xlu0 %1830
    %1832 = vrot.lane.b32.xlu0 %v177, 48
    %v1833 = vpop.permute.xlu0 %1832
    %v1834 = vsel %vm467, %v1831, 0
    %v1836 = vsel %vm467, %v1833, 0
    %1838 = vmatpush.xpose.msra.mxu0 0.0
    %1839 = vmatpush.xpose.msra.mxu0 0.0
    %1840 = vmatpush.xpose.msra.mxu0 0.0
    %1841 = vmatpush.xpose.msra.mxu0 0.0
    %1842 = vmatpush.xpose.msra.mxu0 0.0
    %1843 = vmatpush.xpose.msra.mxu0 0.0
    %1844 = vmatpush.xpose.msra.mxu0 0.0
    %1845 = vmatpush.xpose.msra.mxu0 0.0
    %1846 = vmatpush.xpose.msra.mxu0 0.0
    %1847 = vmatpush.xpose.msra.mxu0 0.0
    %1848 = vmatpush.xpose.msra.mxu0 0.0
    %1849 = vmatpush.xpose.msra.mxu0 0.0
    %1850 = vmatpush.xpose.msra.mxu0 0.0
    %1851 = vmatpush.xpose.msra.mxu0 0.0
    %1852 = vmatpush.xpose.msra.mxu0 0.0
    %1853 = vmatpush.xpose.msra.mxu0 %v1836
    %1854 = vmatmul.f32.gmra.mxu0 %v1834
    %v1855 = vpop.f32.mrf.mxu0
    %v1856 = vadd.f32 0.0, %v1855
    %1857 = vdwg.mxu0
    %1858 = vrot.lane.b32.xlu0 %v180, 112
    %v1859 = vpop.permute.xlu0 %1858
    %1860 = vrot.lane.b32.xlu0 %v180, 48
    %v1861 = vpop.permute.xlu0 %1860
    %v1862 = vsel %vm467, %v1859, 0
    %v1864 = vsel %vm467, %v1861, 0
    %1866 = vmatpush.xpose.msra.mxu0 0.0
    %1867 = vmatpush.xpose.msra.mxu0 0.0
    %1868 = vmatpush.xpose.msra.mxu0 0.0
    %1869 = vmatpush.xpose.msra.mxu0 0.0
    %1870 = vmatpush.xpose.msra.mxu0 0.0
    %1871 = vmatpush.xpose.msra.mxu0 0.0
    %1872 = vmatpush.xpose.msra.mxu0 0.0
    %1873 = vmatpush.xpose.msra.mxu0 0.0
    %1874 = vmatpush.xpose.msra.mxu0 0.0
    %1875 = vmatpush.xpose.msra.mxu0 0.0
    %1876 = vmatpush.xpose.msra.mxu0 0.0
    %1877 = vmatpush.xpose.msra.mxu0 0.0
    %1878 = vmatpush.xpose.msra.mxu0 0.0
    %1879 = vmatpush.xpose.msra.mxu0 0.0
    %1880 = vmatpush.xpose.msra.mxu0 0.0
    %1881 = vmatpush.xpose.msra.mxu0 %v1864
    %1882 = vmatmul.f32.gmra.mxu0 %v1862
    %v1883 = vpop.f32.mrf.mxu0
    %v1884 = vadd.f32 0.0, %v1883
    %1885 = vdwg.mxu0
    %1886 = vrot.lane.b32.xlu0 %v183, 112
    %v1887 = vpop.permute.xlu0 %1886
    %1888 = vrot.lane.b32.xlu0 %v183, 48
    %v1889 = vpop.permute.xlu0 %1888
    %v1890 = vsel %vm467, %v1887, 0
    %v1892 = vsel %vm467, %v1889, 0
    %1894 = vmatpush.xpose.msra.mxu0 0.0
    %1895 = vmatpush.xpose.msra.mxu0 0.0
    %1896 = vmatpush.xpose.msra.mxu0 0.0
    %1897 = vmatpush.xpose.msra.mxu0 0.0
    %1898 = vmatpush.xpose.msra.mxu0 0.0
    %1899 = vmatpush.xpose.msra.mxu0 0.0
    %1900 = vmatpush.xpose.msra.mxu0 0.0
    %1901 = vmatpush.xpose.msra.mxu0 0.0
    %1902 = vmatpush.xpose.msra.mxu0 0.0
    %1903 = vmatpush.xpose.msra.mxu0 0.0
    %1904 = vmatpush.xpose.msra.mxu0 0.0
    %1905 = vmatpush.xpose.msra.mxu0 0.0
    %1906 = vmatpush.xpose.msra.mxu0 0.0
    %1907 = vmatpush.xpose.msra.mxu0 0.0
    %1908 = vmatpush.xpose.msra.mxu0 0.0
    %1909 = vmatpush.xpose.msra.mxu0 %v1892
    %1910 = vmatmul.f32.gmra.mxu0 %v1890
    %v1911 = vpop.f32.mrf.mxu0
    %v1912 = vadd.f32 0.0, %v1911
    %1913 = vdwg.mxu0
    %1914 = vrot.lane.b32.xlu0 %v186, 112
    %v1915 = vpop.permute.xlu0 %1914
    %1916 = vrot.lane.b32.xlu0 %v186, 48
    %v1917 = vpop.permute.xlu0 %1916
    %v1918 = vsel %vm467, %v1915, 0
    %v1920 = vsel %vm467, %v1917, 0
    %1922 = vmatpush.xpose.msra.mxu0 0.0
    %1923 = vmatpush.xpose.msra.mxu0 0.0
    %1924 = vmatpush.xpose.msra.mxu0 0.0
    %1925 = vmatpush.xpose.msra.mxu0 0.0
    %1926 = vmatpush.xpose.msra.mxu0 0.0
    %1927 = vmatpush.xpose.msra.mxu0 0.0
    %1928 = vmatpush.xpose.msra.mxu0 0.0
    %1929 = vmatpush.xpose.msra.mxu0 0.0
    %1930 = vmatpush.xpose.msra.mxu0 0.0
    %1931 = vmatpush.xpose.msra.mxu0 0.0
    %1932 = vmatpush.xpose.msra.mxu0 0.0
    %1933 = vmatpush.xpose.msra.mxu0 0.0
    %1934 = vmatpush.xpose.msra.mxu0 0.0
    %1935 = vmatpush.xpose.msra.mxu0 0.0
    %1936 = vmatpush.xpose.msra.mxu0 0.0
    %1937 = vmatpush.xpose.msra.mxu0 %v1920
    %1938 = vmatmul.f32.gmra.mxu0 %v1918
    %v1939 = vpop.f32.mrf.mxu0
    %v1940 = vadd.f32 0.0, %v1939
    %1941 = vdwg.mxu0
    %1942 = vrot.lane.b32.xlu0 %v189, 112
    %v1943 = vpop.permute.xlu0 %1942
    %1944 = vrot.lane.b32.xlu0 %v189, 48
    %v1945 = vpop.permute.xlu0 %1944
    %v1946 = vsel %vm467, %v1943, 0
    %v1948 = vsel %vm467, %v1945, 0
    %1950 = vmatpush.xpose.msra.mxu0 0.0
    %1951 = vmatpush.xpose.msra.mxu0 0.0
    %1952 = vmatpush.xpose.msra.mxu0 0.0
    %1953 = vmatpush.xpose.msra.mxu0 0.0
    %1954 = vmatpush.xpose.msra.mxu0 0.0
    %1955 = vmatpush.xpose.msra.mxu0 0.0
    %1956 = vmatpush.xpose.msra.mxu0 0.0
    %1957 = vmatpush.xpose.msra.mxu0 0.0
    %1958 = vmatpush.xpose.msra.mxu0 0.0
    %1959 = vmatpush.xpose.msra.mxu0 0.0
    %1960 = vmatpush.xpose.msra.mxu0 0.0
    %1961 = vmatpush.xpose.msra.mxu0 0.0
    %1962 = vmatpush.xpose.msra.mxu0 0.0
    %1963 = vmatpush.xpose.msra.mxu0 0.0
    %1964 = vmatpush.xpose.msra.mxu0 0.0
    %1965 = vmatpush.xpose.msra.mxu0 %v1948
    %1966 = vmatmul.f32.gmra.mxu0 %v1946
    %v1967 = vpop.f32.mrf.mxu0
    %v1968 = vadd.f32 0.0, %v1967
    %1969 = vdwg.mxu0
    %1970 = vrot.lane.b32.xlu0 %v192, 112
    %v1971 = vpop.permute.xlu0 %1970
    %1972 = vrot.lane.b32.xlu0 %v192, 48
    %v1973 = vpop.permute.xlu0 %1972
    %v1974 = vsel %vm467, %v1971, 0
    %v1976 = vsel %vm467, %v1973, 0
    %1978 = vmatpush.xpose.msra.mxu0 0.0
    %1979 = vmatpush.xpose.msra.mxu0 0.0
    %1980 = vmatpush.xpose.msra.mxu0 0.0
    %1981 = vmatpush.xpose.msra.mxu0 0.0
    %1982 = vmatpush.xpose.msra.mxu0 0.0
    %1983 = vmatpush.xpose.msra.mxu0 0.0
    %1984 = vmatpush.xpose.msra.mxu0 0.0
    %1985 = vmatpush.xpose.msra.mxu0 0.0
    %1986 = vmatpush.xpose.msra.mxu0 0.0
    %1987 = vmatpush.xpose.msra.mxu0 0.0
    %1988 = vmatpush.xpose.msra.mxu0 0.0
    %1989 = vmatpush.xpose.msra.mxu0 0.0
    %1990 = vmatpush.xpose.msra.mxu0 0.0
    %1991 = vmatpush.xpose.msra.mxu0 0.0
    %1992 = vmatpush.xpose.msra.mxu0 0.0
    %1993 = vmatpush.xpose.msra.mxu0 %v1976
    %1994 = vmatmul.f32.gmra.mxu0 %v1974
    %v1995 = vpop.f32.mrf.mxu0
    %v1996 = vadd.f32 0.0, %v1995
    %1997 = vdwg.mxu0
    %1998 = vrot.lane.b32.xlu0 %v195, 112
    %v1999 = vpop.permute.xlu0 %1998
    %2000 = vrot.lane.b32.xlu0 %v195, 48
    %v2001 = vpop.permute.xlu0 %2000
    %v2002 = vsel %vm467, %v1999, 0
    %v2004 = vsel %vm467, %v2001, 0
    %2006 = vmatpush.xpose.msra.mxu0 0.0
    %2007 = vmatpush.xpose.msra.mxu0 0.0
    %2008 = vmatpush.xpose.msra.mxu0 0.0
    %2009 = vmatpush.xpose.msra.mxu0 0.0
    %2010 = vmatpush.xpose.msra.mxu0 0.0
    %2011 = vmatpush.xpose.msra.mxu0 0.0
    %2012 = vmatpush.xpose.msra.mxu0 0.0
    %2013 = vmatpush.xpose.msra.mxu0 0.0
    %2014 = vmatpush.xpose.msra.mxu0 0.0
    %2015 = vmatpush.xpose.msra.mxu0 0.0
    %2016 = vmatpush.xpose.msra.mxu0 0.0
    %2017 = vmatpush.xpose.msra.mxu0 0.0
    %2018 = vmatpush.xpose.msra.mxu0 0.0
    %2019 = vmatpush.xpose.msra.mxu0 0.0
    %2020 = vmatpush.xpose.msra.mxu0 0.0
    %2021 = vmatpush.xpose.msra.mxu0 %v2004
    %2022 = vmatmul.f32.gmra.mxu0 %v2002
    %v2023 = vpop.f32.mrf.mxu0
    %v2024 = vadd.f32 0.0, %v2023
    %2025 = vdwg.mxu0
    %2026 = vrot.lane.b32.xlu0 %v198, 112
    %v2027 = vpop.permute.xlu0 %2026
    %2028 = vrot.lane.b32.xlu0 %v198, 48
    %v2029 = vpop.permute.xlu0 %2028
    %v2030 = vsel %vm467, %v2027, 0
    %v2032 = vsel %vm467, %v2029, 0
    %2034 = vmatpush.xpose.msra.mxu0 0.0
    %2035 = vmatpush.xpose.msra.mxu0 0.0
    %2036 = vmatpush.xpose.msra.mxu0 0.0
    %2037 = vmatpush.xpose.msra.mxu0 0.0
    %2038 = vmatpush.xpose.msra.mxu0 0.0
    %2039 = vmatpush.xpose.msra.mxu0 0.0
    %2040 = vmatpush.xpose.msra.mxu0 0.0
    %2041 = vmatpush.xpose.msra.mxu0 0.0
    %2042 = vmatpush.xpose.msra.mxu0 0.0
    %2043 = vmatpush.xpose.msra.mxu0 0.0
    %2044 = vmatpush.xpose.msra.mxu0 0.0
    %2045 = vmatpush.xpose.msra.mxu0 0.0
    %2046 = vmatpush.xpose.msra.mxu0 0.0
    %2047 = vmatpush.xpose.msra.mxu0 0.0
    %2048 = vmatpush.xpose.msra.mxu0 0.0
    %2049 = vmatpush.xpose.msra.mxu0 %v2032
    %2050 = vmatmul.f32.gmra.mxu0 %v2030
    %v2051 = vpop.f32.mrf.mxu0
    %v2052 = vadd.f32 0.0, %v2051
    %2053 = vdwg.mxu0
    %2054 = vrot.lane.b32.xlu0 %v201, 112
    %v2055 = vpop.permute.xlu0 %2054
    %2056 = vrot.lane.b32.xlu0 %v201, 48
    %v2057 = vpop.permute.xlu0 %2056
    %v2058 = vsel %vm467, %v2055, 0
    %v2060 = vsel %vm467, %v2057, 0
    %2062 = vmatpush.xpose.msra.mxu0 0.0
    %2063 = vmatpush.xpose.msra.mxu0 0.0
    %2064 = vmatpush.xpose.msra.mxu0 0.0
    %2065 = vmatpush.xpose.msra.mxu0 0.0
    %2066 = vmatpush.xpose.msra.mxu0 0.0
    %2067 = vmatpush.xpose.msra.mxu0 0.0
    %2068 = vmatpush.xpose.msra.mxu0 0.0
    %2069 = vmatpush.xpose.msra.mxu0 0.0
    %2070 = vmatpush.xpose.msra.mxu0 0.0
    %2071 = vmatpush.xpose.msra.mxu0 0.0
    %2072 = vmatpush.xpose.msra.mxu0 0.0
    %2073 = vmatpush.xpose.msra.mxu0 0.0
    %2074 = vmatpush.xpose.msra.mxu0 0.0
    %2075 = vmatpush.xpose.msra.mxu0 0.0
    %2076 = vmatpush.xpose.msra.mxu0 0.0
    %2077 = vmatpush.xpose.msra.mxu0 %v2060
    %2078 = vmatmul.f32.gmra.mxu0 %v2058
    %v2079 = vpop.f32.mrf.mxu0
    %v2080 = vadd.f32 0.0, %v2079
    %2081 = vdwg.mxu0
    %v2082 = vmul.f32 %v1660, 0.25
    %v2083 = vmul.f32 %v1688, 0.25
    %v2084 = vmul.f32 %v1716, 0.25
    %v2085 = vmul.f32 %v1744, 0.25
    %v2086 = vmul.f32 %v1772, 0.25
    %v2087 = vmul.f32 %v1800, 0.25
    %v2088 = vmul.f32 %v1828, 0.25
    %v2089 = vmul.f32 %v1856, 0.25
    %v2090 = vmul.f32 %v1884, 0.25
    %v2091 = vmul.f32 %v1912, 0.25
    %v2092 = vmul.f32 %v1940, 0.25
    %v2093 = vmul.f32 %v1968, 0.25
    %v2094 = vmul.f32 %v1996, 0.25
    %v2095 = vmul.f32 %v2024, 0.25
    %v2096 = vmul.f32 %v2052, 0.25
    %v2097 = vmul.f32 %v2080, 0.25
    %v2098 = vmul.f32 %v2082, 1.442695
    %v2099 = vpow.pop %v2098
    %v2100 = vmul.f32 %v2083, 1.442695
    %v2101 = vpow.pop %v2100
    %v2102 = vmul.f32 %v2084, 1.442695
    %v2103 = vpow.pop %v2102
    %v2104 = vmul.f32 %v2085, 1.442695
    %v2105 = vpow.pop %v2104
    %v2106 = vmul.f32 %v2086, 1.442695
    %v2107 = vpow.pop %v2106
    %v2108 = vmul.f32 %v2087, 1.442695
    %v2109 = vpow.pop %v2108
    %v2110 = vmul.f32 %v2088, 1.442695
    %v2111 = vpow.pop %v2110
    %v2112 = vmul.f32 %v2089, 1.442695
    %v2113 = vpow.pop %v2112
    %v2114 = vmul.f32 %v2090, 1.442695
    %v2115 = vpow.pop %v2114
    %v2116 = vmul.f32 %v2091, 1.442695
    %v2117 = vpow.pop %v2116
    %v2118 = vmul.f32 %v2092, 1.442695
    %v2119 = vpow.pop %v2118
    %v2120 = vmul.f32 %v2093, 1.442695
    %v2121 = vpow.pop %v2120
    %v2122 = vmul.f32 %v2094, 1.442695
    %v2123 = vpow.pop %v2122
    %v2124 = vmul.f32 %v2095, 1.442695
    %v2125 = vpow.pop %v2124
    %v2126 = vmul.f32 %v2096, 1.442695
    %v2127 = vpow.pop %v2126
    %v2128 = vmul.f32 %v2097, 1.442695
    %v2129 = vpow.pop %v2128
    %v2130 = vmul.f32 %v2099, %v382
    %v2131 = vmul.f32 %v2101, %v383
    %v2132 = vmul.f32 %v2103, %v384
    %v2133 = vmul.f32 %v2105, %v385
    %v2134 = vmul.f32 %v2107, %v386
    %v2135 = vmul.f32 %v2109, %v387
    %v2136 = vmul.f32 %v2111, %v388
    %v2137 = vmul.f32 %v2113, %v389
    %v2138 = vmul.f32 %v2115, %v390
    %v2139 = vmul.f32 %v2117, %v391
    %v2140 = vmul.f32 %v2119, %v392
    %v2141 = vmul.f32 %v2121, %v393
    %v2142 = vmul.f32 %v2123, %v394
    %v2143 = vmul.f32 %v2125, %v395
    %v2144 = vmul.f32 %v2127, %v396
    %v2145 = vmul.f32 %v2129, %v397
    %v2146 = vsel %vm961, %v2130, 0.0
    %2147 = vadd.xlane.f32.xlu0 %v2146
    %v2148 = vpop.xlane.xlu0 %2147
    %v2149 = vsel %vm961, %v2131, 0.0
    %2150 = vadd.xlane.f32.xlu0 %v2149
    %v2151 = vpop.xlane.xlu0 %2150
    %v2152 = vsel %vm961, %v2132, 0.0
    %2153 = vadd.xlane.f32.xlu0 %v2152
    %v2154 = vpop.xlane.xlu0 %2153
    %v2155 = vsel %vm961, %v2133, 0.0
    %2156 = vadd.xlane.f32.xlu0 %v2155
    %v2157 = vpop.xlane.xlu0 %2156
    %v2158 = vsel %vm961, %v2134, 0.0
    %2159 = vadd.xlane.f32.xlu0 %v2158
    %v2160 = vpop.xlane.xlu0 %2159
    %v2161 = vsel %vm961, %v2135, 0.0
    %2162 = vadd.xlane.f32.xlu0 %v2161
    %v2163 = vpop.xlane.xlu0 %2162
    %v2164 = vsel %vm961, %v2136, 0.0
    %2165 = vadd.xlane.f32.xlu0 %v2164
    %v2166 = vpop.xlane.xlu0 %2165
    %v2167 = vsel %vm961, %v2137, 0.0
    %2168 = vadd.xlane.f32.xlu0 %v2167
    %v2169 = vpop.xlane.xlu0 %2168
    %v2170 = vsel %vm961, %v2138, 0.0
    %2171 = vadd.xlane.f32.xlu0 %v2170
    %v2172 = vpop.xlane.xlu0 %2171
    %v2173 = vsel %vm961, %v2139, 0.0
    %2174 = vadd.xlane.f32.xlu0 %v2173
    %v2175 = vpop.xlane.xlu0 %2174
    %v2176 = vsel %vm961, %v2140, 0.0
    %2177 = vadd.xlane.f32.xlu0 %v2176
    %v2178 = vpop.xlane.xlu0 %2177
    %v2179 = vsel %vm961, %v2141, 0.0
    %2180 = vadd.xlane.f32.xlu0 %v2179
    %v2181 = vpop.xlane.xlu0 %2180
    %v2182 = vsel %vm961, %v2142, 0.0
    %2183 = vadd.xlane.f32.xlu0 %v2182
    %v2184 = vpop.xlane.xlu0 %2183
    %v2185 = vsel %vm961, %v2143, 0.0
    %2186 = vadd.xlane.f32.xlu0 %v2185
    %v2187 = vpop.xlane.xlu0 %2186
    %v2188 = vsel %vm961, %v2144, 0.0
    %2189 = vadd.xlane.f32.xlu0 %v2188
    %v2190 = vpop.xlane.xlu0 %2189
    %v2191 = vsel %vm961, %v2145, 0.0
    %2192 = vadd.xlane.f32.xlu0 %v2191
    %v2193 = vpop.xlane.xlu0 %2192
    %v2194 = vadd.f32 %v2148, 1e-08
    %v2195 = vadd.f32 %v2151, 1e-08
    %v2196 = vadd.f32 %v2154, 1e-08
    %v2197 = vadd.f32 %v2157, 1e-08
    %v2198 = vadd.f32 %v2160, 1e-08
    %v2199 = vadd.f32 %v2163, 1e-08
    %v2200 = vadd.f32 %v2166, 1e-08
    %v2201 = vadd.f32 %v2169, 1e-08
    %v2202 = vadd.f32 %v2172, 1e-08
    %v2203 = vadd.f32 %v2175, 1e-08
    %v2204 = vadd.f32 %v2178, 1e-08
    %v2205 = vadd.f32 %v2181, 1e-08
    %v2206 = vadd.f32 %v2184, 1e-08
    %v2207 = vadd.f32 %v2187, 1e-08
    %v2208 = vadd.f32 %v2190, 1e-08
    %v2209 = vadd.f32 %v2193, 1e-08
    %v2210 = vrcp.pop %v2194
    %v2211 = vmul.f32 %v2194, %v2210
    %v2212 = vsub.f32 1.0, %v2211
    %v2213 = vmul.f32 %v2210, %v2212
    %v2214 = vadd.f32 %v2210, %v2213
    %vm2215 = vweird.f32 %v2194
    %vm2216 = vweird.f32 %v2210
    %vm2217 = vmor %vm2215, %vm2216
    %v2218 = vsel %vm2217, %v2210, %v2214
    %v2219 = vand.u32 2147483647, %v2194
    %vm2220 = vcmp.eq.f32.partialorder %v2219, 8.507059e+37
    %v2221 = vand.u32 %v2194, 2147483648
    %v2222 = vor.u32 1.1754944e-38, %v2221
    %v2223 = vsel %vm2220, %v2222, %v2218
    %v2224 = vrcp.pop %v2195
    %v2225 = vmul.f32 %v2195, %v2224
    %v2226 = vsub.f32 1.0, %v2225
    %v2227 = vmul.f32 %v2224, %v2226
    %v2228 = vadd.f32 %v2224, %v2227
    %vm2229 = vweird.f32 %v2195
    %vm2230 = vweird.f32 %v2224
    %vm2231 = vmor %vm2229, %vm2230
    %v2232 = vsel %vm2231, %v2224, %v2228
    %v2233 = vand.u32 2147483647, %v2195
    %vm2234 = vcmp.eq.f32.partialorder %v2233, 8.507059e+37
    %v2235 = vand.u32 %v2195, 2147483648
    %v2236 = vor.u32 1.1754944e-38, %v2235
    %v2237 = vsel %vm2234, %v2236, %v2232
    %v2238 = vrcp.pop %v2196
    %v2239 = vmul.f32 %v2196, %v2238
    %v2240 = vsub.f32 1.0, %v2239
    %v2241 = vmul.f32 %v2238, %v2240
    %v2242 = vadd.f32 %v2238, %v2241
    %vm2243 = vweird.f32 %v2196
    %vm2244 = vweird.f32 %v2238
    %vm2245 = vmor %vm2243, %vm2244
    %v2246 = vsel %vm2245, %v2238, %v2242
    %v2247 = vand.u32 2147483647, %v2196
    %vm2248 = vcmp.eq.f32.partialorder %v2247, 8.507059e+37
    %v2249 = vand.u32 %v2196, 2147483648
    %v2250 = vor.u32 1.1754944e-38, %v2249
    %v2251 = vsel %vm2248, %v2250, %v2246
    %v2252 = vrcp.pop %v2197
    %v2253 = vmul.f32 %v2197, %v2252
    %v2254 = vsub.f32 1.0, %v2253
    %v2255 = vmul.f32 %v2252, %v2254
    %v2256 = vadd.f32 %v2252, %v2255
    %vm2257 = vweird.f32 %v2197
    %vm2258 = vweird.f32 %v2252
    %vm2259 = vmor %vm2257, %vm2258
    %v2260 = vsel %vm2259, %v2252, %v2256
    %v2261 = vand.u32 2147483647, %v2197
    %vm2262 = vcmp.eq.f32.partialorder %v2261, 8.507059e+37
    %v2263 = vand.u32 %v2197, 2147483648
    %v2264 = vor.u32 1.1754944e-38, %v2263
    %v2265 = vsel %vm2262, %v2264, %v2260
    %v2266 = vrcp.pop %v2198
    %v2267 = vmul.f32 %v2198, %v2266
    %v2268 = vsub.f32 1.0, %v2267
    %v2269 = vmul.f32 %v2266, %v2268
    %v2270 = vadd.f32 %v2266, %v2269
    %vm2271 = vweird.f32 %v2198
    %vm2272 = vweird.f32 %v2266
    %vm2273 = vmor %vm2271, %vm2272
    %v2274 = vsel %vm2273, %v2266, %v2270
    %v2275 = vand.u32 2147483647, %v2198
    %vm2276 = vcmp.eq.f32.partialorder %v2275, 8.507059e+37
    %v2277 = vand.u32 %v2198, 2147483648
    %v2278 = vor.u32 1.1754944e-38, %v2277
    %v2279 = vsel %vm2276, %v2278, %v2274
    %v2280 = vrcp.pop %v2199
    %v2281 = vmul.f32 %v2199, %v2280
    %v2282 = vsub.f32 1.0, %v2281
    %v2283 = vmul.f32 %v2280, %v2282
    %v2284 = vadd.f32 %v2280, %v2283
    %vm2285 = vweird.f32 %v2199
    %vm2286 = vweird.f32 %v2280
    %vm2287 = vmor %vm2285, %vm2286
    %v2288 = vsel %vm2287, %v2280, %v2284
    %v2289 = vand.u32 2147483647, %v2199
    %vm2290 = vcmp.eq.f32.partialorder %v2289, 8.507059e+37
    %v2291 = vand.u32 %v2199, 2147483648
    %v2292 = vor.u32 1.1754944e-38, %v2291
    %v2293 = vsel %vm2290, %v2292, %v2288
    %v2294 = vrcp.pop %v2200
    %v2295 = vmul.f32 %v2200, %v2294
    %v2296 = vsub.f32 1.0, %v2295
    %v2297 = vmul.f32 %v2294, %v2296
    %v2298 = vadd.f32 %v2294, %v2297
    %vm2299 = vweird.f32 %v2200
    %vm2300 = vweird.f32 %v2294
    %vm2301 = vmor %vm2299, %vm2300
    %v2302 = vsel %vm2301, %v2294, %v2298
    %v2303 = vand.u32 2147483647, %v2200
    %vm2304 = vcmp.eq.f32.partialorder %v2303, 8.507059e+37
    %v2305 = vand.u32 %v2200, 2147483648
    %v2306 = vor.u32 1.1754944e-38, %v2305
    %v2307 = vsel %vm2304, %v2306, %v2302
    %v2308 = vrcp.pop %v2201
    %v2309 = vmul.f32 %v2201, %v2308
    %v2310 = vsub.f32 1.0, %v2309
    %v2311 = vmul.f32 %v2308, %v2310
    %v2312 = vadd.f32 %v2308, %v2311
    %vm2313 = vweird.f32 %v2201
    %vm2314 = vweird.f32 %v2308
    %vm2315 = vmor %vm2313, %vm2314
    %v2316 = vsel %vm2315, %v2308, %v2312
    %v2317 = vand.u32 2147483647, %v2201
    %vm2318 = vcmp.eq.f32.partialorder %v2317, 8.507059e+37
    %v2319 = vand.u32 %v2201, 2147483648
    %v2320 = vor.u32 1.1754944e-38, %v2319
    %v2321 = vsel %vm2318, %v2320, %v2316
    %v2322 = vrcp.pop %v2202
    %v2323 = vmul.f32 %v2202, %v2322
    %v2324 = vsub.f32 1.0, %v2323
    %v2325 = vmul.f32 %v2322, %v2324
    %v2326 = vadd.f32 %v2322, %v2325
    %vm2327 = vweird.f32 %v2202
    %vm2328 = vweird.f32 %v2322
    %vm2329 = vmor %vm2327, %vm2328
    %v2330 = vsel %vm2329, %v2322, %v2326
    %v2331 = vand.u32 2147483647, %v2202
    %vm2332 = vcmp.eq.f32.partialorder %v2331, 8.507059e+37
    %v2333 = vand.u32 %v2202, 2147483648
    %v2334 = vor.u32 1.1754944e-38, %v2333
    %v2335 = vsel %vm2332, %v2334, %v2330
    %v2336 = vrcp.pop %v2203
    %v2337 = vmul.f32 %v2203, %v2336
    %v2338 = vsub.f32 1.0, %v2337
    %v2339 = vmul.f32 %v2336, %v2338
    %v2340 = vadd.f32 %v2336, %v2339
    %vm2341 = vweird.f32 %v2203
    %vm2342 = vweird.f32 %v2336
    %vm2343 = vmor %vm2341, %vm2342
    %v2344 = vsel %vm2343, %v2336, %v2340
    %v2345 = vand.u32 2147483647, %v2203
    %vm2346 = vcmp.eq.f32.partialorder %v2345, 8.507059e+37
    %v2347 = vand.u32 %v2203, 2147483648
    %v2348 = vor.u32 1.1754944e-38, %v2347
    %v2349 = vsel %vm2346, %v2348, %v2344
    %v2350 = vrcp.pop %v2204
    %v2351 = vmul.f32 %v2204, %v2350
    %v2352 = vsub.f32 1.0, %v2351
    %v2353 = vmul.f32 %v2350, %v2352
    %v2354 = vadd.f32 %v2350, %v2353
    %vm2355 = vweird.f32 %v2204
    %vm2356 = vweird.f32 %v2350
    %vm2357 = vmor %vm2355, %vm2356
    %v2358 = vsel %vm2357, %v2350, %v2354
    %v2359 = vand.u32 2147483647, %v2204
    %vm2360 = vcmp.eq.f32.partialorder %v2359, 8.507059e+37
    %v2361 = vand.u32 %v2204, 2147483648
    %v2362 = vor.u32 1.1754944e-38, %v2361
    %v2363 = vsel %vm2360, %v2362, %v2358
    %v2364 = vrcp.pop %v2205
    %v2365 = vmul.f32 %v2205, %v2364
    %v2366 = vsub.f32 1.0, %v2365
    %v2367 = vmul.f32 %v2364, %v2366
    %v2368 = vadd.f32 %v2364, %v2367
    %vm2369 = vweird.f32 %v2205
    %vm2370 = vweird.f32 %v2364
    %vm2371 = vmor %vm2369, %vm2370
    %v2372 = vsel %vm2371, %v2364, %v2368
    %v2373 = vand.u32 2147483647, %v2205
    %vm2374 = vcmp.eq.f32.partialorder %v2373, 8.507059e+37
    %v2375 = vand.u32 %v2205, 2147483648
    %v2376 = vor.u32 1.1754944e-38, %v2375
    %v2377 = vsel %vm2374, %v2376, %v2372
    %v2378 = vrcp.pop %v2206
    %v2379 = vmul.f32 %v2206, %v2378
    %v2380 = vsub.f32 1.0, %v2379
    %v2381 = vmul.f32 %v2378, %v2380
    %v2382 = vadd.f32 %v2378, %v2381
    %vm2383 = vweird.f32 %v2206
    %vm2384 = vweird.f32 %v2378
    %vm2385 = vmor %vm2383, %vm2384
    %v2386 = vsel %vm2385, %v2378, %v2382
    %v2387 = vand.u32 2147483647, %v2206
    %vm2388 = vcmp.eq.f32.partialorder %v2387, 8.507059e+37
    %v2389 = vand.u32 %v2206, 2147483648
    %v2390 = vor.u32 1.1754944e-38, %v2389
    %v2391 = vsel %vm2388, %v2390, %v2386
    %v2392 = vrcp.pop %v2207
    %v2393 = vmul.f32 %v2207, %v2392
    %v2394 = vsub.f32 1.0, %v2393
    %v2395 = vmul.f32 %v2392, %v2394
    %v2396 = vadd.f32 %v2392, %v2395
    %vm2397 = vweird.f32 %v2207
    %vm2398 = vweird.f32 %v2392
    %vm2399 = vmor %vm2397, %vm2398
    %v2400 = vsel %vm2399, %v2392, %v2396
    %v2401 = vand.u32 2147483647, %v2207
    %vm2402 = vcmp.eq.f32.partialorder %v2401, 8.507059e+37
    %v2403 = vand.u32 %v2207, 2147483648
    %v2404 = vor.u32 1.1754944e-38, %v2403
    %v2405 = vsel %vm2402, %v2404, %v2400
    %v2406 = vrcp.pop %v2208
    %v2407 = vmul.f32 %v2208, %v2406
    %v2408 = vsub.f32 1.0, %v2407
    %v2409 = vmul.f32 %v2406, %v2408
    %v2410 = vadd.f32 %v2406, %v2409
    %vm2411 = vweird.f32 %v2208
    %vm2412 = vweird.f32 %v2406
    %vm2413 = vmor %vm2411, %vm2412
    %v2414 = vsel %vm2413, %v2406, %v2410
    %v2415 = vand.u32 2147483647, %v2208
    %vm2416 = vcmp.eq.f32.partialorder %v2415, 8.507059e+37
    %v2417 = vand.u32 %v2208, 2147483648
    %v2418 = vor.u32 1.1754944e-38, %v2417
    %v2419 = vsel %vm2416, %v2418, %v2414
    %v2420 = vrcp.pop %v2209
    %v2421 = vmul.f32 %v2209, %v2420
    %v2422 = vsub.f32 1.0, %v2421
    %v2423 = vmul.f32 %v2420, %v2422
    %v2424 = vadd.f32 %v2420, %v2423
    %vm2425 = vweird.f32 %v2209
    %vm2426 = vweird.f32 %v2420
    %vm2427 = vmor %vm2425, %vm2426
    %v2428 = vsel %vm2427, %v2420, %v2424
    %v2429 = vand.u32 2147483647, %v2209
    %vm2430 = vcmp.eq.f32.partialorder %v2429, 8.507059e+37
    %v2431 = vand.u32 %v2209, 2147483648
    %v2432 = vor.u32 1.1754944e-38, %v2431
    %v2433 = vsel %vm2430, %v2432, %v2428
    %v2434 = vmul.f32 %v2130, %v2223
    %v2435 = vmul.f32 %v2131, %v2237
    %v2436 = vmul.f32 %v2132, %v2251
    %v2437 = vmul.f32 %v2133, %v2265
    %v2438 = vmul.f32 %v2134, %v2279
    %v2439 = vmul.f32 %v2135, %v2293
    %v2440 = vmul.f32 %v2136, %v2307
    %v2441 = vmul.f32 %v2137, %v2321
    %v2442 = vmul.f32 %v2138, %v2335
    %v2443 = vmul.f32 %v2139, %v2349
    %v2444 = vmul.f32 %v2140, %v2363
    %v2445 = vmul.f32 %v2141, %v2377
    %v2446 = vmul.f32 %v2142, %v2391
    %v2447 = vmul.f32 %v2143, %v2405
    %v2448 = vmul.f32 %v2144, %v2419
    %v2449 = vmul.f32 %v2145, %v2433
    %2451 = vrot.lane.b32.xlu0 %v221, 112
    %v2452 = vpop.permute.xlu0 %2451
    %v2455 = vsel %vm961, %v2434, 0
    %2457 = vmatpush.msra.mxu0 0.0
    %2458 = vmatpush.msra.mxu0 0.0
    %2459 = vmatpush.msra.mxu0 0.0
    %2460 = vmatpush.msra.mxu0 0.0
    %2461 = vmatpush.msra.mxu0 0.0
    %2462 = vmatpush.msra.mxu0 0.0
    %2463 = vmatpush.msra.mxu0 0.0
    %2464 = vmatpush.msra.mxu0 0.0
    %2465 = vmatpush.msra.mxu0 0.0
    %2466 = vmatpush.msra.mxu0 0.0
    %2467 = vmatpush.msra.mxu0 0.0
    %2468 = vmatpush.msra.mxu0 0.0
    %2469 = vmatpush.msra.mxu0 0.0
    %2470 = vmatpush.msra.mxu0 0.0
    %2471 = vmatpush.msra.mxu0 0.0
    %2472 = vmatpush.msra.mxu0 %v2452
    %2473 = vmatmul.f32.gmra.mxu0 %v2455
    %v2474 = vpop.f32.mrf.mxu0
    %v2475 = vadd.f32 0.0, %v2474
    %2476 = vdwg.mxu0
    %2478 = vrot.lane.b32.xlu0 %v224, 112
    %v2479 = vpop.permute.xlu0 %2478
    %v2482 = vsel %vm961, %v2435, 0
    %2484 = vmatpush.msra.mxu0 0.0
    %2485 = vmatpush.msra.mxu0 0.0
    %2486 = vmatpush.msra.mxu0 0.0
    %2487 = vmatpush.msra.mxu0 0.0
    %2488 = vmatpush.msra.mxu0 0.0
    %2489 = vmatpush.msra.mxu0 0.0
    %2490 = vmatpush.msra.mxu0 0.0
    %2491 = vmatpush.msra.mxu0 0.0
    %2492 = vmatpush.msra.mxu0 0.0
    %2493 = vmatpush.msra.mxu0 0.0
    %2494 = vmatpush.msra.mxu0 0.0
    %2495 = vmatpush.msra.mxu0 0.0
    %2496 = vmatpush.msra.mxu0 0.0
    %2497 = vmatpush.msra.mxu0 0.0
    %2498 = vmatpush.msra.mxu0 0.0
    %2499 = vmatpush.msra.mxu0 %v2479
    %2500 = vmatmul.f32.gmra.mxu0 %v2482
    %v2501 = vpop.f32.mrf.mxu0
    %v2502 = vadd.f32 0.0, %v2501
    %2503 = vdwg.mxu0
    %2505 = vrot.lane.b32.xlu0 %v227, 112
    %v2506 = vpop.permute.xlu0 %2505
    %v2509 = vsel %vm961, %v2436, 0
    %2511 = vmatpush.msra.mxu0 0.0
    %2512 = vmatpush.msra.mxu0 0.0
    %2513 = vmatpush.msra.mxu0 0.0
    %2514 = vmatpush.msra.mxu0 0.0
    %2515 = vmatpush.msra.mxu0 0.0
    %2516 = vmatpush.msra.mxu0 0.0
    %2517 = vmatpush.msra.mxu0 0.0
    %2518 = vmatpush.msra.mxu0 0.0
    %2519 = vmatpush.msra.mxu0 0.0
    %2520 = vmatpush.msra.mxu0 0.0
    %2521 = vmatpush.msra.mxu0 0.0
    %2522 = vmatpush.msra.mxu0 0.0
    %2523 = vmatpush.msra.mxu0 0.0
    %2524 = vmatpush.msra.mxu0 0.0
    %2525 = vmatpush.msra.mxu0 0.0
    %2526 = vmatpush.msra.mxu0 %v2506
    %2527 = vmatmul.f32.gmra.mxu0 %v2509
    %v2528 = vpop.f32.mrf.mxu0
    %v2529 = vadd.f32 0.0, %v2528
    %2530 = vdwg.mxu0
    %2532 = vrot.lane.b32.xlu0 %v230, 112
    %v2533 = vpop.permute.xlu0 %2532
    %v2536 = vsel %vm961, %v2437, 0
    %2538 = vmatpush.msra.mxu0 0.0
    %2539 = vmatpush.msra.mxu0 0.0
    %2540 = vmatpush.msra.mxu0 0.0
    %2541 = vmatpush.msra.mxu0 0.0
    %2542 = vmatpush.msra.mxu0 0.0
    %2543 = vmatpush.msra.mxu0 0.0
    %2544 = vmatpush.msra.mxu0 0.0
    %2545 = vmatpush.msra.mxu0 0.0
    %2546 = vmatpush.msra.mxu0 0.0
    %2547 = vmatpush.msra.mxu0 0.0
    %2548 = vmatpush.msra.mxu0 0.0
    %2549 = vmatpush.msra.mxu0 0.0
    %2550 = vmatpush.msra.mxu0 0.0
    %2551 = vmatpush.msra.mxu0 0.0
    %2552 = vmatpush.msra.mxu0 0.0
    %2553 = vmatpush.msra.mxu0 %v2533
    %2554 = vmatmul.f32.gmra.mxu0 %v2536
    %v2555 = vpop.f32.mrf.mxu0
    %v2556 = vadd.f32 0.0, %v2555
    %2557 = vdwg.mxu0
    %2559 = vrot.lane.b32.xlu0 %v233, 112
    %v2560 = vpop.permute.xlu0 %2559
    %v2563 = vsel %vm961, %v2438, 0
    %2565 = vmatpush.msra.mxu0 0.0
    %2566 = vmatpush.msra.mxu0 0.0
    %2567 = vmatpush.msra.mxu0 0.0
    %2568 = vmatpush.msra.mxu0 0.0
    %2569 = vmatpush.msra.mxu0 0.0
    %2570 = vmatpush.msra.mxu0 0.0
    %2571 = vmatpush.msra.mxu0 0.0
    %2572 = vmatpush.msra.mxu0 0.0
    %2573 = vmatpush.msra.mxu0 0.0
    %2574 = vmatpush.msra.mxu0 0.0
    %2575 = vmatpush.msra.mxu0 0.0
    %2576 = vmatpush.msra.mxu0 0.0
    %2577 = vmatpush.msra.mxu0 0.0
    %2578 = vmatpush.msra.mxu0 0.0
    %2579 = vmatpush.msra.mxu0 0.0
    %2580 = vmatpush.msra.mxu0 %v2560
    %2581 = vmatmul.f32.gmra.mxu0 %v2563
    %v2582 = vpop.f32.mrf.mxu0
    %v2583 = vadd.f32 0.0, %v2582
    %2584 = vdwg.mxu0
    %2586 = vrot.lane.b32.xlu0 %v236, 112
    %v2587 = vpop.permute.xlu0 %2586
    %v2590 = vsel %vm961, %v2439, 0
    %2592 = vmatpush.msra.mxu0 0.0
    %2593 = vmatpush.msra.mxu0 0.0
    %2594 = vmatpush.msra.mxu0 0.0
    %2595 = vmatpush.msra.mxu0 0.0
    %2596 = vmatpush.msra.mxu0 0.0
    %2597 = vmatpush.msra.mxu0 0.0
    %2598 = vmatpush.msra.mxu0 0.0
    %2599 = vmatpush.msra.mxu0 0.0
    %2600 = vmatpush.msra.mxu0 0.0
    %2601 = vmatpush.msra.mxu0 0.0
    %2602 = vmatpush.msra.mxu0 0.0
    %2603 = vmatpush.msra.mxu0 0.0
    %2604 = vmatpush.msra.mxu0 0.0
    %2605 = vmatpush.msra.mxu0 0.0
    %2606 = vmatpush.msra.mxu0 0.0
    %2607 = vmatpush.msra.mxu0 %v2587
    %2608 = vmatmul.f32.gmra.mxu0 %v2590
    %v2609 = vpop.f32.mrf.mxu0
    %v2610 = vadd.f32 0.0, %v2609
    %2611 = vdwg.mxu0
    %2613 = vrot.lane.b32.xlu0 %v239, 112
    %v2614 = vpop.permute.xlu0 %2613
    %v2617 = vsel %vm961, %v2440, 0
    %2619 = vmatpush.msra.mxu0 0.0
    %2620 = vmatpush.msra.mxu0 0.0
    %2621 = vmatpush.msra.mxu0 0.0
    %2622 = vmatpush.msra.mxu0 0.0
    %2623 = vmatpush.msra.mxu0 0.0
    %2624 = vmatpush.msra.mxu0 0.0
    %2625 = vmatpush.msra.mxu0 0.0
    %2626 = vmatpush.msra.mxu0 0.0
    %2627 = vmatpush.msra.mxu0 0.0
    %2628 = vmatpush.msra.mxu0 0.0
    %2629 = vmatpush.msra.mxu0 0.0
    %2630 = vmatpush.msra.mxu0 0.0
    %2631 = vmatpush.msra.mxu0 0.0
    %2632 = vmatpush.msra.mxu0 0.0
    %2633 = vmatpush.msra.mxu0 0.0
    %2634 = vmatpush.msra.mxu0 %v2614
    %2635 = vmatmul.f32.gmra.mxu0 %v2617
    %v2636 = vpop.f32.mrf.mxu0
    %v2637 = vadd.f32 0.0, %v2636
    %2638 = vdwg.mxu0
    %2640 = vrot.lane.b32.xlu0 %v242, 112
    %v2641 = vpop.permute.xlu0 %2640
    %v2644 = vsel %vm961, %v2441, 0
    %2646 = vmatpush.msra.mxu0 0.0
    %2647 = vmatpush.msra.mxu0 0.0
    %2648 = vmatpush.msra.mxu0 0.0
    %2649 = vmatpush.msra.mxu0 0.0
    %2650 = vmatpush.msra.mxu0 0.0
    %2651 = vmatpush.msra.mxu0 0.0
    %2652 = vmatpush.msra.mxu0 0.0
    %2653 = vmatpush.msra.mxu0 0.0
    %2654 = vmatpush.msra.mxu0 0.0
    %2655 = vmatpush.msra.mxu0 0.0
    %2656 = vmatpush.msra.mxu0 0.0
    %2657 = vmatpush.msra.mxu0 0.0
    %2658 = vmatpush.msra.mxu0 0.0
    %2659 = vmatpush.msra.mxu0 0.0
    %2660 = vmatpush.msra.mxu0 0.0
    %2661 = vmatpush.msra.mxu0 %v2641
    %2662 = vmatmul.f32.gmra.mxu0 %v2644
    %v2663 = vpop.f32.mrf.mxu0
    %v2664 = vadd.f32 0.0, %v2663
    %2665 = vdwg.mxu0
    %2667 = vrot.lane.b32.xlu0 %v245, 112
    %v2668 = vpop.permute.xlu0 %2667
    %v2671 = vsel %vm961, %v2442, 0
    %2673 = vmatpush.msra.mxu0 0.0
    %2674 = vmatpush.msra.mxu0 0.0
    %2675 = vmatpush.msra.mxu0 0.0
    %2676 = vmatpush.msra.mxu0 0.0
    %2677 = vmatpush.msra.mxu0 0.0
    %2678 = vmatpush.msra.mxu0 0.0
    %2679 = vmatpush.msra.mxu0 0.0
    %2680 = vmatpush.msra.mxu0 0.0
    %2681 = vmatpush.msra.mxu0 0.0
    %2682 = vmatpush.msra.mxu0 0.0
    %2683 = vmatpush.msra.mxu0 0.0
    %2684 = vmatpush.msra.mxu0 0.0
    %2685 = vmatpush.msra.mxu0 0.0
    %2686 = vmatpush.msra.mxu0 0.0
    %2687 = vmatpush.msra.mxu0 0.0
    %2688 = vmatpush.msra.mxu0 %v2668
    %2689 = vmatmul.f32.gmra.mxu0 %v2671
    %v2690 = vpop.f32.mrf.mxu0
    %v2691 = vadd.f32 0.0, %v2690
    %2692 = vdwg.mxu0
    %2694 = vrot.lane.b32.xlu0 %v248, 112
    %v2695 = vpop.permute.xlu0 %2694
    %v2698 = vsel %vm961, %v2443, 0
    %2700 = vmatpush.msra.mxu0 0.0
    %2701 = vmatpush.msra.mxu0 0.0
    %2702 = vmatpush.msra.mxu0 0.0
    %2703 = vmatpush.msra.mxu0 0.0
    %2704 = vmatpush.msra.mxu0 0.0
    %2705 = vmatpush.msra.mxu0 0.0
    %2706 = vmatpush.msra.mxu0 0.0
    %2707 = vmatpush.msra.mxu0 0.0
    %2708 = vmatpush.msra.mxu0 0.0
    %2709 = vmatpush.msra.mxu0 0.0
    %2710 = vmatpush.msra.mxu0 0.0
    %2711 = vmatpush.msra.mxu0 0.0
    %2712 = vmatpush.msra.mxu0 0.0
    %2713 = vmatpush.msra.mxu0 0.0
    %2714 = vmatpush.msra.mxu0 0.0
    %2715 = vmatpush.msra.mxu0 %v2695
    %2716 = vmatmul.f32.gmra.mxu0 %v2698
    %v2717 = vpop.f32.mrf.mxu0
    %v2718 = vadd.f32 0.0, %v2717
    %2719 = vdwg.mxu0
    %2721 = vrot.lane.b32.xlu0 %v251, 112
    %v2722 = vpop.permute.xlu0 %2721
    %v2725 = vsel %vm961, %v2444, 0
    %2727 = vmatpush.msra.mxu0 0.0
    %2728 = vmatpush.msra.mxu0 0.0
    %2729 = vmatpush.msra.mxu0 0.0
    %2730 = vmatpush.msra.mxu0 0.0
    %2731 = vmatpush.msra.mxu0 0.0
    %2732 = vmatpush.msra.mxu0 0.0
    %2733 = vmatpush.msra.mxu0 0.0
    %2734 = vmatpush.msra.mxu0 0.0
    %2735 = vmatpush.msra.mxu0 0.0
    %2736 = vmatpush.msra.mxu0 0.0
    %2737 = vmatpush.msra.mxu0 0.0
    %2738 = vmatpush.msra.mxu0 0.0
    %2739 = vmatpush.msra.mxu0 0.0
    %2740 = vmatpush.msra.mxu0 0.0
    %2741 = vmatpush.msra.mxu0 0.0
    %2742 = vmatpush.msra.mxu0 %v2722
    %2743 = vmatmul.f32.gmra.mxu0 %v2725
    %v2744 = vpop.f32.mrf.mxu0
    %v2745 = vadd.f32 0.0, %v2744
    %2746 = vdwg.mxu0
    %2748 = vrot.lane.b32.xlu0 %v254, 112
    %v2749 = vpop.permute.xlu0 %2748
    %v2752 = vsel %vm961, %v2445, 0
    %2754 = vmatpush.msra.mxu0 0.0
    %2755 = vmatpush.msra.mxu0 0.0
    %2756 = vmatpush.msra.mxu0 0.0
    %2757 = vmatpush.msra.mxu0 0.0
    %2758 = vmatpush.msra.mxu0 0.0
    %2759 = vmatpush.msra.mxu0 0.0
    %2760 = vmatpush.msra.mxu0 0.0
    %2761 = vmatpush.msra.mxu0 0.0
    %2762 = vmatpush.msra.mxu0 0.0
    %2763 = vmatpush.msra.mxu0 0.0
    %2764 = vmatpush.msra.mxu0 0.0
    %2765 = vmatpush.msra.mxu0 0.0
    %2766 = vmatpush.msra.mxu0 0.0
    %2767 = vmatpush.msra.mxu0 0.0
    %2768 = vmatpush.msra.mxu0 0.0
    %2769 = vmatpush.msra.mxu0 %v2749
    %2770 = vmatmul.f32.gmra.mxu0 %v2752
    %v2771 = vpop.f32.mrf.mxu0
    %v2772 = vadd.f32 0.0, %v2771
    %2773 = vdwg.mxu0
    %2775 = vrot.lane.b32.xlu0 %v257, 112
    %v2776 = vpop.permute.xlu0 %2775
    %v2779 = vsel %vm961, %v2446, 0
    %2781 = vmatpush.msra.mxu0 0.0
    %2782 = vmatpush.msra.mxu0 0.0
    %2783 = vmatpush.msra.mxu0 0.0
    %2784 = vmatpush.msra.mxu0 0.0
    %2785 = vmatpush.msra.mxu0 0.0
    %2786 = vmatpush.msra.mxu0 0.0
    %2787 = vmatpush.msra.mxu0 0.0
    %2788 = vmatpush.msra.mxu0 0.0
    %2789 = vmatpush.msra.mxu0 0.0
    %2790 = vmatpush.msra.mxu0 0.0
    %2791 = vmatpush.msra.mxu0 0.0
    %2792 = vmatpush.msra.mxu0 0.0
    %2793 = vmatpush.msra.mxu0 0.0
    %2794 = vmatpush.msra.mxu0 0.0
    %2795 = vmatpush.msra.mxu0 0.0
    %2796 = vmatpush.msra.mxu0 %v2776
    %2797 = vmatmul.f32.gmra.mxu0 %v2779
    %v2798 = vpop.f32.mrf.mxu0
    %v2799 = vadd.f32 0.0, %v2798
    %2800 = vdwg.mxu0
    %2802 = vrot.lane.b32.xlu0 %v260, 112
    %v2803 = vpop.permute.xlu0 %2802
    %v2806 = vsel %vm961, %v2447, 0
    %2808 = vmatpush.msra.mxu0 0.0
    %2809 = vmatpush.msra.mxu0 0.0
    %2810 = vmatpush.msra.mxu0 0.0
    %2811 = vmatpush.msra.mxu0 0.0
    %2812 = vmatpush.msra.mxu0 0.0
    %2813 = vmatpush.msra.mxu0 0.0
    %2814 = vmatpush.msra.mxu0 0.0
    %2815 = vmatpush.msra.mxu0 0.0
    %2816 = vmatpush.msra.mxu0 0.0
    %2817 = vmatpush.msra.mxu0 0.0
    %2818 = vmatpush.msra.mxu0 0.0
    %2819 = vmatpush.msra.mxu0 0.0
    %2820 = vmatpush.msra.mxu0 0.0
    %2821 = vmatpush.msra.mxu0 0.0
    %2822 = vmatpush.msra.mxu0 0.0
    %2823 = vmatpush.msra.mxu0 %v2803
    %2824 = vmatmul.f32.gmra.mxu0 %v2806
    %v2825 = vpop.f32.mrf.mxu0
    %v2826 = vadd.f32 0.0, %v2825
    %2827 = vdwg.mxu0
    %2829 = vrot.lane.b32.xlu0 %v263, 112
    %v2830 = vpop.permute.xlu0 %2829
    %v2833 = vsel %vm961, %v2448, 0
    %2835 = vmatpush.msra.mxu0 0.0
    %2836 = vmatpush.msra.mxu0 0.0
    %2837 = vmatpush.msra.mxu0 0.0
    %2838 = vmatpush.msra.mxu0 0.0
    %2839 = vmatpush.msra.mxu0 0.0
    %2840 = vmatpush.msra.mxu0 0.0
    %2841 = vmatpush.msra.mxu0 0.0
    %2842 = vmatpush.msra.mxu0 0.0
    %2843 = vmatpush.msra.mxu0 0.0
    %2844 = vmatpush.msra.mxu0 0.0
    %2845 = vmatpush.msra.mxu0 0.0
    %2846 = vmatpush.msra.mxu0 0.0
    %2847 = vmatpush.msra.mxu0 0.0
    %2848 = vmatpush.msra.mxu0 0.0
    %2849 = vmatpush.msra.mxu0 0.0
    %2850 = vmatpush.msra.mxu0 %v2830
    %2851 = vmatmul.f32.gmra.mxu0 %v2833
    %v2852 = vpop.f32.mrf.mxu0
    %v2853 = vadd.f32 0.0, %v2852
    %2854 = vdwg.mxu0
    %2856 = vrot.lane.b32.xlu0 %v266, 112
    %v2857 = vpop.permute.xlu0 %2856
    %v2860 = vsel %vm961, %v2449, 0
    %2862 = vmatpush.msra.mxu0 0.0
    %2863 = vmatpush.msra.mxu0 0.0
    %2864 = vmatpush.msra.mxu0 0.0
    %2865 = vmatpush.msra.mxu0 0.0
    %2866 = vmatpush.msra.mxu0 0.0
    %2867 = vmatpush.msra.mxu0 0.0
    %2868 = vmatpush.msra.mxu0 0.0
    %2869 = vmatpush.msra.mxu0 0.0
    %2870 = vmatpush.msra.mxu0 0.0
    %2871 = vmatpush.msra.mxu0 0.0
    %2872 = vmatpush.msra.mxu0 0.0
    %2873 = vmatpush.msra.mxu0 0.0
    %2874 = vmatpush.msra.mxu0 0.0
    %2875 = vmatpush.msra.mxu0 0.0
    %2876 = vmatpush.msra.mxu0 0.0
    %2877 = vmatpush.msra.mxu0 %v2857
    %2878 = vmatmul.f32.gmra.mxu0 %v2860
    %v2879 = vpop.f32.mrf.mxu0
    %v2880 = vadd.f32 0.0, %v2879
    %2881 = vdwg.mxu0
    %2882 = vrot.lane.b32.xlu0 %v156, 96
    %v2883 = vpop.permute.xlu0 %2882
    %2884 = vrot.lane.b32.xlu0 %v156, 32
    %v2885 = vpop.permute.xlu0 %2884
    %v2886 = vsel %vm467, %v2883, 0
    %v2888 = vsel %vm467, %v2885, 0
    %2890 = vmatpush.xpose.msra.mxu0 0.0
    %2891 = vmatpush.xpose.msra.mxu0 0.0
    %2892 = vmatpush.xpose.msra.mxu0 0.0
    %2893 = vmatpush.xpose.msra.mxu0 0.0
    %2894 = vmatpush.xpose.msra.mxu0 0.0
    %2895 = vmatpush.xpose.msra.mxu0 0.0
    %2896 = vmatpush.xpose.msra.mxu0 0.0
    %2897 = vmatpush.xpose.msra.mxu0 0.0
    %2898 = vmatpush.xpose.msra.mxu0 0.0
    %2899 = vmatpush.xpose.msra.mxu0 0.0
    %2900 = vmatpush.xpose.msra.mxu0 0.0
    %2901 = vmatpush.xpose.msra.mxu0 0.0
    %2902 = vmatpush.xpose.msra.mxu0 0.0
    %2903 = vmatpush.xpose.msra.mxu0 0.0
    %2904 = vmatpush.xpose.msra.mxu0 0.0
    %2905 = vmatpush.xpose.msra.mxu0 %v2888
    %2906 = vmatmul.f32.gmra.mxu0 %v2886
    %v2907 = vpop.f32.mrf.mxu0
    %v2908 = vadd.f32 0.0, %v2907
    %2909 = vdwg.mxu0
    %2910 = vrot.lane.b32.xlu0 %v159, 96
    %v2911 = vpop.permute.xlu0 %2910
    %2912 = vrot.lane.b32.xlu0 %v159, 32
    %v2913 = vpop.permute.xlu0 %2912
    %v2914 = vsel %vm467, %v2911, 0
    %v2916 = vsel %vm467, %v2913, 0
    %2918 = vmatpush.xpose.msra.mxu0 0.0
    %2919 = vmatpush.xpose.msra.mxu0 0.0
    %2920 = vmatpush.xpose.msra.mxu0 0.0
    %2921 = vmatpush.xpose.msra.mxu0 0.0
    %2922 = vmatpush.xpose.msra.mxu0 0.0
    %2923 = vmatpush.xpose.msra.mxu0 0.0
    %2924 = vmatpush.xpose.msra.mxu0 0.0
    %2925 = vmatpush.xpose.msra.mxu0 0.0
    %2926 = vmatpush.xpose.msra.mxu0 0.0
    %2927 = vmatpush.xpose.msra.mxu0 0.0
    %2928 = vmatpush.xpose.msra.mxu0 0.0
    %2929 = vmatpush.xpose.msra.mxu0 0.0
    %2930 = vmatpush.xpose.msra.mxu0 0.0
    %2931 = vmatpush.xpose.msra.mxu0 0.0
    %2932 = vmatpush.xpose.msra.mxu0 0.0
    %2933 = vmatpush.xpose.msra.mxu0 %v2916
    %2934 = vmatmul.f32.gmra.mxu0 %v2914
    %v2935 = vpop.f32.mrf.mxu0
    %v2936 = vadd.f32 0.0, %v2935
    %2937 = vdwg.mxu0
    %2938 = vrot.lane.b32.xlu0 %v162, 96
    %v2939 = vpop.permute.xlu0 %2938
    %2940 = vrot.lane.b32.xlu0 %v162, 32
    %v2941 = vpop.permute.xlu0 %2940
    %v2942 = vsel %vm467, %v2939, 0
    %v2944 = vsel %vm467, %v2941, 0
    %2946 = vmatpush.xpose.msra.mxu0 0.0
    %2947 = vmatpush.xpose.msra.mxu0 0.0
    %2948 = vmatpush.xpose.msra.mxu0 0.0
    %2949 = vmatpush.xpose.msra.mxu0 0.0
    %2950 = vmatpush.xpose.msra.mxu0 0.0
    %2951 = vmatpush.xpose.msra.mxu0 0.0
    %2952 = vmatpush.xpose.msra.mxu0 0.0
    %2953 = vmatpush.xpose.msra.mxu0 0.0
    %2954 = vmatpush.xpose.msra.mxu0 0.0
    %2955 = vmatpush.xpose.msra.mxu0 0.0
    %2956 = vmatpush.xpose.msra.mxu0 0.0
    %2957 = vmatpush.xpose.msra.mxu0 0.0
    %2958 = vmatpush.xpose.msra.mxu0 0.0
    %2959 = vmatpush.xpose.msra.mxu0 0.0
    %2960 = vmatpush.xpose.msra.mxu0 0.0
    %2961 = vmatpush.xpose.msra.mxu0 %v2944
    %2962 = vmatmul.f32.gmra.mxu0 %v2942
    %v2963 = vpop.f32.mrf.mxu0
    %v2964 = vadd.f32 0.0, %v2963
    %2965 = vdwg.mxu0
    %2966 = vrot.lane.b32.xlu0 %v165, 96
    %v2967 = vpop.permute.xlu0 %2966
    %2968 = vrot.lane.b32.xlu0 %v165, 32
    %v2969 = vpop.permute.xlu0 %2968
    %v2970 = vsel %vm467, %v2967, 0
    %v2972 = vsel %vm467, %v2969, 0
    %2974 = vmatpush.xpose.msra.mxu0 0.0
    %2975 = vmatpush.xpose.msra.mxu0 0.0
    %2976 = vmatpush.xpose.msra.mxu0 0.0
    %2977 = vmatpush.xpose.msra.mxu0 0.0
    %2978 = vmatpush.xpose.msra.mxu0 0.0
    %2979 = vmatpush.xpose.msra.mxu0 0.0
    %2980 = vmatpush.xpose.msra.mxu0 0.0
    %2981 = vmatpush.xpose.msra.mxu0 0.0
    %2982 = vmatpush.xpose.msra.mxu0 0.0
    %2983 = vmatpush.xpose.msra.mxu0 0.0
    %2984 = vmatpush.xpose.msra.mxu0 0.0
    %2985 = vmatpush.xpose.msra.mxu0 0.0
    %2986 = vmatpush.xpose.msra.mxu0 0.0
    %2987 = vmatpush.xpose.msra.mxu0 0.0
    %2988 = vmatpush.xpose.msra.mxu0 0.0
    %2989 = vmatpush.xpose.msra.mxu0 %v2972
    %2990 = vmatmul.f32.gmra.mxu0 %v2970
    %v2991 = vpop.f32.mrf.mxu0
    %v2992 = vadd.f32 0.0, %v2991
    %2993 = vdwg.mxu0
    %2994 = vrot.lane.b32.xlu0 %v168, 96
    %v2995 = vpop.permute.xlu0 %2994
    %2996 = vrot.lane.b32.xlu0 %v168, 32
    %v2997 = vpop.permute.xlu0 %2996
    %v2998 = vsel %vm467, %v2995, 0
    %v3000 = vsel %vm467, %v2997, 0
    %3002 = vmatpush.xpose.msra.mxu0 0.0
    %3003 = vmatpush.xpose.msra.mxu0 0.0
    %3004 = vmatpush.xpose.msra.mxu0 0.0
    %3005 = vmatpush.xpose.msra.mxu0 0.0
    %3006 = vmatpush.xpose.msra.mxu0 0.0
    %3007 = vmatpush.xpose.msra.mxu0 0.0
    %3008 = vmatpush.xpose.msra.mxu0 0.0
    %3009 = vmatpush.xpose.msra.mxu0 0.0
    %3010 = vmatpush.xpose.msra.mxu0 0.0
    %3011 = vmatpush.xpose.msra.mxu0 0.0
    %3012 = vmatpush.xpose.msra.mxu0 0.0
    %3013 = vmatpush.xpose.msra.mxu0 0.0
    %3014 = vmatpush.xpose.msra.mxu0 0.0
    %3015 = vmatpush.xpose.msra.mxu0 0.0
    %3016 = vmatpush.xpose.msra.mxu0 0.0
    %3017 = vmatpush.xpose.msra.mxu0 %v3000
    %3018 = vmatmul.f32.gmra.mxu0 %v2998
    %v3019 = vpop.f32.mrf.mxu0
    %v3020 = vadd.f32 0.0, %v3019
    %3021 = vdwg.mxu0
    %3022 = vrot.lane.b32.xlu0 %v171, 96
    %v3023 = vpop.permute.xlu0 %3022
    %3024 = vrot.lane.b32.xlu0 %v171, 32
    %v3025 = vpop.permute.xlu0 %3024
    %v3026 = vsel %vm467, %v3023, 0
    %v3028 = vsel %vm467, %v3025, 0
    %3030 = vmatpush.xpose.msra.mxu0 0.0
    %3031 = vmatpush.xpose.msra.mxu0 0.0
    %3032 = vmatpush.xpose.msra.mxu0 0.0
    %3033 = vmatpush.xpose.msra.mxu0 0.0
    %3034 = vmatpush.xpose.msra.mxu0 0.0
    %3035 = vmatpush.xpose.msra.mxu0 0.0
    %3036 = vmatpush.xpose.msra.mxu0 0.0
    %3037 = vmatpush.xpose.msra.mxu0 0.0
    %3038 = vmatpush.xpose.msra.mxu0 0.0
    %3039 = vmatpush.xpose.msra.mxu0 0.0
    %3040 = vmatpush.xpose.msra.mxu0 0.0
    %3041 = vmatpush.xpose.msra.mxu0 0.0
    %3042 = vmatpush.xpose.msra.mxu0 0.0
    %3043 = vmatpush.xpose.msra.mxu0 0.0
    %3044 = vmatpush.xpose.msra.mxu0 0.0
    %3045 = vmatpush.xpose.msra.mxu0 %v3028
    %3046 = vmatmul.f32.gmra.mxu0 %v3026
    %v3047 = vpop.f32.mrf.mxu0
    %v3048 = vadd.f32 0.0, %v3047
    %3049 = vdwg.mxu0
    %3050 = vrot.lane.b32.xlu0 %v174, 96
    %v3051 = vpop.permute.xlu0 %3050
    %3052 = vrot.lane.b32.xlu0 %v174, 32
    %v3053 = vpop.permute.xlu0 %3052
    %v3054 = vsel %vm467, %v3051, 0
    %v3056 = vsel %vm467, %v3053, 0
    %3058 = vmatpush.xpose.msra.mxu0 0.0
    %3059 = vmatpush.xpose.msra.mxu0 0.0
    %3060 = vmatpush.xpose.msra.mxu0 0.0
    %3061 = vmatpush.xpose.msra.mxu0 0.0
    %3062 = vmatpush.xpose.msra.mxu0 0.0
    %3063 = vmatpush.xpose.msra.mxu0 0.0
    %3064 = vmatpush.xpose.msra.mxu0 0.0
    %3065 = vmatpush.xpose.msra.mxu0 0.0
    %3066 = vmatpush.xpose.msra.mxu0 0.0
    %3067 = vmatpush.xpose.msra.mxu0 0.0
    %3068 = vmatpush.xpose.msra.mxu0 0.0
    %3069 = vmatpush.xpose.msra.mxu0 0.0
    %3070 = vmatpush.xpose.msra.mxu0 0.0
    %3071 = vmatpush.xpose.msra.mxu0 0.0
    %3072 = vmatpush.xpose.msra.mxu0 0.0
    %3073 = vmatpush.xpose.msra.mxu0 %v3056
    %3074 = vmatmul.f32.gmra.mxu0 %v3054
    %v3075 = vpop.f32.mrf.mxu0
    %v3076 = vadd.f32 0.0, %v3075
    %3077 = vdwg.mxu0
    %3078 = vrot.lane.b32.xlu0 %v177, 96
    %v3079 = vpop.permute.xlu0 %3078
    %3080 = vrot.lane.b32.xlu0 %v177, 32
    %v3081 = vpop.permute.xlu0 %3080
    %v3082 = vsel %vm467, %v3079, 0
    %v3084 = vsel %vm467, %v3081, 0
    %3086 = vmatpush.xpose.msra.mxu0 0.0
    %3087 = vmatpush.xpose.msra.mxu0 0.0
    %3088 = vmatpush.xpose.msra.mxu0 0.0
    %3089 = vmatpush.xpose.msra.mxu0 0.0
    %3090 = vmatpush.xpose.msra.mxu0 0.0
    %3091 = vmatpush.xpose.msra.mxu0 0.0
    %3092 = vmatpush.xpose.msra.mxu0 0.0
    %3093 = vmatpush.xpose.msra.mxu0 0.0
    %3094 = vmatpush.xpose.msra.mxu0 0.0
    %3095 = vmatpush.xpose.msra.mxu0 0.0
    %3096 = vmatpush.xpose.msra.mxu0 0.0
    %3097 = vmatpush.xpose.msra.mxu0 0.0
    %3098 = vmatpush.xpose.msra.mxu0 0.0
    %3099 = vmatpush.xpose.msra.mxu0 0.0
    %3100 = vmatpush.xpose.msra.mxu0 0.0
    %3101 = vmatpush.xpose.msra.mxu0 %v3084
    %3102 = vmatmul.f32.gmra.mxu0 %v3082
    %v3103 = vpop.f32.mrf.mxu0
    %v3104 = vadd.f32 0.0, %v3103
    %3105 = vdwg.mxu0
    %3106 = vrot.lane.b32.xlu0 %v180, 96
    %v3107 = vpop.permute.xlu0 %3106
    %3108 = vrot.lane.b32.xlu0 %v180, 32
    %v3109 = vpop.permute.xlu0 %3108
    %v3110 = vsel %vm467, %v3107, 0
    %v3112 = vsel %vm467, %v3109, 0
    %3114 = vmatpush.xpose.msra.mxu0 0.0
    %3115 = vmatpush.xpose.msra.mxu0 0.0
    %3116 = vmatpush.xpose.msra.mxu0 0.0
    %3117 = vmatpush.xpose.msra.mxu0 0.0
    %3118 = vmatpush.xpose.msra.mxu0 0.0
    %3119 = vmatpush.xpose.msra.mxu0 0.0
    %3120 = vmatpush.xpose.msra.mxu0 0.0
    %3121 = vmatpush.xpose.msra.mxu0 0.0
    %3122 = vmatpush.xpose.msra.mxu0 0.0
    %3123 = vmatpush.xpose.msra.mxu0 0.0
    %3124 = vmatpush.xpose.msra.mxu0 0.0
    %3125 = vmatpush.xpose.msra.mxu0 0.0
    %3126 = vmatpush.xpose.msra.mxu0 0.0
    %3127 = vmatpush.xpose.msra.mxu0 0.0
    %3128 = vmatpush.xpose.msra.mxu0 0.0
    %3129 = vmatpush.xpose.msra.mxu0 %v3112
    %3130 = vmatmul.f32.gmra.mxu0 %v3110
    %v3131 = vpop.f32.mrf.mxu0
    %v3132 = vadd.f32 0.0, %v3131
    %3133 = vdwg.mxu0
    %3134 = vrot.lane.b32.xlu0 %v183, 96
    %v3135 = vpop.permute.xlu0 %3134
    %3136 = vrot.lane.b32.xlu0 %v183, 32
    %v3137 = vpop.permute.xlu0 %3136
    %v3138 = vsel %vm467, %v3135, 0
    %v3140 = vsel %vm467, %v3137, 0
    %3142 = vmatpush.xpose.msra.mxu0 0.0
    %3143 = vmatpush.xpose.msra.mxu0 0.0
    %3144 = vmatpush.xpose.msra.mxu0 0.0
    %3145 = vmatpush.xpose.msra.mxu0 0.0
    %3146 = vmatpush.xpose.msra.mxu0 0.0
    %3147 = vmatpush.xpose.msra.mxu0 0.0
    %3148 = vmatpush.xpose.msra.mxu0 0.0
    %3149 = vmatpush.xpose.msra.mxu0 0.0
    %3150 = vmatpush.xpose.msra.mxu0 0.0
    %3151 = vmatpush.xpose.msra.mxu0 0.0
    %3152 = vmatpush.xpose.msra.mxu0 0.0
    %3153 = vmatpush.xpose.msra.mxu0 0.0
    %3154 = vmatpush.xpose.msra.mxu0 0.0
    %3155 = vmatpush.xpose.msra.mxu0 0.0
    %3156 = vmatpush.xpose.msra.mxu0 0.0
    %3157 = vmatpush.xpose.msra.mxu0 %v3140
    %3158 = vmatmul.f32.gmra.mxu0 %v3138
    %v3159 = vpop.f32.mrf.mxu0
    %v3160 = vadd.f32 0.0, %v3159
    %3161 = vdwg.mxu0
    %3162 = vrot.lane.b32.xlu0 %v186, 96
    %v3163 = vpop.permute.xlu0 %3162
    %3164 = vrot.lane.b32.xlu0 %v186, 32
    %v3165 = vpop.permute.xlu0 %3164
    %v3166 = vsel %vm467, %v3163, 0
    %v3168 = vsel %vm467, %v3165, 0
    %3170 = vmatpush.xpose.msra.mxu0 0.0
    %3171 = vmatpush.xpose.msra.mxu0 0.0
    %3172 = vmatpush.xpose.msra.mxu0 0.0
    %3173 = vmatpush.xpose.msra.mxu0 0.0
    %3174 = vmatpush.xpose.msra.mxu0 0.0
    %3175 = vmatpush.xpose.msra.mxu0 0.0
    %3176 = vmatpush.xpose.msra.mxu0 0.0
    %3177 = vmatpush.xpose.msra.mxu0 0.0
    %3178 = vmatpush.xpose.msra.mxu0 0.0
    %3179 = vmatpush.xpose.msra.mxu0 0.0
    %3180 = vmatpush.xpose.msra.mxu0 0.0
    %3181 = vmatpush.xpose.msra.mxu0 0.0
    %3182 = vmatpush.xpose.msra.mxu0 0.0
    %3183 = vmatpush.xpose.msra.mxu0 0.0
    %3184 = vmatpush.xpose.msra.mxu0 0.0
    %3185 = vmatpush.xpose.msra.mxu0 %v3168
    %3186 = vmatmul.f32.gmra.mxu0 %v3166
    %v3187 = vpop.f32.mrf.mxu0
    %v3188 = vadd.f32 0.0, %v3187
    %3189 = vdwg.mxu0
    %3190 = vrot.lane.b32.xlu0 %v189, 96
    %v3191 = vpop.permute.xlu0 %3190
    %3192 = vrot.lane.b32.xlu0 %v189, 32
    %v3193 = vpop.permute.xlu0 %3192
    %v3194 = vsel %vm467, %v3191, 0
    %v3196 = vsel %vm467, %v3193, 0
    %3198 = vmatpush.xpose.msra.mxu0 0.0
    %3199 = vmatpush.xpose.msra.mxu0 0.0
    %3200 = vmatpush.xpose.msra.mxu0 0.0
    %3201 = vmatpush.xpose.msra.mxu0 0.0
    %3202 = vmatpush.xpose.msra.mxu0 0.0
    %3203 = vmatpush.xpose.msra.mxu0 0.0
    %3204 = vmatpush.xpose.msra.mxu0 0.0
    %3205 = vmatpush.xpose.msra.mxu0 0.0
    %3206 = vmatpush.xpose.msra.mxu0 0.0
    %3207 = vmatpush.xpose.msra.mxu0 0.0
    %3208 = vmatpush.xpose.msra.mxu0 0.0
    %3209 = vmatpush.xpose.msra.mxu0 0.0
    %3210 = vmatpush.xpose.msra.mxu0 0.0
    %3211 = vmatpush.xpose.msra.mxu0 0.0
    %3212 = vmatpush.xpose.msra.mxu0 0.0
    %3213 = vmatpush.xpose.msra.mxu0 %v3196
    %3214 = vmatmul.f32.gmra.mxu0 %v3194
    %v3215 = vpop.f32.mrf.mxu0
    %v3216 = vadd.f32 0.0, %v3215
    %3217 = vdwg.mxu0
    %3218 = vrot.lane.b32.xlu0 %v192, 96
    %v3219 = vpop.permute.xlu0 %3218
    %3220 = vrot.lane.b32.xlu0 %v192, 32
    %v3221 = vpop.permute.xlu0 %3220
    %v3222 = vsel %vm467, %v3219, 0
    %v3224 = vsel %vm467, %v3221, 0
    %3226 = vmatpush.xpose.msra.mxu0 0.0
    %3227 = vmatpush.xpose.msra.mxu0 0.0
    %3228 = vmatpush.xpose.msra.mxu0 0.0
    %3229 = vmatpush.xpose.msra.mxu0 0.0
    %3230 = vmatpush.xpose.msra.mxu0 0.0
    %3231 = vmatpush.xpose.msra.mxu0 0.0
    %3232 = vmatpush.xpose.msra.mxu0 0.0
    %3233 = vmatpush.xpose.msra.mxu0 0.0
    %3234 = vmatpush.xpose.msra.mxu0 0.0
    %3235 = vmatpush.xpose.msra.mxu0 0.0
    %3236 = vmatpush.xpose.msra.mxu0 0.0
    %3237 = vmatpush.xpose.msra.mxu0 0.0
    %3238 = vmatpush.xpose.msra.mxu0 0.0
    %3239 = vmatpush.xpose.msra.mxu0 0.0
    %3240 = vmatpush.xpose.msra.mxu0 0.0
    %3241 = vmatpush.xpose.msra.mxu0 %v3224
    %3242 = vmatmul.f32.gmra.mxu0 %v3222
    %v3243 = vpop.f32.mrf.mxu0
    %v3244 = vadd.f32 0.0, %v3243
    %3245 = vdwg.mxu0
    %3246 = vrot.lane.b32.xlu0 %v195, 96
    %v3247 = vpop.permute.xlu0 %3246
    %3248 = vrot.lane.b32.xlu0 %v195, 32
    %v3249 = vpop.permute.xlu0 %3248
    %v3250 = vsel %vm467, %v3247, 0
    %v3252 = vsel %vm467, %v3249, 0
    %3254 = vmatpush.xpose.msra.mxu0 0.0
    %3255 = vmatpush.xpose.msra.mxu0 0.0
    %3256 = vmatpush.xpose.msra.mxu0 0.0
    %3257 = vmatpush.xpose.msra.mxu0 0.0
    %3258 = vmatpush.xpose.msra.mxu0 0.0
    %3259 = vmatpush.xpose.msra.mxu0 0.0
    %3260 = vmatpush.xpose.msra.mxu0 0.0
    %3261 = vmatpush.xpose.msra.mxu0 0.0
    %3262 = vmatpush.xpose.msra.mxu0 0.0
    %3263 = vmatpush.xpose.msra.mxu0 0.0
    %3264 = vmatpush.xpose.msra.mxu0 0.0
    %3265 = vmatpush.xpose.msra.mxu0 0.0
    %3266 = vmatpush.xpose.msra.mxu0 0.0
    %3267 = vmatpush.xpose.msra.mxu0 0.0
    %3268 = vmatpush.xpose.msra.mxu0 0.0
    %3269 = vmatpush.xpose.msra.mxu0 %v3252
    %3270 = vmatmul.f32.gmra.mxu0 %v3250
    %v3271 = vpop.f32.mrf.mxu0
    %v3272 = vadd.f32 0.0, %v3271
    %3273 = vdwg.mxu0
    %3274 = vrot.lane.b32.xlu0 %v198, 96
    %v3275 = vpop.permute.xlu0 %3274
    %3276 = vrot.lane.b32.xlu0 %v198, 32
    %v3277 = vpop.permute.xlu0 %3276
    %v3278 = vsel %vm467, %v3275, 0
    %v3280 = vsel %vm467, %v3277, 0
    %3282 = vmatpush.xpose.msra.mxu0 0.0
    %3283 = vmatpush.xpose.msra.mxu0 0.0
    %3284 = vmatpush.xpose.msra.mxu0 0.0
    %3285 = vmatpush.xpose.msra.mxu0 0.0
    %3286 = vmatpush.xpose.msra.mxu0 0.0
    %3287 = vmatpush.xpose.msra.mxu0 0.0
    %3288 = vmatpush.xpose.msra.mxu0 0.0
    %3289 = vmatpush.xpose.msra.mxu0 0.0
    %3290 = vmatpush.xpose.msra.mxu0 0.0
    %3291 = vmatpush.xpose.msra.mxu0 0.0
    %3292 = vmatpush.xpose.msra.mxu0 0.0
    %3293 = vmatpush.xpose.msra.mxu0 0.0
    %3294 = vmatpush.xpose.msra.mxu0 0.0
    %3295 = vmatpush.xpose.msra.mxu0 0.0
    %3296 = vmatpush.xpose.msra.mxu0 0.0
    %3297 = vmatpush.xpose.msra.mxu0 %v3280
    %3298 = vmatmul.f32.gmra.mxu0 %v3278
    %v3299 = vpop.f32.mrf.mxu0
    %v3300 = vadd.f32 0.0, %v3299
    %3301 = vdwg.mxu0
    %3302 = vrot.lane.b32.xlu0 %v201, 96
    %v3303 = vpop.permute.xlu0 %3302
    %3304 = vrot.lane.b32.xlu0 %v201, 32
    %v3305 = vpop.permute.xlu0 %3304
    %v3306 = vsel %vm467, %v3303, 0
    %v3308 = vsel %vm467, %v3305, 0
    %3310 = vmatpush.xpose.msra.mxu0 0.0
    %3311 = vmatpush.xpose.msra.mxu0 0.0
    %3312 = vmatpush.xpose.msra.mxu0 0.0
    %3313 = vmatpush.xpose.msra.mxu0 0.0
    %3314 = vmatpush.xpose.msra.mxu0 0.0
    %3315 = vmatpush.xpose.msra.mxu0 0.0
    %3316 = vmatpush.xpose.msra.mxu0 0.0
    %3317 = vmatpush.xpose.msra.mxu0 0.0
    %3318 = vmatpush.xpose.msra.mxu0 0.0
    %3319 = vmatpush.xpose.msra.mxu0 0.0
    %3320 = vmatpush.xpose.msra.mxu0 0.0
    %3321 = vmatpush.xpose.msra.mxu0 0.0
    %3322 = vmatpush.xpose.msra.mxu0 0.0
    %3323 = vmatpush.xpose.msra.mxu0 0.0
    %3324 = vmatpush.xpose.msra.mxu0 0.0
    %3325 = vmatpush.xpose.msra.mxu0 %v3308
    %3326 = vmatmul.f32.gmra.mxu0 %v3306
    %v3327 = vpop.f32.mrf.mxu0
    %v3328 = vadd.f32 0.0, %v3327
    %3329 = vdwg.mxu0
    %v3330 = vmul.f32 %v2908, 0.25
    %v3331 = vmul.f32 %v2936, 0.25
    %v3332 = vmul.f32 %v2964, 0.25
    %v3333 = vmul.f32 %v2992, 0.25
    %v3334 = vmul.f32 %v3020, 0.25
    %v3335 = vmul.f32 %v3048, 0.25
    %v3336 = vmul.f32 %v3076, 0.25
    %v3337 = vmul.f32 %v3104, 0.25
    %v3338 = vmul.f32 %v3132, 0.25
    %v3339 = vmul.f32 %v3160, 0.25
    %v3340 = vmul.f32 %v3188, 0.25
    %v3341 = vmul.f32 %v3216, 0.25
    %v3342 = vmul.f32 %v3244, 0.25
    %v3343 = vmul.f32 %v3272, 0.25
    %v3344 = vmul.f32 %v3300, 0.25
    %v3345 = vmul.f32 %v3328, 0.25
    %v3346 = vmul.f32 %v3330, 1.442695
    %v3347 = vpow.pop %v3346
    %v3348 = vmul.f32 %v3331, 1.442695
    %v3349 = vpow.pop %v3348
    %v3350 = vmul.f32 %v3332, 1.442695
    %v3351 = vpow.pop %v3350
    %v3352 = vmul.f32 %v3333, 1.442695
    %v3353 = vpow.pop %v3352
    %v3354 = vmul.f32 %v3334, 1.442695
    %v3355 = vpow.pop %v3354
    %v3356 = vmul.f32 %v3335, 1.442695
    %v3357 = vpow.pop %v3356
    %v3358 = vmul.f32 %v3336, 1.442695
    %v3359 = vpow.pop %v3358
    %v3360 = vmul.f32 %v3337, 1.442695
    %v3361 = vpow.pop %v3360
    %v3362 = vmul.f32 %v3338, 1.442695
    %v3363 = vpow.pop %v3362
    %v3364 = vmul.f32 %v3339, 1.442695
    %v3365 = vpow.pop %v3364
    %v3366 = vmul.f32 %v3340, 1.442695
    %v3367 = vpow.pop %v3366
    %v3368 = vmul.f32 %v3341, 1.442695
    %v3369 = vpow.pop %v3368
    %v3370 = vmul.f32 %v3342, 1.442695
    %v3371 = vpow.pop %v3370
    %v3372 = vmul.f32 %v3343, 1.442695
    %v3373 = vpow.pop %v3372
    %v3374 = vmul.f32 %v3344, 1.442695
    %v3375 = vpow.pop %v3374
    %v3376 = vmul.f32 %v3345, 1.442695
    %v3377 = vpow.pop %v3376
    %v3378 = vmul.f32 %v3347, %v382
    %v3379 = vmul.f32 %v3349, %v383
    %v3380 = vmul.f32 %v3351, %v384
    %v3381 = vmul.f32 %v3353, %v385
    %v3382 = vmul.f32 %v3355, %v386
    %v3383 = vmul.f32 %v3357, %v387
    %v3384 = vmul.f32 %v3359, %v388
    %v3385 = vmul.f32 %v3361, %v389
    %v3386 = vmul.f32 %v3363, %v390
    %v3387 = vmul.f32 %v3365, %v391
    %v3388 = vmul.f32 %v3367, %v392
    %v3389 = vmul.f32 %v3369, %v393
    %v3390 = vmul.f32 %v3371, %v394
    %v3391 = vmul.f32 %v3373, %v395
    %v3392 = vmul.f32 %v3375, %v396
    %v3393 = vmul.f32 %v3377, %v397
    %v3394 = vsel %vm961, %v3378, 0.0
    %3395 = vadd.xlane.f32.xlu0 %v3394
    %v3396 = vpop.xlane.xlu0 %3395
    %v3397 = vsel %vm961, %v3379, 0.0
    %3398 = vadd.xlane.f32.xlu0 %v3397
    %v3399 = vpop.xlane.xlu0 %3398
    %v3400 = vsel %vm961, %v3380, 0.0
    %3401 = vadd.xlane.f32.xlu0 %v3400
    %v3402 = vpop.xlane.xlu0 %3401
    %v3403 = vsel %vm961, %v3381, 0.0
    %3404 = vadd.xlane.f32.xlu0 %v3403
    %v3405 = vpop.xlane.xlu0 %3404
    %v3406 = vsel %vm961, %v3382, 0.0
    %3407 = vadd.xlane.f32.xlu0 %v3406
    %v3408 = vpop.xlane.xlu0 %3407
    %v3409 = vsel %vm961, %v3383, 0.0
    %3410 = vadd.xlane.f32.xlu0 %v3409
    %v3411 = vpop.xlane.xlu0 %3410
    %v3412 = vsel %vm961, %v3384, 0.0
    %3413 = vadd.xlane.f32.xlu0 %v3412
    %v3414 = vpop.xlane.xlu0 %3413
    %v3415 = vsel %vm961, %v3385, 0.0
    %3416 = vadd.xlane.f32.xlu0 %v3415
    %v3417 = vpop.xlane.xlu0 %3416
    %v3418 = vsel %vm961, %v3386, 0.0
    %3419 = vadd.xlane.f32.xlu0 %v3418
    %v3420 = vpop.xlane.xlu0 %3419
    %v3421 = vsel %vm961, %v3387, 0.0
    %3422 = vadd.xlane.f32.xlu0 %v3421
    %v3423 = vpop.xlane.xlu0 %3422
    %v3424 = vsel %vm961, %v3388, 0.0
    %3425 = vadd.xlane.f32.xlu0 %v3424
    %v3426 = vpop.xlane.xlu0 %3425
    %v3427 = vsel %vm961, %v3389, 0.0
    %3428 = vadd.xlane.f32.xlu0 %v3427
    %v3429 = vpop.xlane.xlu0 %3428
    %v3430 = vsel %vm961, %v3390, 0.0
    %3431 = vadd.xlane.f32.xlu0 %v3430
    %v3432 = vpop.xlane.xlu0 %3431
    %v3433 = vsel %vm961, %v3391, 0.0
    %3434 = vadd.xlane.f32.xlu0 %v3433
    %v3435 = vpop.xlane.xlu0 %3434
    %v3436 = vsel %vm961, %v3392, 0.0
    %3437 = vadd.xlane.f32.xlu0 %v3436
    %v3438 = vpop.xlane.xlu0 %3437
    %v3439 = vsel %vm961, %v3393, 0.0
    %3440 = vadd.xlane.f32.xlu0 %v3439
    %v3441 = vpop.xlane.xlu0 %3440
    %v3442 = vadd.f32 %v3396, 1e-08
    %v3443 = vadd.f32 %v3399, 1e-08
    %v3444 = vadd.f32 %v3402, 1e-08
    %v3445 = vadd.f32 %v3405, 1e-08
    %v3446 = vadd.f32 %v3408, 1e-08
    %v3447 = vadd.f32 %v3411, 1e-08
    %v3448 = vadd.f32 %v3414, 1e-08
    %v3449 = vadd.f32 %v3417, 1e-08
    %v3450 = vadd.f32 %v3420, 1e-08
    %v3451 = vadd.f32 %v3423, 1e-08
    %v3452 = vadd.f32 %v3426, 1e-08
    %v3453 = vadd.f32 %v3429, 1e-08
    %v3454 = vadd.f32 %v3432, 1e-08
    %v3455 = vadd.f32 %v3435, 1e-08
    %v3456 = vadd.f32 %v3438, 1e-08
    %v3457 = vadd.f32 %v3441, 1e-08
    %v3458 = vrcp.pop %v3442
    %v3459 = vmul.f32 %v3442, %v3458
    %v3460 = vsub.f32 1.0, %v3459
    %v3461 = vmul.f32 %v3458, %v3460
    %v3462 = vadd.f32 %v3458, %v3461
    %vm3463 = vweird.f32 %v3442
    %vm3464 = vweird.f32 %v3458
    %vm3465 = vmor %vm3463, %vm3464
    %v3466 = vsel %vm3465, %v3458, %v3462
    %v3467 = vand.u32 2147483647, %v3442
    %vm3468 = vcmp.eq.f32.partialorder %v3467, 8.507059e+37
    %v3469 = vand.u32 %v3442, 2147483648
    %v3470 = vor.u32 1.1754944e-38, %v3469
    %v3471 = vsel %vm3468, %v3470, %v3466
    %v3472 = vrcp.pop %v3443
    %v3473 = vmul.f32 %v3443, %v3472
    %v3474 = vsub.f32 1.0, %v3473
    %v3475 = vmul.f32 %v3472, %v3474
    %v3476 = vadd.f32 %v3472, %v3475
    %vm3477 = vweird.f32 %v3443
    %vm3478 = vweird.f32 %v3472
    %vm3479 = vmor %vm3477, %vm3478
    %v3480 = vsel %vm3479, %v3472, %v3476
    %v3481 = vand.u32 2147483647, %v3443
    %vm3482 = vcmp.eq.f32.partialorder %v3481, 8.507059e+37
    %v3483 = vand.u32 %v3443, 2147483648
    %v3484 = vor.u32 1.1754944e-38, %v3483
    %v3485 = vsel %vm3482, %v3484, %v3480
    %v3486 = vrcp.pop %v3444
    %v3487 = vmul.f32 %v3444, %v3486
    %v3488 = vsub.f32 1.0, %v3487
    %v3489 = vmul.f32 %v3486, %v3488
    %v3490 = vadd.f32 %v3486, %v3489
    %vm3491 = vweird.f32 %v3444
    %vm3492 = vweird.f32 %v3486
    %vm3493 = vmor %vm3491, %vm3492
    %v3494 = vsel %vm3493, %v3486, %v3490
    %v3495 = vand.u32 2147483647, %v3444
    %vm3496 = vcmp.eq.f32.partialorder %v3495, 8.507059e+37
    %v3497 = vand.u32 %v3444, 2147483648
    %v3498 = vor.u32 1.1754944e-38, %v3497
    %v3499 = vsel %vm3496, %v3498, %v3494
    %v3500 = vrcp.pop %v3445
    %v3501 = vmul.f32 %v3445, %v3500
    %v3502 = vsub.f32 1.0, %v3501
    %v3503 = vmul.f32 %v3500, %v3502
    %v3504 = vadd.f32 %v3500, %v3503
    %vm3505 = vweird.f32 %v3445
    %vm3506 = vweird.f32 %v3500
    %vm3507 = vmor %vm3505, %vm3506
    %v3508 = vsel %vm3507, %v3500, %v3504
    %v3509 = vand.u32 2147483647, %v3445
    %vm3510 = vcmp.eq.f32.partialorder %v3509, 8.507059e+37
    %v3511 = vand.u32 %v3445, 2147483648
    %v3512 = vor.u32 1.1754944e-38, %v3511
    %v3513 = vsel %vm3510, %v3512, %v3508
    %v3514 = vrcp.pop %v3446
    %v3515 = vmul.f32 %v3446, %v3514
    %v3516 = vsub.f32 1.0, %v3515
    %v3517 = vmul.f32 %v3514, %v3516
    %v3518 = vadd.f32 %v3514, %v3517
    %vm3519 = vweird.f32 %v3446
    %vm3520 = vweird.f32 %v3514
    %vm3521 = vmor %vm3519, %vm3520
    %v3522 = vsel %vm3521, %v3514, %v3518
    %v3523 = vand.u32 2147483647, %v3446
    %vm3524 = vcmp.eq.f32.partialorder %v3523, 8.507059e+37
    %v3525 = vand.u32 %v3446, 2147483648
    %v3526 = vor.u32 1.1754944e-38, %v3525
    %v3527 = vsel %vm3524, %v3526, %v3522
    %v3528 = vrcp.pop %v3447
    %v3529 = vmul.f32 %v3447, %v3528
    %v3530 = vsub.f32 1.0, %v3529
    %v3531 = vmul.f32 %v3528, %v3530
    %v3532 = vadd.f32 %v3528, %v3531
    %vm3533 = vweird.f32 %v3447
    %vm3534 = vweird.f32 %v3528
    %vm3535 = vmor %vm3533, %vm3534
    %v3536 = vsel %vm3535, %v3528, %v3532
    %v3537 = vand.u32 2147483647, %v3447
    %vm3538 = vcmp.eq.f32.partialorder %v3537, 8.507059e+37
    %v3539 = vand.u32 %v3447, 2147483648
    %v3540 = vor.u32 1.1754944e-38, %v3539
    %v3541 = vsel %vm3538, %v3540, %v3536
    %v3542 = vrcp.pop %v3448
    %v3543 = vmul.f32 %v3448, %v3542
    %v3544 = vsub.f32 1.0, %v3543
    %v3545 = vmul.f32 %v3542, %v3544
    %v3546 = vadd.f32 %v3542, %v3545
    %vm3547 = vweird.f32 %v3448
    %vm3548 = vweird.f32 %v3542
    %vm3549 = vmor %vm3547, %vm3548
    %v3550 = vsel %vm3549, %v3542, %v3546
    %v3551 = vand.u32 2147483647, %v3448
    %vm3552 = vcmp.eq.f32.partialorder %v3551, 8.507059e+37
    %v3553 = vand.u32 %v3448, 2147483648
    %v3554 = vor.u32 1.1754944e-38, %v3553
    %v3555 = vsel %vm3552, %v3554, %v3550
    %v3556 = vrcp.pop %v3449
    %v3557 = vmul.f32 %v3449, %v3556
    %v3558 = vsub.f32 1.0, %v3557
    %v3559 = vmul.f32 %v3556, %v3558
    %v3560 = vadd.f32 %v3556, %v3559
    %vm3561 = vweird.f32 %v3449
    %vm3562 = vweird.f32 %v3556
    %vm3563 = vmor %vm3561, %vm3562
    %v3564 = vsel %vm3563, %v3556, %v3560
    %v3565 = vand.u32 2147483647, %v3449
    %vm3566 = vcmp.eq.f32.partialorder %v3565, 8.507059e+37
    %v3567 = vand.u32 %v3449, 2147483648
    %v3568 = vor.u32 1.1754944e-38, %v3567
    %v3569 = vsel %vm3566, %v3568, %v3564
    %v3570 = vrcp.pop %v3450
    %v3571 = vmul.f32 %v3450, %v3570
    %v3572 = vsub.f32 1.0, %v3571
    %v3573 = vmul.f32 %v3570, %v3572
    %v3574 = vadd.f32 %v3570, %v3573
    %vm3575 = vweird.f32 %v3450
    %vm3576 = vweird.f32 %v3570
    %vm3577 = vmor %vm3575, %vm3576
    %v3578 = vsel %vm3577, %v3570, %v3574
    %v3579 = vand.u32 2147483647, %v3450
    %vm3580 = vcmp.eq.f32.partialorder %v3579, 8.507059e+37
    %v3581 = vand.u32 %v3450, 2147483648
    %v3582 = vor.u32 1.1754944e-38, %v3581
    %v3583 = vsel %vm3580, %v3582, %v3578
    %v3584 = vrcp.pop %v3451
    %v3585 = vmul.f32 %v3451, %v3584
    %v3586 = vsub.f32 1.0, %v3585
    %v3587 = vmul.f32 %v3584, %v3586
    %v3588 = vadd.f32 %v3584, %v3587
    %vm3589 = vweird.f32 %v3451
    %vm3590 = vweird.f32 %v3584
    %vm3591 = vmor %vm3589, %vm3590
    %v3592 = vsel %vm3591, %v3584, %v3588
    %v3593 = vand.u32 2147483647, %v3451
    %vm3594 = vcmp.eq.f32.partialorder %v3593, 8.507059e+37
    %v3595 = vand.u32 %v3451, 2147483648
    %v3596 = vor.u32 1.1754944e-38, %v3595
    %v3597 = vsel %vm3594, %v3596, %v3592
    %v3598 = vrcp.pop %v3452
    %v3599 = vmul.f32 %v3452, %v3598
    %v3600 = vsub.f32 1.0, %v3599
    %v3601 = vmul.f32 %v3598, %v3600
    %v3602 = vadd.f32 %v3598, %v3601
    %vm3603 = vweird.f32 %v3452
    %vm3604 = vweird.f32 %v3598
    %vm3605 = vmor %vm3603, %vm3604
    %v3606 = vsel %vm3605, %v3598, %v3602
    %v3607 = vand.u32 2147483647, %v3452
    %vm3608 = vcmp.eq.f32.partialorder %v3607, 8.507059e+37
    %v3609 = vand.u32 %v3452, 2147483648
    %v3610 = vor.u32 1.1754944e-38, %v3609
    %v3611 = vsel %vm3608, %v3610, %v3606
    %v3612 = vrcp.pop %v3453
    %v3613 = vmul.f32 %v3453, %v3612
    %v3614 = vsub.f32 1.0, %v3613
    %v3615 = vmul.f32 %v3612, %v3614
    %v3616 = vadd.f32 %v3612, %v3615
    %vm3617 = vweird.f32 %v3453
    %vm3618 = vweird.f32 %v3612
    %vm3619 = vmor %vm3617, %vm3618
    %v3620 = vsel %vm3619, %v3612, %v3616
    %v3621 = vand.u32 2147483647, %v3453
    %vm3622 = vcmp.eq.f32.partialorder %v3621, 8.507059e+37
    %v3623 = vand.u32 %v3453, 2147483648
    %v3624 = vor.u32 1.1754944e-38, %v3623
    %v3625 = vsel %vm3622, %v3624, %v3620
    %v3626 = vrcp.pop %v3454
    %v3627 = vmul.f32 %v3454, %v3626
    %v3628 = vsub.f32 1.0, %v3627
    %v3629 = vmul.f32 %v3626, %v3628
    %v3630 = vadd.f32 %v3626, %v3629
    %vm3631 = vweird.f32 %v3454
    %vm3632 = vweird.f32 %v3626
    %vm3633 = vmor %vm3631, %vm3632
    %v3634 = vsel %vm3633, %v3626, %v3630
    %v3635 = vand.u32 2147483647, %v3454
    %vm3636 = vcmp.eq.f32.partialorder %v3635, 8.507059e+37
    %v3637 = vand.u32 %v3454, 2147483648
    %v3638 = vor.u32 1.1754944e-38, %v3637
    %v3639 = vsel %vm3636, %v3638, %v3634
    %v3640 = vrcp.pop %v3455
    %v3641 = vmul.f32 %v3455, %v3640
    %v3642 = vsub.f32 1.0, %v3641
    %v3643 = vmul.f32 %v3640, %v3642
    %v3644 = vadd.f32 %v3640, %v3643
    %vm3645 = vweird.f32 %v3455
    %vm3646 = vweird.f32 %v3640
    %vm3647 = vmor %vm3645, %vm3646
    %v3648 = vsel %vm3647, %v3640, %v3644
    %v3649 = vand.u32 2147483647, %v3455
    %vm3650 = vcmp.eq.f32.partialorder %v3649, 8.507059e+37
    %v3651 = vand.u32 %v3455, 2147483648
    %v3652 = vor.u32 1.1754944e-38, %v3651
    %v3653 = vsel %vm3650, %v3652, %v3648
    %v3654 = vrcp.pop %v3456
    %v3655 = vmul.f32 %v3456, %v3654
    %v3656 = vsub.f32 1.0, %v3655
    %v3657 = vmul.f32 %v3654, %v3656
    %v3658 = vadd.f32 %v3654, %v3657
    %vm3659 = vweird.f32 %v3456
    %vm3660 = vweird.f32 %v3654
    %vm3661 = vmor %vm3659, %vm3660
    %v3662 = vsel %vm3661, %v3654, %v3658
    %v3663 = vand.u32 2147483647, %v3456
    %vm3664 = vcmp.eq.f32.partialorder %v3663, 8.507059e+37
    %v3665 = vand.u32 %v3456, 2147483648
    %v3666 = vor.u32 1.1754944e-38, %v3665
    %v3667 = vsel %vm3664, %v3666, %v3662
    %v3668 = vrcp.pop %v3457
    %v3669 = vmul.f32 %v3457, %v3668
    %v3670 = vsub.f32 1.0, %v3669
    %v3671 = vmul.f32 %v3668, %v3670
    %v3672 = vadd.f32 %v3668, %v3671
    %vm3673 = vweird.f32 %v3457
    %vm3674 = vweird.f32 %v3668
    %vm3675 = vmor %vm3673, %vm3674
    %v3676 = vsel %vm3675, %v3668, %v3672
    %v3677 = vand.u32 2147483647, %v3457
    %vm3678 = vcmp.eq.f32.partialorder %v3677, 8.507059e+37
    %v3679 = vand.u32 %v3457, 2147483648
    %v3680 = vor.u32 1.1754944e-38, %v3679
    %v3681 = vsel %vm3678, %v3680, %v3676
    %v3682 = vmul.f32 %v3378, %v3471
    %v3683 = vmul.f32 %v3379, %v3485
    %v3684 = vmul.f32 %v3380, %v3499
    %v3685 = vmul.f32 %v3381, %v3513
    %v3686 = vmul.f32 %v3382, %v3527
    %v3687 = vmul.f32 %v3383, %v3541
    %v3688 = vmul.f32 %v3384, %v3555
    %v3689 = vmul.f32 %v3385, %v3569
    %v3690 = vmul.f32 %v3386, %v3583
    %v3691 = vmul.f32 %v3387, %v3597
    %v3692 = vmul.f32 %v3388, %v3611
    %v3693 = vmul.f32 %v3389, %v3625
    %v3694 = vmul.f32 %v3390, %v3639
    %v3695 = vmul.f32 %v3391, %v3653
    %v3696 = vmul.f32 %v3392, %v3667
    %v3697 = vmul.f32 %v3393, %v3681
    %3698 = vrot.lane.b32.xlu0 %v221, 96
    %v3699 = vpop.permute.xlu0 %3698
    %v3702 = vsel %vm961, %v3682, 0
    %3704 = vmatpush.msra.mxu0 0.0
    %3705 = vmatpush.msra.mxu0 0.0
    %3706 = vmatpush.msra.mxu0 0.0
    %3707 = vmatpush.msra.mxu0 0.0
    %3708 = vmatpush.msra.mxu0 0.0
    %3709 = vmatpush.msra.mxu0 0.0
    %3710 = vmatpush.msra.mxu0 0.0
    %3711 = vmatpush.msra.mxu0 0.0
    %3712 = vmatpush.msra.mxu0 0.0
    %3713 = vmatpush.msra.mxu0 0.0
    %3714 = vmatpush.msra.mxu0 0.0
    %3715 = vmatpush.msra.mxu0 0.0
    %3716 = vmatpush.msra.mxu0 0.0
    %3717 = vmatpush.msra.mxu0 0.0
    %3718 = vmatpush.msra.mxu0 0.0
    %3719 = vmatpush.msra.mxu0 %v3699
    %3720 = vmatmul.f32.gmra.mxu0 %v3702
    %v3721 = vpop.f32.mrf.mxu0
    %v3722 = vadd.f32 0.0, %v3721
    %3723 = vdwg.mxu0
    %3724 = vrot.lane.b32.xlu0 %v224, 96
    %v3725 = vpop.permute.xlu0 %3724
    %v3728 = vsel %vm961, %v3683, 0
    %3730 = vmatpush.msra.mxu0 0.0
    %3731 = vmatpush.msra.mxu0 0.0
    %3732 = vmatpush.msra.mxu0 0.0
    %3733 = vmatpush.msra.mxu0 0.0
    %3734 = vmatpush.msra.mxu0 0.0
    %3735 = vmatpush.msra.mxu0 0.0
    %3736 = vmatpush.msra.mxu0 0.0
    %3737 = vmatpush.msra.mxu0 0.0
    %3738 = vmatpush.msra.mxu0 0.0
    %3739 = vmatpush.msra.mxu0 0.0
    %3740 = vmatpush.msra.mxu0 0.0
    %3741 = vmatpush.msra.mxu0 0.0
    %3742 = vmatpush.msra.mxu0 0.0
    %3743 = vmatpush.msra.mxu0 0.0
    %3744 = vmatpush.msra.mxu0 0.0
    %3745 = vmatpush.msra.mxu0 %v3725
    %3746 = vmatmul.f32.gmra.mxu0 %v3728
    %v3747 = vpop.f32.mrf.mxu0
    %v3748 = vadd.f32 0.0, %v3747
    %3749 = vdwg.mxu0
    %3750 = vrot.lane.b32.xlu0 %v227, 96
    %v3751 = vpop.permute.xlu0 %3750
    %v3754 = vsel %vm961, %v3684, 0
    %3756 = vmatpush.msra.mxu0 0.0
    %3757 = vmatpush.msra.mxu0 0.0
    %3758 = vmatpush.msra.mxu0 0.0
    %3759 = vmatpush.msra.mxu0 0.0
    %3760 = vmatpush.msra.mxu0 0.0
    %3761 = vmatpush.msra.mxu0 0.0
    %3762 = vmatpush.msra.mxu0 0.0
    %3763 = vmatpush.msra.mxu0 0.0
    %3764 = vmatpush.msra.mxu0 0.0
    %3765 = vmatpush.msra.mxu0 0.0
    %3766 = vmatpush.msra.mxu0 0.0
    %3767 = vmatpush.msra.mxu0 0.0
    %3768 = vmatpush.msra.mxu0 0.0
    %3769 = vmatpush.msra.mxu0 0.0
    %3770 = vmatpush.msra.mxu0 0.0
    %3771 = vmatpush.msra.mxu0 %v3751
    %3772 = vmatmul.f32.gmra.mxu0 %v3754
    %v3773 = vpop.f32.mrf.mxu0
    %v3774 = vadd.f32 0.0, %v3773
    %3775 = vdwg.mxu0
    %3776 = vrot.lane.b32.xlu0 %v230, 96
    %v3777 = vpop.permute.xlu0 %3776
    %v3780 = vsel %vm961, %v3685, 0
    %3782 = vmatpush.msra.mxu0 0.0
    %3783 = vmatpush.msra.mxu0 0.0
    %3784 = vmatpush.msra.mxu0 0.0
    %3785 = vmatpush.msra.mxu0 0.0
    %3786 = vmatpush.msra.mxu0 0.0
    %3787 = vmatpush.msra.mxu0 0.0
    %3788 = vmatpush.msra.mxu0 0.0
    %3789 = vmatpush.msra.mxu0 0.0
    %3790 = vmatpush.msra.mxu0 0.0
    %3791 = vmatpush.msra.mxu0 0.0
    %3792 = vmatpush.msra.mxu0 0.0
    %3793 = vmatpush.msra.mxu0 0.0
    %3794 = vmatpush.msra.mxu0 0.0
    %3795 = vmatpush.msra.mxu0 0.0
    %3796 = vmatpush.msra.mxu0 0.0
    %3797 = vmatpush.msra.mxu0 %v3777
    %3798 = vmatmul.f32.gmra.mxu0 %v3780
    %v3799 = vpop.f32.mrf.mxu0
    %v3800 = vadd.f32 0.0, %v3799
    %3801 = vdwg.mxu0
    %3802 = vrot.lane.b32.xlu0 %v233, 96
    %v3803 = vpop.permute.xlu0 %3802
    %v3806 = vsel %vm961, %v3686, 0
    %3808 = vmatpush.msra.mxu0 0.0
    %3809 = vmatpush.msra.mxu0 0.0
    %3810 = vmatpush.msra.mxu0 0.0
    %3811 = vmatpush.msra.mxu0 0.0
    %3812 = vmatpush.msra.mxu0 0.0
    %3813 = vmatpush.msra.mxu0 0.0
    %3814 = vmatpush.msra.mxu0 0.0
    %3815 = vmatpush.msra.mxu0 0.0
    %3816 = vmatpush.msra.mxu0 0.0
    %3817 = vmatpush.msra.mxu0 0.0
    %3818 = vmatpush.msra.mxu0 0.0
    %3819 = vmatpush.msra.mxu0 0.0
    %3820 = vmatpush.msra.mxu0 0.0
    %3821 = vmatpush.msra.mxu0 0.0
    %3822 = vmatpush.msra.mxu0 0.0
    %3823 = vmatpush.msra.mxu0 %v3803
    %3824 = vmatmul.f32.gmra.mxu0 %v3806
    %v3825 = vpop.f32.mrf.mxu0
    %v3826 = vadd.f32 0.0, %v3825
    %3827 = vdwg.mxu0
    %3828 = vrot.lane.b32.xlu0 %v236, 96
    %v3829 = vpop.permute.xlu0 %3828
    %v3832 = vsel %vm961, %v3687, 0
    %3834 = vmatpush.msra.mxu0 0.0
    %3835 = vmatpush.msra.mxu0 0.0
    %3836 = vmatpush.msra.mxu0 0.0
    %3837 = vmatpush.msra.mxu0 0.0
    %3838 = vmatpush.msra.mxu0 0.0
    %3839 = vmatpush.msra.mxu0 0.0
    %3840 = vmatpush.msra.mxu0 0.0
    %3841 = vmatpush.msra.mxu0 0.0
    %3842 = vmatpush.msra.mxu0 0.0
    %3843 = vmatpush.msra.mxu0 0.0
    %3844 = vmatpush.msra.mxu0 0.0
    %3845 = vmatpush.msra.mxu0 0.0
    %3846 = vmatpush.msra.mxu0 0.0
    %3847 = vmatpush.msra.mxu0 0.0
    %3848 = vmatpush.msra.mxu0 0.0
    %3849 = vmatpush.msra.mxu0 %v3829
    %3850 = vmatmul.f32.gmra.mxu0 %v3832
    %v3851 = vpop.f32.mrf.mxu0
    %v3852 = vadd.f32 0.0, %v3851
    %3853 = vdwg.mxu0
    %3854 = vrot.lane.b32.xlu0 %v239, 96
    %v3855 = vpop.permute.xlu0 %3854
    %v3858 = vsel %vm961, %v3688, 0
    %3860 = vmatpush.msra.mxu0 0.0
    %3861 = vmatpush.msra.mxu0 0.0
    %3862 = vmatpush.msra.mxu0 0.0
    %3863 = vmatpush.msra.mxu0 0.0
    %3864 = vmatpush.msra.mxu0 0.0
    %3865 = vmatpush.msra.mxu0 0.0
    %3866 = vmatpush.msra.mxu0 0.0
    %3867 = vmatpush.msra.mxu0 0.0
    %3868 = vmatpush.msra.mxu0 0.0
    %3869 = vmatpush.msra.mxu0 0.0
    %3870 = vmatpush.msra.mxu0 0.0
    %3871 = vmatpush.msra.mxu0 0.0
    %3872 = vmatpush.msra.mxu0 0.0
    %3873 = vmatpush.msra.mxu0 0.0
    %3874 = vmatpush.msra.mxu0 0.0
    %3875 = vmatpush.msra.mxu0 %v3855
    %3876 = vmatmul.f32.gmra.mxu0 %v3858
    %v3877 = vpop.f32.mrf.mxu0
    %v3878 = vadd.f32 0.0, %v3877
    %3879 = vdwg.mxu0
    %3880 = vrot.lane.b32.xlu0 %v242, 96
    %v3881 = vpop.permute.xlu0 %3880
    %v3884 = vsel %vm961, %v3689, 0
    %3886 = vmatpush.msra.mxu0 0.0
    %3887 = vmatpush.msra.mxu0 0.0
    %3888 = vmatpush.msra.mxu0 0.0
    %3889 = vmatpush.msra.mxu0 0.0
    %3890 = vmatpush.msra.mxu0 0.0
    %3891 = vmatpush.msra.mxu0 0.0
    %3892 = vmatpush.msra.mxu0 0.0
    %3893 = vmatpush.msra.mxu0 0.0
    %3894 = vmatpush.msra.mxu0 0.0
    %3895 = vmatpush.msra.mxu0 0.0
    %3896 = vmatpush.msra.mxu0 0.0
    %3897 = vmatpush.msra.mxu0 0.0
    %3898 = vmatpush.msra.mxu0 0.0
    %3899 = vmatpush.msra.mxu0 0.0
    %3900 = vmatpush.msra.mxu0 0.0
    %3901 = vmatpush.msra.mxu0 %v3881
    %3902 = vmatmul.f32.gmra.mxu0 %v3884
    %v3903 = vpop.f32.mrf.mxu0
    %v3904 = vadd.f32 0.0, %v3903
    %3905 = vdwg.mxu0
    %3906 = vrot.lane.b32.xlu0 %v245, 96
    %v3907 = vpop.permute.xlu0 %3906
    %v3910 = vsel %vm961, %v3690, 0
    %3912 = vmatpush.msra.mxu0 0.0
    %3913 = vmatpush.msra.mxu0 0.0
    %3914 = vmatpush.msra.mxu0 0.0
    %3915 = vmatpush.msra.mxu0 0.0
    %3916 = vmatpush.msra.mxu0 0.0
    %3917 = vmatpush.msra.mxu0 0.0
    %3918 = vmatpush.msra.mxu0 0.0
    %3919 = vmatpush.msra.mxu0 0.0
    %3920 = vmatpush.msra.mxu0 0.0
    %3921 = vmatpush.msra.mxu0 0.0
    %3922 = vmatpush.msra.mxu0 0.0
    %3923 = vmatpush.msra.mxu0 0.0
    %3924 = vmatpush.msra.mxu0 0.0
    %3925 = vmatpush.msra.mxu0 0.0
    %3926 = vmatpush.msra.mxu0 0.0
    %3927 = vmatpush.msra.mxu0 %v3907
    %3928 = vmatmul.f32.gmra.mxu0 %v3910
    %v3929 = vpop.f32.mrf.mxu0
    %v3930 = vadd.f32 0.0, %v3929
    %3931 = vdwg.mxu0
    %3932 = vrot.lane.b32.xlu0 %v248, 96
    %v3933 = vpop.permute.xlu0 %3932
    %v3936 = vsel %vm961, %v3691, 0
    %3938 = vmatpush.msra.mxu0 0.0
    %3939 = vmatpush.msra.mxu0 0.0
    %3940 = vmatpush.msra.mxu0 0.0
    %3941 = vmatpush.msra.mxu0 0.0
    %3942 = vmatpush.msra.mxu0 0.0
    %3943 = vmatpush.msra.mxu0 0.0
    %3944 = vmatpush.msra.mxu0 0.0
    %3945 = vmatpush.msra.mxu0 0.0
    %3946 = vmatpush.msra.mxu0 0.0
    %3947 = vmatpush.msra.mxu0 0.0
    %3948 = vmatpush.msra.mxu0 0.0
    %3949 = vmatpush.msra.mxu0 0.0
    %3950 = vmatpush.msra.mxu0 0.0
    %3951 = vmatpush.msra.mxu0 0.0
    %3952 = vmatpush.msra.mxu0 0.0
    %3953 = vmatpush.msra.mxu0 %v3933
    %3954 = vmatmul.f32.gmra.mxu0 %v3936
    %v3955 = vpop.f32.mrf.mxu0
    %v3956 = vadd.f32 0.0, %v3955
    %3957 = vdwg.mxu0
    %3958 = vrot.lane.b32.xlu0 %v251, 96
    %v3959 = vpop.permute.xlu0 %3958
    %v3962 = vsel %vm961, %v3692, 0
    %3964 = vmatpush.msra.mxu0 0.0
    %3965 = vmatpush.msra.mxu0 0.0
    %3966 = vmatpush.msra.mxu0 0.0
    %3967 = vmatpush.msra.mxu0 0.0
    %3968 = vmatpush.msra.mxu0 0.0
    %3969 = vmatpush.msra.mxu0 0.0
    %3970 = vmatpush.msra.mxu0 0.0
    %3971 = vmatpush.msra.mxu0 0.0
    %3972 = vmatpush.msra.mxu0 0.0
    %3973 = vmatpush.msra.mxu0 0.0
    %3974 = vmatpush.msra.mxu0 0.0
    %3975 = vmatpush.msra.mxu0 0.0
    %3976 = vmatpush.msra.mxu0 0.0
    %3977 = vmatpush.msra.mxu0 0.0
    %3978 = vmatpush.msra.mxu0 0.0
    %3979 = vmatpush.msra.mxu0 %v3959
    %3980 = vmatmul.f32.gmra.mxu0 %v3962
    %v3981 = vpop.f32.mrf.mxu0
    %v3982 = vadd.f32 0.0, %v3981
    %3983 = vdwg.mxu0
    %3984 = vrot.lane.b32.xlu0 %v254, 96
    %v3985 = vpop.permute.xlu0 %3984
    %v3988 = vsel %vm961, %v3693, 0
    %3990 = vmatpush.msra.mxu0 0.0
    %3991 = vmatpush.msra.mxu0 0.0
    %3992 = vmatpush.msra.mxu0 0.0
    %3993 = vmatpush.msra.mxu0 0.0
    %3994 = vmatpush.msra.mxu0 0.0
    %3995 = vmatpush.msra.mxu0 0.0
    %3996 = vmatpush.msra.mxu0 0.0
    %3997 = vmatpush.msra.mxu0 0.0
    %3998 = vmatpush.msra.mxu0 0.0
    %3999 = vmatpush.msra.mxu0 0.0
    %4000 = vmatpush.msra.mxu0 0.0
    %4001 = vmatpush.msra.mxu0 0.0
    %4002 = vmatpush.msra.mxu0 0.0
    %4003 = vmatpush.msra.mxu0 0.0
    %4004 = vmatpush.msra.mxu0 0.0
    %4005 = vmatpush.msra.mxu0 %v3985
    %4006 = vmatmul.f32.gmra.mxu0 %v3988
    %v4007 = vpop.f32.mrf.mxu0
    %v4008 = vadd.f32 0.0, %v4007
    %4009 = vdwg.mxu0
    %4010 = vrot.lane.b32.xlu0 %v257, 96
    %v4011 = vpop.permute.xlu0 %4010
    %v4014 = vsel %vm961, %v3694, 0
    %4016 = vmatpush.msra.mxu0 0.0
    %4017 = vmatpush.msra.mxu0 0.0
    %4018 = vmatpush.msra.mxu0 0.0
    %4019 = vmatpush.msra.mxu0 0.0
    %4020 = vmatpush.msra.mxu0 0.0
    %4021 = vmatpush.msra.mxu0 0.0
    %4022 = vmatpush.msra.mxu0 0.0
    %4023 = vmatpush.msra.mxu0 0.0
    %4024 = vmatpush.msra.mxu0 0.0
    %4025 = vmatpush.msra.mxu0 0.0
    %4026 = vmatpush.msra.mxu0 0.0
    %4027 = vmatpush.msra.mxu0 0.0
    %4028 = vmatpush.msra.mxu0 0.0
    %4029 = vmatpush.msra.mxu0 0.0
    %4030 = vmatpush.msra.mxu0 0.0
    %4031 = vmatpush.msra.mxu0 %v4011
    %4032 = vmatmul.f32.gmra.mxu0 %v4014
    %v4033 = vpop.f32.mrf.mxu0
    %v4034 = vadd.f32 0.0, %v4033
    %4035 = vdwg.mxu0
    %4036 = vrot.lane.b32.xlu0 %v260, 96
    %v4037 = vpop.permute.xlu0 %4036
    %v4040 = vsel %vm961, %v3695, 0
    %4042 = vmatpush.msra.mxu0 0.0
    %4043 = vmatpush.msra.mxu0 0.0
    %4044 = vmatpush.msra.mxu0 0.0
    %4045 = vmatpush.msra.mxu0 0.0
    %4046 = vmatpush.msra.mxu0 0.0
    %4047 = vmatpush.msra.mxu0 0.0
    %4048 = vmatpush.msra.mxu0 0.0
    %4049 = vmatpush.msra.mxu0 0.0
    %4050 = vmatpush.msra.mxu0 0.0
    %4051 = vmatpush.msra.mxu0 0.0
    %4052 = vmatpush.msra.mxu0 0.0
    %4053 = vmatpush.msra.mxu0 0.0
    %4054 = vmatpush.msra.mxu0 0.0
    %4055 = vmatpush.msra.mxu0 0.0
    %4056 = vmatpush.msra.mxu0 0.0
    %4057 = vmatpush.msra.mxu0 %v4037
    %4058 = vmatmul.f32.gmra.mxu0 %v4040
    %v4059 = vpop.f32.mrf.mxu0
    %v4060 = vadd.f32 0.0, %v4059
    %4061 = vdwg.mxu0
    %4062 = vrot.lane.b32.xlu0 %v263, 96
    %v4063 = vpop.permute.xlu0 %4062
    %v4066 = vsel %vm961, %v3696, 0
    %4068 = vmatpush.msra.mxu0 0.0
    %4069 = vmatpush.msra.mxu0 0.0
    %4070 = vmatpush.msra.mxu0 0.0
    %4071 = vmatpush.msra.mxu0 0.0
    %4072 = vmatpush.msra.mxu0 0.0
    %4073 = vmatpush.msra.mxu0 0.0
    %4074 = vmatpush.msra.mxu0 0.0
    %4075 = vmatpush.msra.mxu0 0.0
    %4076 = vmatpush.msra.mxu0 0.0
    %4077 = vmatpush.msra.mxu0 0.0
    %4078 = vmatpush.msra.mxu0 0.0
    %4079 = vmatpush.msra.mxu0 0.0
    %4080 = vmatpush.msra.mxu0 0.0
    %4081 = vmatpush.msra.mxu0 0.0
    %4082 = vmatpush.msra.mxu0 0.0
    %4083 = vmatpush.msra.mxu0 %v4063
    %4084 = vmatmul.f32.gmra.mxu0 %v4066
    %v4085 = vpop.f32.mrf.mxu0
    %v4086 = vadd.f32 0.0, %v4085
    %4087 = vdwg.mxu0
    %4088 = vrot.lane.b32.xlu0 %v266, 96
    %v4089 = vpop.permute.xlu0 %4088
    %v4092 = vsel %vm961, %v3697, 0
    %4094 = vmatpush.msra.mxu0 0.0
    %4095 = vmatpush.msra.mxu0 0.0
    %4096 = vmatpush.msra.mxu0 0.0
    %4097 = vmatpush.msra.mxu0 0.0
    %4098 = vmatpush.msra.mxu0 0.0
    %4099 = vmatpush.msra.mxu0 0.0
    %4100 = vmatpush.msra.mxu0 0.0
    %4101 = vmatpush.msra.mxu0 0.0
    %4102 = vmatpush.msra.mxu0 0.0
    %4103 = vmatpush.msra.mxu0 0.0
    %4104 = vmatpush.msra.mxu0 0.0
    %4105 = vmatpush.msra.mxu0 0.0
    %4106 = vmatpush.msra.mxu0 0.0
    %4107 = vmatpush.msra.mxu0 0.0
    %4108 = vmatpush.msra.mxu0 0.0
    %4109 = vmatpush.msra.mxu0 %v4089
    %4110 = vmatmul.f32.gmra.mxu0 %v4092
    %v4111 = vpop.f32.mrf.mxu0
    %v4112 = vadd.f32 0.0, %v4111
    %4113 = vdwg.mxu0
    %4114 = vrot.lane.b32.xlu0 %v156, 80
    %v4115 = vpop.permute.xlu0 %4114
    %4116 = vrot.lane.b32.xlu0 %v156, 16
    %v4117 = vpop.permute.xlu0 %4116
    %v4118 = vsel %vm467, %v4115, 0
    %v4120 = vsel %vm467, %v4117, 0
    %4122 = vmatpush.xpose.msra.mxu0 0.0
    %4123 = vmatpush.xpose.msra.mxu0 0.0
    %4124 = vmatpush.xpose.msra.mxu0 0.0
    %4125 = vmatpush.xpose.msra.mxu0 0.0
    %4126 = vmatpush.xpose.msra.mxu0 0.0
    %4127 = vmatpush.xpose.msra.mxu0 0.0
    %4128 = vmatpush.xpose.msra.mxu0 0.0
    %4129 = vmatpush.xpose.msra.mxu0 0.0
    %4130 = vmatpush.xpose.msra.mxu0 0.0
    %4131 = vmatpush.xpose.msra.mxu0 0.0
    %4132 = vmatpush.xpose.msra.mxu0 0.0
    %4133 = vmatpush.xpose.msra.mxu0 0.0
    %4134 = vmatpush.xpose.msra.mxu0 0.0
    %4135 = vmatpush.xpose.msra.mxu0 0.0
    %4136 = vmatpush.xpose.msra.mxu0 0.0
    %4137 = vmatpush.xpose.msra.mxu0 %v4120
    %4138 = vmatmul.f32.gmra.mxu0 %v4118
    %v4139 = vpop.f32.mrf.mxu0
    %v4140 = vadd.f32 0.0, %v4139
    %4141 = vdwg.mxu0
    %4142 = vrot.lane.b32.xlu0 %v159, 80
    %v4143 = vpop.permute.xlu0 %4142
    %4144 = vrot.lane.b32.xlu0 %v159, 16
    %v4145 = vpop.permute.xlu0 %4144
    %v4146 = vsel %vm467, %v4143, 0
    %v4148 = vsel %vm467, %v4145, 0
    %4150 = vmatpush.xpose.msra.mxu0 0.0
    %4151 = vmatpush.xpose.msra.mxu0 0.0
    %4152 = vmatpush.xpose.msra.mxu0 0.0
    %4153 = vmatpush.xpose.msra.mxu0 0.0
    %4154 = vmatpush.xpose.msra.mxu0 0.0
    %4155 = vmatpush.xpose.msra.mxu0 0.0
    %4156 = vmatpush.xpose.msra.mxu0 0.0
    %4157 = vmatpush.xpose.msra.mxu0 0.0
    %4158 = vmatpush.xpose.msra.mxu0 0.0
    %4159 = vmatpush.xpose.msra.mxu0 0.0
    %4160 = vmatpush.xpose.msra.mxu0 0.0
    %4161 = vmatpush.xpose.msra.mxu0 0.0
    %4162 = vmatpush.xpose.msra.mxu0 0.0
    %4163 = vmatpush.xpose.msra.mxu0 0.0
    %4164 = vmatpush.xpose.msra.mxu0 0.0
    %4165 = vmatpush.xpose.msra.mxu0 %v4148
    %4166 = vmatmul.f32.gmra.mxu0 %v4146
    %v4167 = vpop.f32.mrf.mxu0
    %v4168 = vadd.f32 0.0, %v4167
    %4169 = vdwg.mxu0
    %4170 = vrot.lane.b32.xlu0 %v162, 80
    %v4171 = vpop.permute.xlu0 %4170
    %4172 = vrot.lane.b32.xlu0 %v162, 16
    %v4173 = vpop.permute.xlu0 %4172
    %v4174 = vsel %vm467, %v4171, 0
    %v4176 = vsel %vm467, %v4173, 0
    %4178 = vmatpush.xpose.msra.mxu0 0.0
    %4179 = vmatpush.xpose.msra.mxu0 0.0
    %4180 = vmatpush.xpose.msra.mxu0 0.0
    %4181 = vmatpush.xpose.msra.mxu0 0.0
    %4182 = vmatpush.xpose.msra.mxu0 0.0
    %4183 = vmatpush.xpose.msra.mxu0 0.0
    %4184 = vmatpush.xpose.msra.mxu0 0.0
    %4185 = vmatpush.xpose.msra.mxu0 0.0
    %4186 = vmatpush.xpose.msra.mxu0 0.0
    %4187 = vmatpush.xpose.msra.mxu0 0.0
    %4188 = vmatpush.xpose.msra.mxu0 0.0
    %4189 = vmatpush.xpose.msra.mxu0 0.0
    %4190 = vmatpush.xpose.msra.mxu0 0.0
    %4191 = vmatpush.xpose.msra.mxu0 0.0
    %4192 = vmatpush.xpose.msra.mxu0 0.0
    %4193 = vmatpush.xpose.msra.mxu0 %v4176
    %4194 = vmatmul.f32.gmra.mxu0 %v4174
    %v4195 = vpop.f32.mrf.mxu0
    %v4196 = vadd.f32 0.0, %v4195
    %4197 = vdwg.mxu0
    %4198 = vrot.lane.b32.xlu0 %v165, 80
    %v4199 = vpop.permute.xlu0 %4198
    %4200 = vrot.lane.b32.xlu0 %v165, 16
    %v4201 = vpop.permute.xlu0 %4200
    %v4202 = vsel %vm467, %v4199, 0
    %v4204 = vsel %vm467, %v4201, 0
    %4206 = vmatpush.xpose.msra.mxu0 0.0
    %4207 = vmatpush.xpose.msra.mxu0 0.0
    %4208 = vmatpush.xpose.msra.mxu0 0.0
    %4209 = vmatpush.xpose.msra.mxu0 0.0
    %4210 = vmatpush.xpose.msra.mxu0 0.0
    %4211 = vmatpush.xpose.msra.mxu0 0.0
    %4212 = vmatpush.xpose.msra.mxu0 0.0
    %4213 = vmatpush.xpose.msra.mxu0 0.0
    %4214 = vmatpush.xpose.msra.mxu0 0.0
    %4215 = vmatpush.xpose.msra.mxu0 0.0
    %4216 = vmatpush.xpose.msra.mxu0 0.0
    %4217 = vmatpush.xpose.msra.mxu0 0.0
    %4218 = vmatpush.xpose.msra.mxu0 0.0
    %4219 = vmatpush.xpose.msra.mxu0 0.0
    %4220 = vmatpush.xpose.msra.mxu0 0.0
    %4221 = vmatpush.xpose.msra.mxu0 %v4204
    %4222 = vmatmul.f32.gmra.mxu0 %v4202
    %v4223 = vpop.f32.mrf.mxu0
    %v4224 = vadd.f32 0.0, %v4223
    %4225 = vdwg.mxu0
    %4226 = vrot.lane.b32.xlu0 %v168, 80
    %v4227 = vpop.permute.xlu0 %4226
    %4228 = vrot.lane.b32.xlu0 %v168, 16
    %v4229 = vpop.permute.xlu0 %4228
    %v4230 = vsel %vm467, %v4227, 0
    %v4232 = vsel %vm467, %v4229, 0
    %4234 = vmatpush.xpose.msra.mxu0 0.0
    %4235 = vmatpush.xpose.msra.mxu0 0.0
    %4236 = vmatpush.xpose.msra.mxu0 0.0
    %4237 = vmatpush.xpose.msra.mxu0 0.0
    %4238 = vmatpush.xpose.msra.mxu0 0.0
    %4239 = vmatpush.xpose.msra.mxu0 0.0
    %4240 = vmatpush.xpose.msra.mxu0 0.0
    %4241 = vmatpush.xpose.msra.mxu0 0.0
    %4242 = vmatpush.xpose.msra.mxu0 0.0
    %4243 = vmatpush.xpose.msra.mxu0 0.0
    %4244 = vmatpush.xpose.msra.mxu0 0.0
    %4245 = vmatpush.xpose.msra.mxu0 0.0
    %4246 = vmatpush.xpose.msra.mxu0 0.0
    %4247 = vmatpush.xpose.msra.mxu0 0.0
    %4248 = vmatpush.xpose.msra.mxu0 0.0
    %4249 = vmatpush.xpose.msra.mxu0 %v4232
    %4250 = vmatmul.f32.gmra.mxu0 %v4230
    %v4251 = vpop.f32.mrf.mxu0
    %v4252 = vadd.f32 0.0, %v4251
    %4253 = vdwg.mxu0
    %4254 = vrot.lane.b32.xlu0 %v171, 80
    %v4255 = vpop.permute.xlu0 %4254
    %4256 = vrot.lane.b32.xlu0 %v171, 16
    %v4257 = vpop.permute.xlu0 %4256
    %v4258 = vsel %vm467, %v4255, 0
    %v4260 = vsel %vm467, %v4257, 0
    %4262 = vmatpush.xpose.msra.mxu0 0.0
    %4263 = vmatpush.xpose.msra.mxu0 0.0
    %4264 = vmatpush.xpose.msra.mxu0 0.0
    %4265 = vmatpush.xpose.msra.mxu0 0.0
    %4266 = vmatpush.xpose.msra.mxu0 0.0
    %4267 = vmatpush.xpose.msra.mxu0 0.0
    %4268 = vmatpush.xpose.msra.mxu0 0.0
    %4269 = vmatpush.xpose.msra.mxu0 0.0
    %4270 = vmatpush.xpose.msra.mxu0 0.0
    %4271 = vmatpush.xpose.msra.mxu0 0.0
    %4272 = vmatpush.xpose.msra.mxu0 0.0
    %4273 = vmatpush.xpose.msra.mxu0 0.0
    %4274 = vmatpush.xpose.msra.mxu0 0.0
    %4275 = vmatpush.xpose.msra.mxu0 0.0
    %4276 = vmatpush.xpose.msra.mxu0 0.0
    %4277 = vmatpush.xpose.msra.mxu0 %v4260
    %4278 = vmatmul.f32.gmra.mxu0 %v4258
    %v4279 = vpop.f32.mrf.mxu0
    %v4280 = vadd.f32 0.0, %v4279
    %4281 = vdwg.mxu0
    %4282 = vrot.lane.b32.xlu0 %v174, 80
    %v4283 = vpop.permute.xlu0 %4282
    %4284 = vrot.lane.b32.xlu0 %v174, 16
    %v4285 = vpop.permute.xlu0 %4284
    %v4286 = vsel %vm467, %v4283, 0
    %v4288 = vsel %vm467, %v4285, 0
    %4290 = vmatpush.xpose.msra.mxu0 0.0
    %4291 = vmatpush.xpose.msra.mxu0 0.0
    %4292 = vmatpush.xpose.msra.mxu0 0.0
    %4293 = vmatpush.xpose.msra.mxu0 0.0
    %4294 = vmatpush.xpose.msra.mxu0 0.0
    %4295 = vmatpush.xpose.msra.mxu0 0.0
    %4296 = vmatpush.xpose.msra.mxu0 0.0
    %4297 = vmatpush.xpose.msra.mxu0 0.0
    %4298 = vmatpush.xpose.msra.mxu0 0.0
    %4299 = vmatpush.xpose.msra.mxu0 0.0
    %4300 = vmatpush.xpose.msra.mxu0 0.0
    %4301 = vmatpush.xpose.msra.mxu0 0.0
    %4302 = vmatpush.xpose.msra.mxu0 0.0
    %4303 = vmatpush.xpose.msra.mxu0 0.0
    %4304 = vmatpush.xpose.msra.mxu0 0.0
    %4305 = vmatpush.xpose.msra.mxu0 %v4288
    %4306 = vmatmul.f32.gmra.mxu0 %v4286
    %v4307 = vpop.f32.mrf.mxu0
    %v4308 = vadd.f32 0.0, %v4307
    %4309 = vdwg.mxu0
    %4310 = vrot.lane.b32.xlu0 %v177, 80
    %v4311 = vpop.permute.xlu0 %4310
    %4312 = vrot.lane.b32.xlu0 %v177, 16
    %v4313 = vpop.permute.xlu0 %4312
    %v4314 = vsel %vm467, %v4311, 0
    %v4316 = vsel %vm467, %v4313, 0
    %4318 = vmatpush.xpose.msra.mxu0 0.0
    %4319 = vmatpush.xpose.msra.mxu0 0.0
    %4320 = vmatpush.xpose.msra.mxu0 0.0
    %4321 = vmatpush.xpose.msra.mxu0 0.0
    %4322 = vmatpush.xpose.msra.mxu0 0.0
    %4323 = vmatpush.xpose.msra.mxu0 0.0
    %4324 = vmatpush.xpose.msra.mxu0 0.0
    %4325 = vmatpush.xpose.msra.mxu0 0.0
    %4326 = vmatpush.xpose.msra.mxu0 0.0
    %4327 = vmatpush.xpose.msra.mxu0 0.0
    %4328 = vmatpush.xpose.msra.mxu0 0.0
    %4329 = vmatpush.xpose.msra.mxu0 0.0
    %4330 = vmatpush.xpose.msra.mxu0 0.0
    %4331 = vmatpush.xpose.msra.mxu0 0.0
    %4332 = vmatpush.xpose.msra.mxu0 0.0
    %4333 = vmatpush.xpose.msra.mxu0 %v4316
    %4334 = vmatmul.f32.gmra.mxu0 %v4314
    %v4335 = vpop.f32.mrf.mxu0
    %v4336 = vadd.f32 0.0, %v4335
    %4337 = vdwg.mxu0
    %4338 = vrot.lane.b32.xlu0 %v180, 80
    %v4339 = vpop.permute.xlu0 %4338
    %4340 = vrot.lane.b32.xlu0 %v180, 16
    %v4341 = vpop.permute.xlu0 %4340
    %v4342 = vsel %vm467, %v4339, 0
    %v4344 = vsel %vm467, %v4341, 0
    %4346 = vmatpush.xpose.msra.mxu0 0.0
    %4347 = vmatpush.xpose.msra.mxu0 0.0
    %4348 = vmatpush.xpose.msra.mxu0 0.0
    %4349 = vmatpush.xpose.msra.mxu0 0.0
    %4350 = vmatpush.xpose.msra.mxu0 0.0
    %4351 = vmatpush.xpose.msra.mxu0 0.0
    %4352 = vmatpush.xpose.msra.mxu0 0.0
    %4353 = vmatpush.xpose.msra.mxu0 0.0
    %4354 = vmatpush.xpose.msra.mxu0 0.0
    %4355 = vmatpush.xpose.msra.mxu0 0.0
    %4356 = vmatpush.xpose.msra.mxu0 0.0
    %4357 = vmatpush.xpose.msra.mxu0 0.0
    %4358 = vmatpush.xpose.msra.mxu0 0.0
    %4359 = vmatpush.xpose.msra.mxu0 0.0
    %4360 = vmatpush.xpose.msra.mxu0 0.0
    %4361 = vmatpush.xpose.msra.mxu0 %v4344
    %4362 = vmatmul.f32.gmra.mxu0 %v4342
    %v4363 = vpop.f32.mrf.mxu0
    %v4364 = vadd.f32 0.0, %v4363
    %4365 = vdwg.mxu0
    %4366 = vrot.lane.b32.xlu0 %v183, 80
    %v4367 = vpop.permute.xlu0 %4366
    %4368 = vrot.lane.b32.xlu0 %v183, 16
    %v4369 = vpop.permute.xlu0 %4368
    %v4370 = vsel %vm467, %v4367, 0
    %v4372 = vsel %vm467, %v4369, 0
    %4374 = vmatpush.xpose.msra.mxu0 0.0
    %4375 = vmatpush.xpose.msra.mxu0 0.0
    %4376 = vmatpush.xpose.msra.mxu0 0.0
    %4377 = vmatpush.xpose.msra.mxu0 0.0
    %4378 = vmatpush.xpose.msra.mxu0 0.0
    %4379 = vmatpush.xpose.msra.mxu0 0.0
    %4380 = vmatpush.xpose.msra.mxu0 0.0
    %4381 = vmatpush.xpose.msra.mxu0 0.0
    %4382 = vmatpush.xpose.msra.mxu0 0.0
    %4383 = vmatpush.xpose.msra.mxu0 0.0
    %4384 = vmatpush.xpose.msra.mxu0 0.0
    %4385 = vmatpush.xpose.msra.mxu0 0.0
    %4386 = vmatpush.xpose.msra.mxu0 0.0
    %4387 = vmatpush.xpose.msra.mxu0 0.0
    %4388 = vmatpush.xpose.msra.mxu0 0.0
    %4389 = vmatpush.xpose.msra.mxu0 %v4372
    %4390 = vmatmul.f32.gmra.mxu0 %v4370
    %v4391 = vpop.f32.mrf.mxu0
    %v4392 = vadd.f32 0.0, %v4391
    %4393 = vdwg.mxu0
    %4394 = vrot.lane.b32.xlu0 %v186, 80
    %v4395 = vpop.permute.xlu0 %4394
    %4396 = vrot.lane.b32.xlu0 %v186, 16
    %v4397 = vpop.permute.xlu0 %4396
    %v4398 = vsel %vm467, %v4395, 0
    %v4400 = vsel %vm467, %v4397, 0
    %4402 = vmatpush.xpose.msra.mxu0 0.0
    %4403 = vmatpush.xpose.msra.mxu0 0.0
    %4404 = vmatpush.xpose.msra.mxu0 0.0
    %4405 = vmatpush.xpose.msra.mxu0 0.0
    %4406 = vmatpush.xpose.msra.mxu0 0.0
    %4407 = vmatpush.xpose.msra.mxu0 0.0
    %4408 = vmatpush.xpose.msra.mxu0 0.0
    %4409 = vmatpush.xpose.msra.mxu0 0.0
    %4410 = vmatpush.xpose.msra.mxu0 0.0
    %4411 = vmatpush.xpose.msra.mxu0 0.0
    %4412 = vmatpush.xpose.msra.mxu0 0.0
    %4413 = vmatpush.xpose.msra.mxu0 0.0
    %4414 = vmatpush.xpose.msra.mxu0 0.0
    %4415 = vmatpush.xpose.msra.mxu0 0.0
    %4416 = vmatpush.xpose.msra.mxu0 0.0
    %4417 = vmatpush.xpose.msra.mxu0 %v4400
    %4418 = vmatmul.f32.gmra.mxu0 %v4398
    %v4419 = vpop.f32.mrf.mxu0
    %v4420 = vadd.f32 0.0, %v4419
    %4421 = vdwg.mxu0
    %4422 = vrot.lane.b32.xlu0 %v189, 80
    %v4423 = vpop.permute.xlu0 %4422
    %4424 = vrot.lane.b32.xlu0 %v189, 16
    %v4425 = vpop.permute.xlu0 %4424
    %v4426 = vsel %vm467, %v4423, 0
    %v4428 = vsel %vm467, %v4425, 0
    %4430 = vmatpush.xpose.msra.mxu0 0.0
    %4431 = vmatpush.xpose.msra.mxu0 0.0
    %4432 = vmatpush.xpose.msra.mxu0 0.0
    %4433 = vmatpush.xpose.msra.mxu0 0.0
    %4434 = vmatpush.xpose.msra.mxu0 0.0
    %4435 = vmatpush.xpose.msra.mxu0 0.0
    %4436 = vmatpush.xpose.msra.mxu0 0.0
    %4437 = vmatpush.xpose.msra.mxu0 0.0
    %4438 = vmatpush.xpose.msra.mxu0 0.0
    %4439 = vmatpush.xpose.msra.mxu0 0.0
    %4440 = vmatpush.xpose.msra.mxu0 0.0
    %4441 = vmatpush.xpose.msra.mxu0 0.0
    %4442 = vmatpush.xpose.msra.mxu0 0.0
    %4443 = vmatpush.xpose.msra.mxu0 0.0
    %4444 = vmatpush.xpose.msra.mxu0 0.0
    %4445 = vmatpush.xpose.msra.mxu0 %v4428
    %4446 = vmatmul.f32.gmra.mxu0 %v4426
    %v4447 = vpop.f32.mrf.mxu0
    %v4448 = vadd.f32 0.0, %v4447
    %4449 = vdwg.mxu0
    %4450 = vrot.lane.b32.xlu0 %v192, 80
    %v4451 = vpop.permute.xlu0 %4450
    %4452 = vrot.lane.b32.xlu0 %v192, 16
    %v4453 = vpop.permute.xlu0 %4452
    %v4454 = vsel %vm467, %v4451, 0
    %v4456 = vsel %vm467, %v4453, 0
    %4458 = vmatpush.xpose.msra.mxu0 0.0
    %4459 = vmatpush.xpose.msra.mxu0 0.0
    %4460 = vmatpush.xpose.msra.mxu0 0.0
    %4461 = vmatpush.xpose.msra.mxu0 0.0
    %4462 = vmatpush.xpose.msra.mxu0 0.0
    %4463 = vmatpush.xpose.msra.mxu0 0.0
    %4464 = vmatpush.xpose.msra.mxu0 0.0
    %4465 = vmatpush.xpose.msra.mxu0 0.0
    %4466 = vmatpush.xpose.msra.mxu0 0.0
    %4467 = vmatpush.xpose.msra.mxu0 0.0
    %4468 = vmatpush.xpose.msra.mxu0 0.0
    %4469 = vmatpush.xpose.msra.mxu0 0.0
    %4470 = vmatpush.xpose.msra.mxu0 0.0
    %4471 = vmatpush.xpose.msra.mxu0 0.0
    %4472 = vmatpush.xpose.msra.mxu0 0.0
    %4473 = vmatpush.xpose.msra.mxu0 %v4456
    %4474 = vmatmul.f32.gmra.mxu0 %v4454
    %v4475 = vpop.f32.mrf.mxu0
    %v4476 = vadd.f32 0.0, %v4475
    %4477 = vdwg.mxu0
    %4478 = vrot.lane.b32.xlu0 %v195, 80
    %v4479 = vpop.permute.xlu0 %4478
    %4480 = vrot.lane.b32.xlu0 %v195, 16
    %v4481 = vpop.permute.xlu0 %4480
    %v4482 = vsel %vm467, %v4479, 0
    %v4484 = vsel %vm467, %v4481, 0
    %4486 = vmatpush.xpose.msra.mxu0 0.0
    %4487 = vmatpush.xpose.msra.mxu0 0.0
    %4488 = vmatpush.xpose.msra.mxu0 0.0
    %4489 = vmatpush.xpose.msra.mxu0 0.0
    %4490 = vmatpush.xpose.msra.mxu0 0.0
    %4491 = vmatpush.xpose.msra.mxu0 0.0
    %4492 = vmatpush.xpose.msra.mxu0 0.0
    %4493 = vmatpush.xpose.msra.mxu0 0.0
    %4494 = vmatpush.xpose.msra.mxu0 0.0
    %4495 = vmatpush.xpose.msra.mxu0 0.0
    %4496 = vmatpush.xpose.msra.mxu0 0.0
    %4497 = vmatpush.xpose.msra.mxu0 0.0
    %4498 = vmatpush.xpose.msra.mxu0 0.0
    %4499 = vmatpush.xpose.msra.mxu0 0.0
    %4500 = vmatpush.xpose.msra.mxu0 0.0
    %4501 = vmatpush.xpose.msra.mxu0 %v4484
    %4502 = vmatmul.f32.gmra.mxu0 %v4482
    %v4503 = vpop.f32.mrf.mxu0
    %v4504 = vadd.f32 0.0, %v4503
    %4505 = vdwg.mxu0
    %4506 = vrot.lane.b32.xlu0 %v198, 80
    %v4507 = vpop.permute.xlu0 %4506
    %4508 = vrot.lane.b32.xlu0 %v198, 16
    %v4509 = vpop.permute.xlu0 %4508
    %v4510 = vsel %vm467, %v4507, 0
    %v4512 = vsel %vm467, %v4509, 0
    %4514 = vmatpush.xpose.msra.mxu0 0.0
    %4515 = vmatpush.xpose.msra.mxu0 0.0
    %4516 = vmatpush.xpose.msra.mxu0 0.0
    %4517 = vmatpush.xpose.msra.mxu0 0.0
    %4518 = vmatpush.xpose.msra.mxu0 0.0
    %4519 = vmatpush.xpose.msra.mxu0 0.0
    %4520 = vmatpush.xpose.msra.mxu0 0.0
    %4521 = vmatpush.xpose.msra.mxu0 0.0
    %4522 = vmatpush.xpose.msra.mxu0 0.0
    %4523 = vmatpush.xpose.msra.mxu0 0.0
    %4524 = vmatpush.xpose.msra.mxu0 0.0
    %4525 = vmatpush.xpose.msra.mxu0 0.0
    %4526 = vmatpush.xpose.msra.mxu0 0.0
    %4527 = vmatpush.xpose.msra.mxu0 0.0
    %4528 = vmatpush.xpose.msra.mxu0 0.0
    %4529 = vmatpush.xpose.msra.mxu0 %v4512
    %4530 = vmatmul.f32.gmra.mxu0 %v4510
    %v4531 = vpop.f32.mrf.mxu0
    %v4532 = vadd.f32 0.0, %v4531
    %4533 = vdwg.mxu0
    %4534 = vrot.lane.b32.xlu0 %v201, 80
    %v4535 = vpop.permute.xlu0 %4534
    %4536 = vrot.lane.b32.xlu0 %v201, 16
    %v4537 = vpop.permute.xlu0 %4536
    %v4538 = vsel %vm467, %v4535, 0
    %v4540 = vsel %vm467, %v4537, 0
    %4542 = vmatpush.xpose.msra.mxu0 0.0
    %4543 = vmatpush.xpose.msra.mxu0 0.0
    %4544 = vmatpush.xpose.msra.mxu0 0.0
    %4545 = vmatpush.xpose.msra.mxu0 0.0
    %4546 = vmatpush.xpose.msra.mxu0 0.0
    %4547 = vmatpush.xpose.msra.mxu0 0.0
    %4548 = vmatpush.xpose.msra.mxu0 0.0
    %4549 = vmatpush.xpose.msra.mxu0 0.0
    %4550 = vmatpush.xpose.msra.mxu0 0.0
    %4551 = vmatpush.xpose.msra.mxu0 0.0
    %4552 = vmatpush.xpose.msra.mxu0 0.0
    %4553 = vmatpush.xpose.msra.mxu0 0.0
    %4554 = vmatpush.xpose.msra.mxu0 0.0
    %4555 = vmatpush.xpose.msra.mxu0 0.0
    %4556 = vmatpush.xpose.msra.mxu0 0.0
    %4557 = vmatpush.xpose.msra.mxu0 %v4540
    %4558 = vmatmul.f32.gmra.mxu0 %v4538
    %v4559 = vpop.f32.mrf.mxu0
    %v4560 = vadd.f32 0.0, %v4559
    %4561 = vdwg.mxu0
    %v4562 = vmul.f32 %v4140, 0.25
    %v4563 = vmul.f32 %v4168, 0.25
    %v4564 = vmul.f32 %v4196, 0.25
    %v4565 = vmul.f32 %v4224, 0.25
    %v4566 = vmul.f32 %v4252, 0.25
    %v4567 = vmul.f32 %v4280, 0.25
    %v4568 = vmul.f32 %v4308, 0.25
    %v4569 = vmul.f32 %v4336, 0.25
    %v4570 = vmul.f32 %v4364, 0.25
    %v4571 = vmul.f32 %v4392, 0.25
    %v4572 = vmul.f32 %v4420, 0.25
    %v4573 = vmul.f32 %v4448, 0.25
    %v4574 = vmul.f32 %v4476, 0.25
    %v4575 = vmul.f32 %v4504, 0.25
    %v4576 = vmul.f32 %v4532, 0.25
    %v4577 = vmul.f32 %v4560, 0.25
    %v4578 = vmul.f32 %v4562, 1.442695
    %v4579 = vpow.pop %v4578
    %v4580 = vmul.f32 %v4563, 1.442695
    %v4581 = vpow.pop %v4580
    %v4582 = vmul.f32 %v4564, 1.442695
    %v4583 = vpow.pop %v4582
    %v4584 = vmul.f32 %v4565, 1.442695
    %v4585 = vpow.pop %v4584
    %v4586 = vmul.f32 %v4566, 1.442695
    %v4587 = vpow.pop %v4586
    %v4588 = vmul.f32 %v4567, 1.442695
    %v4589 = vpow.pop %v4588
    %v4590 = vmul.f32 %v4568, 1.442695
    %v4591 = vpow.pop %v4590
    %v4592 = vmul.f32 %v4569, 1.442695
    %v4593 = vpow.pop %v4592
    %v4594 = vmul.f32 %v4570, 1.442695
    %v4595 = vpow.pop %v4594
    %v4596 = vmul.f32 %v4571, 1.442695
    %v4597 = vpow.pop %v4596
    %v4598 = vmul.f32 %v4572, 1.442695
    %v4599 = vpow.pop %v4598
    %v4600 = vmul.f32 %v4573, 1.442695
    %v4601 = vpow.pop %v4600
    %v4602 = vmul.f32 %v4574, 1.442695
    %v4603 = vpow.pop %v4602
    %v4604 = vmul.f32 %v4575, 1.442695
    %v4605 = vpow.pop %v4604
    %v4606 = vmul.f32 %v4576, 1.442695
    %v4607 = vpow.pop %v4606
    %v4608 = vmul.f32 %v4577, 1.442695
    %v4609 = vpow.pop %v4608
    %v4610 = vmul.f32 %v4579, %v382
    %v4611 = vmul.f32 %v4581, %v383
    %v4612 = vmul.f32 %v4583, %v384
    %v4613 = vmul.f32 %v4585, %v385
    %v4614 = vmul.f32 %v4587, %v386
    %v4615 = vmul.f32 %v4589, %v387
    %v4616 = vmul.f32 %v4591, %v388
    %v4617 = vmul.f32 %v4593, %v389
    %v4618 = vmul.f32 %v4595, %v390
    %v4619 = vmul.f32 %v4597, %v391
    %v4620 = vmul.f32 %v4599, %v392
    %v4621 = vmul.f32 %v4601, %v393
    %v4622 = vmul.f32 %v4603, %v394
    %v4623 = vmul.f32 %v4605, %v395
    %v4624 = vmul.f32 %v4607, %v396
    %v4625 = vmul.f32 %v4609, %v397
    %v4626 = vsel %vm961, %v4610, 0.0
    %4627 = vadd.xlane.f32.xlu0 %v4626
    %v4628 = vpop.xlane.xlu0 %4627
    %v4629 = vsel %vm961, %v4611, 0.0
    %4630 = vadd.xlane.f32.xlu0 %v4629
    %v4631 = vpop.xlane.xlu0 %4630
    %v4632 = vsel %vm961, %v4612, 0.0
    %4633 = vadd.xlane.f32.xlu0 %v4632
    %v4634 = vpop.xlane.xlu0 %4633
    %v4635 = vsel %vm961, %v4613, 0.0
    %4636 = vadd.xlane.f32.xlu0 %v4635
    %v4637 = vpop.xlane.xlu0 %4636
    %v4638 = vsel %vm961, %v4614, 0.0
    %4639 = vadd.xlane.f32.xlu0 %v4638
    %v4640 = vpop.xlane.xlu0 %4639
    %v4641 = vsel %vm961, %v4615, 0.0
    %4642 = vadd.xlane.f32.xlu0 %v4641
    %v4643 = vpop.xlane.xlu0 %4642
    %v4644 = vsel %vm961, %v4616, 0.0
    %4645 = vadd.xlane.f32.xlu0 %v4644
    %v4646 = vpop.xlane.xlu0 %4645
    %v4647 = vsel %vm961, %v4617, 0.0
    %4648 = vadd.xlane.f32.xlu0 %v4647
    %v4649 = vpop.xlane.xlu0 %4648
    %v4650 = vsel %vm961, %v4618, 0.0
    %4651 = vadd.xlane.f32.xlu0 %v4650
    %v4652 = vpop.xlane.xlu0 %4651
    %v4653 = vsel %vm961, %v4619, 0.0
    %4654 = vadd.xlane.f32.xlu0 %v4653
    %v4655 = vpop.xlane.xlu0 %4654
    %v4656 = vsel %vm961, %v4620, 0.0
    %4657 = vadd.xlane.f32.xlu0 %v4656
    %v4658 = vpop.xlane.xlu0 %4657
    %v4659 = vsel %vm961, %v4621, 0.0
    %4660 = vadd.xlane.f32.xlu0 %v4659
    %v4661 = vpop.xlane.xlu0 %4660
    %v4662 = vsel %vm961, %v4622, 0.0
    %4663 = vadd.xlane.f32.xlu0 %v4662
    %v4664 = vpop.xlane.xlu0 %4663
    %v4665 = vsel %vm961, %v4623, 0.0
    %4666 = vadd.xlane.f32.xlu0 %v4665
    %v4667 = vpop.xlane.xlu0 %4666
    %v4668 = vsel %vm961, %v4624, 0.0
    %4669 = vadd.xlane.f32.xlu0 %v4668
    %v4670 = vpop.xlane.xlu0 %4669
    %v4671 = vsel %vm961, %v4625, 0.0
    %4672 = vadd.xlane.f32.xlu0 %v4671
    %v4673 = vpop.xlane.xlu0 %4672
    %v4674 = vadd.f32 %v4628, 1e-08
    %v4675 = vadd.f32 %v4631, 1e-08
    %v4676 = vadd.f32 %v4634, 1e-08
    %v4677 = vadd.f32 %v4637, 1e-08
    %v4678 = vadd.f32 %v4640, 1e-08
    %v4679 = vadd.f32 %v4643, 1e-08
    %v4680 = vadd.f32 %v4646, 1e-08
    %v4681 = vadd.f32 %v4649, 1e-08
    %v4682 = vadd.f32 %v4652, 1e-08
    %v4683 = vadd.f32 %v4655, 1e-08
    %v4684 = vadd.f32 %v4658, 1e-08
    %v4685 = vadd.f32 %v4661, 1e-08
    %v4686 = vadd.f32 %v4664, 1e-08
    %v4687 = vadd.f32 %v4667, 1e-08
    %v4688 = vadd.f32 %v4670, 1e-08
    %v4689 = vadd.f32 %v4673, 1e-08
    %v4690 = vrcp.pop %v4674
    %v4691 = vmul.f32 %v4674, %v4690
    %v4692 = vsub.f32 1.0, %v4691
    %v4693 = vmul.f32 %v4690, %v4692
    %v4694 = vadd.f32 %v4690, %v4693
    %vm4695 = vweird.f32 %v4674
    %vm4696 = vweird.f32 %v4690
    %vm4697 = vmor %vm4695, %vm4696
    %v4698 = vsel %vm4697, %v4690, %v4694
    %v4699 = vand.u32 2147483647, %v4674
    %vm4700 = vcmp.eq.f32.partialorder %v4699, 8.507059e+37
    %v4701 = vand.u32 %v4674, 2147483648
    %v4702 = vor.u32 1.1754944e-38, %v4701
    %v4703 = vsel %vm4700, %v4702, %v4698
    %v4704 = vrcp.pop %v4675
    %v4705 = vmul.f32 %v4675, %v4704
    %v4706 = vsub.f32 1.0, %v4705
    %v4707 = vmul.f32 %v4704, %v4706
    %v4708 = vadd.f32 %v4704, %v4707
    %vm4709 = vweird.f32 %v4675
    %vm4710 = vweird.f32 %v4704
    %vm4711 = vmor %vm4709, %vm4710
    %v4712 = vsel %vm4711, %v4704, %v4708
    %v4713 = vand.u32 2147483647, %v4675
    %vm4714 = vcmp.eq.f32.partialorder %v4713, 8.507059e+37
    %v4715 = vand.u32 %v4675, 2147483648
    %v4716 = vor.u32 1.1754944e-38, %v4715
    %v4717 = vsel %vm4714, %v4716, %v4712
    %v4718 = vrcp.pop %v4676
    %v4719 = vmul.f32 %v4676, %v4718
    %v4720 = vsub.f32 1.0, %v4719
    %v4721 = vmul.f32 %v4718, %v4720
    %v4722 = vadd.f32 %v4718, %v4721
    %vm4723 = vweird.f32 %v4676
    %vm4724 = vweird.f32 %v4718
    %vm4725 = vmor %vm4723, %vm4724
    %v4726 = vsel %vm4725, %v4718, %v4722
    %v4727 = vand.u32 2147483647, %v4676
    %vm4728 = vcmp.eq.f32.partialorder %v4727, 8.507059e+37
    %v4729 = vand.u32 %v4676, 2147483648
    %v4730 = vor.u32 1.1754944e-38, %v4729
    %v4731 = vsel %vm4728, %v4730, %v4726
    %v4732 = vrcp.pop %v4677
    %v4733 = vmul.f32 %v4677, %v4732
    %v4734 = vsub.f32 1.0, %v4733
    %v4735 = vmul.f32 %v4732, %v4734
    %v4736 = vadd.f32 %v4732, %v4735
    %vm4737 = vweird.f32 %v4677
    %vm4738 = vweird.f32 %v4732
    %vm4739 = vmor %vm4737, %vm4738
    %v4740 = vsel %vm4739, %v4732, %v4736
    %v4741 = vand.u32 2147483647, %v4677
    %vm4742 = vcmp.eq.f32.partialorder %v4741, 8.507059e+37
    %v4743 = vand.u32 %v4677, 2147483648
    %v4744 = vor.u32 1.1754944e-38, %v4743
    %v4745 = vsel %vm4742, %v4744, %v4740
    %v4746 = vrcp.pop %v4678
    %v4747 = vmul.f32 %v4678, %v4746
    %v4748 = vsub.f32 1.0, %v4747
    %v4749 = vmul.f32 %v4746, %v4748
    %v4750 = vadd.f32 %v4746, %v4749
    %vm4751 = vweird.f32 %v4678
    %vm4752 = vweird.f32 %v4746
    %vm4753 = vmor %vm4751, %vm4752
    %v4754 = vsel %vm4753, %v4746, %v4750
    %v4755 = vand.u32 2147483647, %v4678
    %vm4756 = vcmp.eq.f32.partialorder %v4755, 8.507059e+37
    %v4757 = vand.u32 %v4678, 2147483648
    %v4758 = vor.u32 1.1754944e-38, %v4757
    %v4759 = vsel %vm4756, %v4758, %v4754
    %v4760 = vrcp.pop %v4679
    %v4761 = vmul.f32 %v4679, %v4760
    %v4762 = vsub.f32 1.0, %v4761
    %v4763 = vmul.f32 %v4760, %v4762
    %v4764 = vadd.f32 %v4760, %v4763
    %vm4765 = vweird.f32 %v4679
    %vm4766 = vweird.f32 %v4760
    %vm4767 = vmor %vm4765, %vm4766
    %v4768 = vsel %vm4767, %v4760, %v4764
    %v4769 = vand.u32 2147483647, %v4679
    %vm4770 = vcmp.eq.f32.partialorder %v4769, 8.507059e+37
    %v4771 = vand.u32 %v4679, 2147483648
    %v4772 = vor.u32 1.1754944e-38, %v4771
    %v4773 = vsel %vm4770, %v4772, %v4768
    %v4774 = vrcp.pop %v4680
    %v4775 = vmul.f32 %v4680, %v4774
    %v4776 = vsub.f32 1.0, %v4775
    %v4777 = vmul.f32 %v4774, %v4776
    %v4778 = vadd.f32 %v4774, %v4777
    %vm4779 = vweird.f32 %v4680
    %vm4780 = vweird.f32 %v4774
    %vm4781 = vmor %vm4779, %vm4780
    %v4782 = vsel %vm4781, %v4774, %v4778
    %v4783 = vand.u32 2147483647, %v4680
    %vm4784 = vcmp.eq.f32.partialorder %v4783, 8.507059e+37
    %v4785 = vand.u32 %v4680, 2147483648
    %v4786 = vor.u32 1.1754944e-38, %v4785
    %v4787 = vsel %vm4784, %v4786, %v4782
    %v4788 = vrcp.pop %v4681
    %v4789 = vmul.f32 %v4681, %v4788
    %v4790 = vsub.f32 1.0, %v4789
    %v4791 = vmul.f32 %v4788, %v4790
    %v4792 = vadd.f32 %v4788, %v4791
    %vm4793 = vweird.f32 %v4681
    %vm4794 = vweird.f32 %v4788
    %vm4795 = vmor %vm4793, %vm4794
    %v4796 = vsel %vm4795, %v4788, %v4792
    %v4797 = vand.u32 2147483647, %v4681
    %vm4798 = vcmp.eq.f32.partialorder %v4797, 8.507059e+37
    %v4799 = vand.u32 %v4681, 2147483648
    %v4800 = vor.u32 1.1754944e-38, %v4799
    %v4801 = vsel %vm4798, %v4800, %v4796
    %v4802 = vrcp.pop %v4682
    %v4803 = vmul.f32 %v4682, %v4802
    %v4804 = vsub.f32 1.0, %v4803
    %v4805 = vmul.f32 %v4802, %v4804
    %v4806 = vadd.f32 %v4802, %v4805
    %vm4807 = vweird.f32 %v4682
    %vm4808 = vweird.f32 %v4802
    %vm4809 = vmor %vm4807, %vm4808
    %v4810 = vsel %vm4809, %v4802, %v4806
    %v4811 = vand.u32 2147483647, %v4682
    %vm4812 = vcmp.eq.f32.partialorder %v4811, 8.507059e+37
    %v4813 = vand.u32 %v4682, 2147483648
    %v4814 = vor.u32 1.1754944e-38, %v4813
    %v4815 = vsel %vm4812, %v4814, %v4810
    %v4816 = vrcp.pop %v4683
    %v4817 = vmul.f32 %v4683, %v4816
    %v4818 = vsub.f32 1.0, %v4817
    %v4819 = vmul.f32 %v4816, %v4818
    %v4820 = vadd.f32 %v4816, %v4819
    %vm4821 = vweird.f32 %v4683
    %vm4822 = vweird.f32 %v4816
    %vm4823 = vmor %vm4821, %vm4822
    %v4824 = vsel %vm4823, %v4816, %v4820
    %v4825 = vand.u32 2147483647, %v4683
    %vm4826 = vcmp.eq.f32.partialorder %v4825, 8.507059e+37
    %v4827 = vand.u32 %v4683, 2147483648
    %v4828 = vor.u32 1.1754944e-38, %v4827
    %v4829 = vsel %vm4826, %v4828, %v4824
    %v4830 = vrcp.pop %v4684
    %v4831 = vmul.f32 %v4684, %v4830
    %v4832 = vsub.f32 1.0, %v4831
    %v4833 = vmul.f32 %v4830, %v4832
    %v4834 = vadd.f32 %v4830, %v4833
    %vm4835 = vweird.f32 %v4684
    %vm4836 = vweird.f32 %v4830
    %vm4837 = vmor %vm4835, %vm4836
    %v4838 = vsel %vm4837, %v4830, %v4834
    %v4839 = vand.u32 2147483647, %v4684
    %vm4840 = vcmp.eq.f32.partialorder %v4839, 8.507059e+37
    %v4841 = vand.u32 %v4684, 2147483648
    %v4842 = vor.u32 1.1754944e-38, %v4841
    %v4843 = vsel %vm4840, %v4842, %v4838
    %v4844 = vrcp.pop %v4685
    %v4845 = vmul.f32 %v4685, %v4844
    %v4846 = vsub.f32 1.0, %v4845
    %v4847 = vmul.f32 %v4844, %v4846
    %v4848 = vadd.f32 %v4844, %v4847
    %vm4849 = vweird.f32 %v4685
    %vm4850 = vweird.f32 %v4844
    %vm4851 = vmor %vm4849, %vm4850
    %v4852 = vsel %vm4851, %v4844, %v4848
    %v4853 = vand.u32 2147483647, %v4685
    %vm4854 = vcmp.eq.f32.partialorder %v4853, 8.507059e+37
    %v4855 = vand.u32 %v4685, 2147483648
    %v4856 = vor.u32 1.1754944e-38, %v4855
    %v4857 = vsel %vm4854, %v4856, %v4852
    %v4858 = vrcp.pop %v4686
    %v4859 = vmul.f32 %v4686, %v4858
    %v4860 = vsub.f32 1.0, %v4859
    %v4861 = vmul.f32 %v4858, %v4860
    %v4862 = vadd.f32 %v4858, %v4861
    %vm4863 = vweird.f32 %v4686
    %vm4864 = vweird.f32 %v4858
    %vm4865 = vmor %vm4863, %vm4864
    %v4866 = vsel %vm4865, %v4858, %v4862
    %v4867 = vand.u32 2147483647, %v4686
    %vm4868 = vcmp.eq.f32.partialorder %v4867, 8.507059e+37
    %v4869 = vand.u32 %v4686, 2147483648
    %v4870 = vor.u32 1.1754944e-38, %v4869
    %v4871 = vsel %vm4868, %v4870, %v4866
    %v4872 = vrcp.pop %v4687
    %v4873 = vmul.f32 %v4687, %v4872
    %v4874 = vsub.f32 1.0, %v4873
    %v4875 = vmul.f32 %v4872, %v4874
    %v4876 = vadd.f32 %v4872, %v4875
    %vm4877 = vweird.f32 %v4687
    %vm4878 = vweird.f32 %v4872
    %vm4879 = vmor %vm4877, %vm4878
    %v4880 = vsel %vm4879, %v4872, %v4876
    %v4881 = vand.u32 2147483647, %v4687
    %vm4882 = vcmp.eq.f32.partialorder %v4881, 8.507059e+37
    %v4883 = vand.u32 %v4687, 2147483648
    %v4884 = vor.u32 1.1754944e-38, %v4883
    %v4885 = vsel %vm4882, %v4884, %v4880
    %v4886 = vrcp.pop %v4688
    %v4887 = vmul.f32 %v4688, %v4886
    %v4888 = vsub.f32 1.0, %v4887
    %v4889 = vmul.f32 %v4886, %v4888
    %v4890 = vadd.f32 %v4886, %v4889
    %vm4891 = vweird.f32 %v4688
    %vm4892 = vweird.f32 %v4886
    %vm4893 = vmor %vm4891, %vm4892
    %v4894 = vsel %vm4893, %v4886, %v4890
    %v4895 = vand.u32 2147483647, %v4688
    %vm4896 = vcmp.eq.f32.partialorder %v4895, 8.507059e+37
    %v4897 = vand.u32 %v4688, 2147483648
    %v4898 = vor.u32 1.1754944e-38, %v4897
    %v4899 = vsel %vm4896, %v4898, %v4894
    %v4900 = vrcp.pop %v4689
    %v4901 = vmul.f32 %v4689, %v4900
    %v4902 = vsub.f32 1.0, %v4901
    %v4903 = vmul.f32 %v4900, %v4902
    %v4904 = vadd.f32 %v4900, %v4903
    %vm4905 = vweird.f32 %v4689
    %vm4906 = vweird.f32 %v4900
    %vm4907 = vmor %vm4905, %vm4906
    %v4908 = vsel %vm4907, %v4900, %v4904
    %v4909 = vand.u32 2147483647, %v4689
    %vm4910 = vcmp.eq.f32.partialorder %v4909, 8.507059e+37
    %v4911 = vand.u32 %v4689, 2147483648
    %v4912 = vor.u32 1.1754944e-38, %v4911
    %v4913 = vsel %vm4910, %v4912, %v4908
    %v4914 = vmul.f32 %v4610, %v4703
    %v4915 = vmul.f32 %v4611, %v4717
    %v4916 = vmul.f32 %v4612, %v4731
    %v4917 = vmul.f32 %v4613, %v4745
    %v4918 = vmul.f32 %v4614, %v4759
    %v4919 = vmul.f32 %v4615, %v4773
    %v4920 = vmul.f32 %v4616, %v4787
    %v4921 = vmul.f32 %v4617, %v4801
    %v4922 = vmul.f32 %v4618, %v4815
    %v4923 = vmul.f32 %v4619, %v4829
    %v4924 = vmul.f32 %v4620, %v4843
    %v4925 = vmul.f32 %v4621, %v4857
    %v4926 = vmul.f32 %v4622, %v4871
    %v4927 = vmul.f32 %v4623, %v4885
    %v4928 = vmul.f32 %v4624, %v4899
    %v4929 = vmul.f32 %v4625, %v4913
    %4930 = vrot.lane.b32.xlu0 %v221, 80
    %v4931 = vpop.permute.xlu0 %4930
    %v4934 = vsel %vm961, %v4914, 0
    %4936 = vmatpush.msra.mxu0 0.0
    %4937 = vmatpush.msra.mxu0 0.0
    %4938 = vmatpush.msra.mxu0 0.0
    %4939 = vmatpush.msra.mxu0 0.0
    %4940 = vmatpush.msra.mxu0 0.0
    %4941 = vmatpush.msra.mxu0 0.0
    %4942 = vmatpush.msra.mxu0 0.0
    %4943 = vmatpush.msra.mxu0 0.0
    %4944 = vmatpush.msra.mxu0 0.0
    %4945 = vmatpush.msra.mxu0 0.0
    %4946 = vmatpush.msra.mxu0 0.0
    %4947 = vmatpush.msra.mxu0 0.0
    %4948 = vmatpush.msra.mxu0 0.0
    %4949 = vmatpush.msra.mxu0 0.0
    %4950 = vmatpush.msra.mxu0 0.0
    %4951 = vmatpush.msra.mxu0 %v4931
    %4952 = vmatmul.f32.gmra.mxu0 %v4934
    %v4953 = vpop.f32.mrf.mxu0
    %v4954 = vadd.f32 0.0, %v4953
    %4955 = vdwg.mxu0
    %4956 = vrot.lane.b32.xlu0 %v224, 80
    %v4957 = vpop.permute.xlu0 %4956
    %v4960 = vsel %vm961, %v4915, 0
    %4962 = vmatpush.msra.mxu0 0.0
    %4963 = vmatpush.msra.mxu0 0.0
    %4964 = vmatpush.msra.mxu0 0.0
    %4965 = vmatpush.msra.mxu0 0.0
    %4966 = vmatpush.msra.mxu0 0.0
    %4967 = vmatpush.msra.mxu0 0.0
    %4968 = vmatpush.msra.mxu0 0.0
    %4969 = vmatpush.msra.mxu0 0.0
    %4970 = vmatpush.msra.mxu0 0.0
    %4971 = vmatpush.msra.mxu0 0.0
    %4972 = vmatpush.msra.mxu0 0.0
    %4973 = vmatpush.msra.mxu0 0.0
    %4974 = vmatpush.msra.mxu0 0.0
    %4975 = vmatpush.msra.mxu0 0.0
    %4976 = vmatpush.msra.mxu0 0.0
    %4977 = vmatpush.msra.mxu0 %v4957
    %4978 = vmatmul.f32.gmra.mxu0 %v4960
    %v4979 = vpop.f32.mrf.mxu0
    %v4980 = vadd.f32 0.0, %v4979
    %4981 = vdwg.mxu0
    %4982 = vrot.lane.b32.xlu0 %v227, 80
    %v4983 = vpop.permute.xlu0 %4982
    %v4986 = vsel %vm961, %v4916, 0
    %4988 = vmatpush.msra.mxu0 0.0
    %4989 = vmatpush.msra.mxu0 0.0
    %4990 = vmatpush.msra.mxu0 0.0
    %4991 = vmatpush.msra.mxu0 0.0
    %4992 = vmatpush.msra.mxu0 0.0
    %4993 = vmatpush.msra.mxu0 0.0
    %4994 = vmatpush.msra.mxu0 0.0
    %4995 = vmatpush.msra.mxu0 0.0
    %4996 = vmatpush.msra.mxu0 0.0
    %4997 = vmatpush.msra.mxu0 0.0
    %4998 = vmatpush.msra.mxu0 0.0
    %4999 = vmatpush.msra.mxu0 0.0
    %5000 = vmatpush.msra.mxu0 0.0
    %5001 = vmatpush.msra.mxu0 0.0
    %5002 = vmatpush.msra.mxu0 0.0
    %5003 = vmatpush.msra.mxu0 %v4983
    %5004 = vmatmul.f32.gmra.mxu0 %v4986
    %v5005 = vpop.f32.mrf.mxu0
    %v5006 = vadd.f32 0.0, %v5005
    %5007 = vdwg.mxu0
    %5008 = vrot.lane.b32.xlu0 %v230, 80
    %v5009 = vpop.permute.xlu0 %5008
    %v5012 = vsel %vm961, %v4917, 0
    %5014 = vmatpush.msra.mxu0 0.0
    %5015 = vmatpush.msra.mxu0 0.0
    %5016 = vmatpush.msra.mxu0 0.0
    %5017 = vmatpush.msra.mxu0 0.0
    %5018 = vmatpush.msra.mxu0 0.0
    %5019 = vmatpush.msra.mxu0 0.0
    %5020 = vmatpush.msra.mxu0 0.0
    %5021 = vmatpush.msra.mxu0 0.0
    %5022 = vmatpush.msra.mxu0 0.0
    %5023 = vmatpush.msra.mxu0 0.0
    %5024 = vmatpush.msra.mxu0 0.0
    %5025 = vmatpush.msra.mxu0 0.0
    %5026 = vmatpush.msra.mxu0 0.0
    %5027 = vmatpush.msra.mxu0 0.0
    %5028 = vmatpush.msra.mxu0 0.0
    %5029 = vmatpush.msra.mxu0 %v5009
    %5030 = vmatmul.f32.gmra.mxu0 %v5012
    %v5031 = vpop.f32.mrf.mxu0
    %v5032 = vadd.f32 0.0, %v5031
    %5033 = vdwg.mxu0
    %5034 = vrot.lane.b32.xlu0 %v233, 80
    %v5035 = vpop.permute.xlu0 %5034
    %v5038 = vsel %vm961, %v4918, 0
    %5040 = vmatpush.msra.mxu0 0.0
    %5041 = vmatpush.msra.mxu0 0.0
    %5042 = vmatpush.msra.mxu0 0.0
    %5043 = vmatpush.msra.mxu0 0.0
    %5044 = vmatpush.msra.mxu0 0.0
    %5045 = vmatpush.msra.mxu0 0.0
    %5046 = vmatpush.msra.mxu0 0.0
    %5047 = vmatpush.msra.mxu0 0.0
    %5048 = vmatpush.msra.mxu0 0.0
    %5049 = vmatpush.msra.mxu0 0.0
    %5050 = vmatpush.msra.mxu0 0.0
    %5051 = vmatpush.msra.mxu0 0.0
    %5052 = vmatpush.msra.mxu0 0.0
    %5053 = vmatpush.msra.mxu0 0.0
    %5054 = vmatpush.msra.mxu0 0.0
    %5055 = vmatpush.msra.mxu0 %v5035
    %5056 = vmatmul.f32.gmra.mxu0 %v5038
    %v5057 = vpop.f32.mrf.mxu0
    %v5058 = vadd.f32 0.0, %v5057
    %5059 = vdwg.mxu0
    %5060 = vrot.lane.b32.xlu0 %v236, 80
    %v5061 = vpop.permute.xlu0 %5060
    %v5064 = vsel %vm961, %v4919, 0
    %5066 = vmatpush.msra.mxu0 0.0
    %5067 = vmatpush.msra.mxu0 0.0
    %5068 = vmatpush.msra.mxu0 0.0
    %5069 = vmatpush.msra.mxu0 0.0
    %5070 = vmatpush.msra.mxu0 0.0
    %5071 = vmatpush.msra.mxu0 0.0
    %5072 = vmatpush.msra.mxu0 0.0
    %5073 = vmatpush.msra.mxu0 0.0
    %5074 = vmatpush.msra.mxu0 0.0
    %5075 = vmatpush.msra.mxu0 0.0
    %5076 = vmatpush.msra.mxu0 0.0
    %5077 = vmatpush.msra.mxu0 0.0
    %5078 = vmatpush.msra.mxu0 0.0
    %5079 = vmatpush.msra.mxu0 0.0
    %5080 = vmatpush.msra.mxu0 0.0
    %5081 = vmatpush.msra.mxu0 %v5061
    %5082 = vmatmul.f32.gmra.mxu0 %v5064
    %v5083 = vpop.f32.mrf.mxu0
    %v5084 = vadd.f32 0.0, %v5083
    %5085 = vdwg.mxu0
    %5086 = vrot.lane.b32.xlu0 %v239, 80
    %v5087 = vpop.permute.xlu0 %5086
    %v5090 = vsel %vm961, %v4920, 0
    %5092 = vmatpush.msra.mxu0 0.0
    %5093 = vmatpush.msra.mxu0 0.0
    %5094 = vmatpush.msra.mxu0 0.0
    %5095 = vmatpush.msra.mxu0 0.0
    %5096 = vmatpush.msra.mxu0 0.0
    %5097 = vmatpush.msra.mxu0 0.0
    %5098 = vmatpush.msra.mxu0 0.0
    %5099 = vmatpush.msra.mxu0 0.0
    %5100 = vmatpush.msra.mxu0 0.0
    %5101 = vmatpush.msra.mxu0 0.0
    %5102 = vmatpush.msra.mxu0 0.0
    %5103 = vmatpush.msra.mxu0 0.0
    %5104 = vmatpush.msra.mxu0 0.0
    %5105 = vmatpush.msra.mxu0 0.0
    %5106 = vmatpush.msra.mxu0 0.0
    %5107 = vmatpush.msra.mxu0 %v5087
    %5108 = vmatmul.f32.gmra.mxu0 %v5090
    %v5109 = vpop.f32.mrf.mxu0
    %v5110 = vadd.f32 0.0, %v5109
    %5111 = vdwg.mxu0
    %5112 = vrot.lane.b32.xlu0 %v242, 80
    %v5113 = vpop.permute.xlu0 %5112
    %v5116 = vsel %vm961, %v4921, 0
    %5118 = vmatpush.msra.mxu0 0.0
    %5119 = vmatpush.msra.mxu0 0.0
    %5120 = vmatpush.msra.mxu0 0.0
    %5121 = vmatpush.msra.mxu0 0.0
    %5122 = vmatpush.msra.mxu0 0.0
    %5123 = vmatpush.msra.mxu0 0.0
    %5124 = vmatpush.msra.mxu0 0.0
    %5125 = vmatpush.msra.mxu0 0.0
    %5126 = vmatpush.msra.mxu0 0.0
    %5127 = vmatpush.msra.mxu0 0.0
    %5128 = vmatpush.msra.mxu0 0.0
    %5129 = vmatpush.msra.mxu0 0.0
    %5130 = vmatpush.msra.mxu0 0.0
    %5131 = vmatpush.msra.mxu0 0.0
    %5132 = vmatpush.msra.mxu0 0.0
    %5133 = vmatpush.msra.mxu0 %v5113
    %5134 = vmatmul.f32.gmra.mxu0 %v5116
    %v5135 = vpop.f32.mrf.mxu0
    %v5136 = vadd.f32 0.0, %v5135
    %5137 = vdwg.mxu0
    %5138 = vrot.lane.b32.xlu0 %v245, 80
    %v5139 = vpop.permute.xlu0 %5138
    %v5142 = vsel %vm961, %v4922, 0
    %5144 = vmatpush.msra.mxu0 0.0
    %5145 = vmatpush.msra.mxu0 0.0
    %5146 = vmatpush.msra.mxu0 0.0
    %5147 = vmatpush.msra.mxu0 0.0
    %5148 = vmatpush.msra.mxu0 0.0
    %5149 = vmatpush.msra.mxu0 0.0
    %5150 = vmatpush.msra.mxu0 0.0
    %5151 = vmatpush.msra.mxu0 0.0
    %5152 = vmatpush.msra.mxu0 0.0
    %5153 = vmatpush.msra.mxu0 0.0
    %5154 = vmatpush.msra.mxu0 0.0
    %5155 = vmatpush.msra.mxu0 0.0
    %5156 = vmatpush.msra.mxu0 0.0
    %5157 = vmatpush.msra.mxu0 0.0
    %5158 = vmatpush.msra.mxu0 0.0
    %5159 = vmatpush.msra.mxu0 %v5139
    %5160 = vmatmul.f32.gmra.mxu0 %v5142
    %v5161 = vpop.f32.mrf.mxu0
    %v5162 = vadd.f32 0.0, %v5161
    %5163 = vdwg.mxu0
    %5164 = vrot.lane.b32.xlu0 %v248, 80
    %v5165 = vpop.permute.xlu0 %5164
    %v5168 = vsel %vm961, %v4923, 0
    %5170 = vmatpush.msra.mxu0 0.0
    %5171 = vmatpush.msra.mxu0 0.0
    %5172 = vmatpush.msra.mxu0 0.0
    %5173 = vmatpush.msra.mxu0 0.0
    %5174 = vmatpush.msra.mxu0 0.0
    %5175 = vmatpush.msra.mxu0 0.0
    %5176 = vmatpush.msra.mxu0 0.0
    %5177 = vmatpush.msra.mxu0 0.0
    %5178 = vmatpush.msra.mxu0 0.0
    %5179 = vmatpush.msra.mxu0 0.0
    %5180 = vmatpush.msra.mxu0 0.0
    %5181 = vmatpush.msra.mxu0 0.0
    %5182 = vmatpush.msra.mxu0 0.0
    %5183 = vmatpush.msra.mxu0 0.0
    %5184 = vmatpush.msra.mxu0 0.0
    %5185 = vmatpush.msra.mxu0 %v5165
    %5186 = vmatmul.f32.gmra.mxu0 %v5168
    %v5187 = vpop.f32.mrf.mxu0
    %v5188 = vadd.f32 0.0, %v5187
    %5189 = vdwg.mxu0
    %5190 = vrot.lane.b32.xlu0 %v251, 80
    %v5191 = vpop.permute.xlu0 %5190
    %v5194 = vsel %vm961, %v4924, 0
    %5196 = vmatpush.msra.mxu0 0.0
    %5197 = vmatpush.msra.mxu0 0.0
    %5198 = vmatpush.msra.mxu0 0.0
    %5199 = vmatpush.msra.mxu0 0.0
    %5200 = vmatpush.msra.mxu0 0.0
    %5201 = vmatpush.msra.mxu0 0.0
    %5202 = vmatpush.msra.mxu0 0.0
    %5203 = vmatpush.msra.mxu0 0.0
    %5204 = vmatpush.msra.mxu0 0.0
    %5205 = vmatpush.msra.mxu0 0.0
    %5206 = vmatpush.msra.mxu0 0.0
    %5207 = vmatpush.msra.mxu0 0.0
    %5208 = vmatpush.msra.mxu0 0.0
    %5209 = vmatpush.msra.mxu0 0.0
    %5210 = vmatpush.msra.mxu0 0.0
    %5211 = vmatpush.msra.mxu0 %v5191
    %5212 = vmatmul.f32.gmra.mxu0 %v5194
    %v5213 = vpop.f32.mrf.mxu0
    %v5214 = vadd.f32 0.0, %v5213
    %5215 = vdwg.mxu0
    %5216 = vrot.lane.b32.xlu0 %v254, 80
    %v5217 = vpop.permute.xlu0 %5216
    %v5220 = vsel %vm961, %v4925, 0
    %5222 = vmatpush.msra.mxu0 0.0
    %5223 = vmatpush.msra.mxu0 0.0
    %5224 = vmatpush.msra.mxu0 0.0
    %5225 = vmatpush.msra.mxu0 0.0
    %5226 = vmatpush.msra.mxu0 0.0
    %5227 = vmatpush.msra.mxu0 0.0
    %5228 = vmatpush.msra.mxu0 0.0
    %5229 = vmatpush.msra.mxu0 0.0
    %5230 = vmatpush.msra.mxu0 0.0
    %5231 = vmatpush.msra.mxu0 0.0
    %5232 = vmatpush.msra.mxu0 0.0
    %5233 = vmatpush.msra.mxu0 0.0
    %5234 = vmatpush.msra.mxu0 0.0
    %5235 = vmatpush.msra.mxu0 0.0
    %5236 = vmatpush.msra.mxu0 0.0
    %5237 = vmatpush.msra.mxu0 %v5217
    %5238 = vmatmul.f32.gmra.mxu0 %v5220
    %v5239 = vpop.f32.mrf.mxu0
    %v5240 = vadd.f32 0.0, %v5239
    %5241 = vdwg.mxu0
    %5242 = vrot.lane.b32.xlu0 %v257, 80
    %v5243 = vpop.permute.xlu0 %5242
    %v5246 = vsel %vm961, %v4926, 0
    %5248 = vmatpush.msra.mxu0 0.0
    %5249 = vmatpush.msra.mxu0 0.0
    %5250 = vmatpush.msra.mxu0 0.0
    %5251 = vmatpush.msra.mxu0 0.0
    %5252 = vmatpush.msra.mxu0 0.0
    %5253 = vmatpush.msra.mxu0 0.0
    %5254 = vmatpush.msra.mxu0 0.0
    %5255 = vmatpush.msra.mxu0 0.0
    %5256 = vmatpush.msra.mxu0 0.0
    %5257 = vmatpush.msra.mxu0 0.0
    %5258 = vmatpush.msra.mxu0 0.0
    %5259 = vmatpush.msra.mxu0 0.0
    %5260 = vmatpush.msra.mxu0 0.0
    %5261 = vmatpush.msra.mxu0 0.0
    %5262 = vmatpush.msra.mxu0 0.0
    %5263 = vmatpush.msra.mxu0 %v5243
    %5264 = vmatmul.f32.gmra.mxu0 %v5246
    %v5265 = vpop.f32.mrf.mxu0
    %v5266 = vadd.f32 0.0, %v5265
    %5267 = vdwg.mxu0
    %5268 = vrot.lane.b32.xlu0 %v260, 80
    %v5269 = vpop.permute.xlu0 %5268
    %v5272 = vsel %vm961, %v4927, 0
    %5274 = vmatpush.msra.mxu0 0.0
    %5275 = vmatpush.msra.mxu0 0.0
    %5276 = vmatpush.msra.mxu0 0.0
    %5277 = vmatpush.msra.mxu0 0.0
    %5278 = vmatpush.msra.mxu0 0.0
    %5279 = vmatpush.msra.mxu0 0.0
    %5280 = vmatpush.msra.mxu0 0.0
    %5281 = vmatpush.msra.mxu0 0.0
    %5282 = vmatpush.msra.mxu0 0.0
    %5283 = vmatpush.msra.mxu0 0.0
    %5284 = vmatpush.msra.mxu0 0.0
    %5285 = vmatpush.msra.mxu0 0.0
    %5286 = vmatpush.msra.mxu0 0.0
    %5287 = vmatpush.msra.mxu0 0.0
    %5288 = vmatpush.msra.mxu0 0.0
    %5289 = vmatpush.msra.mxu0 %v5269
    %5290 = vmatmul.f32.gmra.mxu0 %v5272
    %v5291 = vpop.f32.mrf.mxu0
    %v5292 = vadd.f32 0.0, %v5291
    %5293 = vdwg.mxu0
    %5294 = vrot.lane.b32.xlu0 %v263, 80
    %v5295 = vpop.permute.xlu0 %5294
    %v5298 = vsel %vm961, %v4928, 0
    %5300 = vmatpush.msra.mxu0 0.0
    %5301 = vmatpush.msra.mxu0 0.0
    %5302 = vmatpush.msra.mxu0 0.0
    %5303 = vmatpush.msra.mxu0 0.0
    %5304 = vmatpush.msra.mxu0 0.0
    %5305 = vmatpush.msra.mxu0 0.0
    %5306 = vmatpush.msra.mxu0 0.0
    %5307 = vmatpush.msra.mxu0 0.0
    %5308 = vmatpush.msra.mxu0 0.0
    %5309 = vmatpush.msra.mxu0 0.0
    %5310 = vmatpush.msra.mxu0 0.0
    %5311 = vmatpush.msra.mxu0 0.0
    %5312 = vmatpush.msra.mxu0 0.0
    %5313 = vmatpush.msra.mxu0 0.0
    %5314 = vmatpush.msra.mxu0 0.0
    %5315 = vmatpush.msra.mxu0 %v5295
    %5316 = vmatmul.f32.gmra.mxu0 %v5298
    %v5317 = vpop.f32.mrf.mxu0
    %v5318 = vadd.f32 0.0, %v5317
    %5319 = vdwg.mxu0
    %5320 = vrot.lane.b32.xlu0 %v266, 80
    %v5321 = vpop.permute.xlu0 %5320
    %v5324 = vsel %vm961, %v4929, 0
    %5326 = vmatpush.msra.mxu0 0.0
    %5327 = vmatpush.msra.mxu0 0.0
    %5328 = vmatpush.msra.mxu0 0.0
    %5329 = vmatpush.msra.mxu0 0.0
    %5330 = vmatpush.msra.mxu0 0.0
    %5331 = vmatpush.msra.mxu0 0.0
    %5332 = vmatpush.msra.mxu0 0.0
    %5333 = vmatpush.msra.mxu0 0.0
    %5334 = vmatpush.msra.mxu0 0.0
    %5335 = vmatpush.msra.mxu0 0.0
    %5336 = vmatpush.msra.mxu0 0.0
    %5337 = vmatpush.msra.mxu0 0.0
    %5338 = vmatpush.msra.mxu0 0.0
    %5339 = vmatpush.msra.mxu0 0.0
    %5340 = vmatpush.msra.mxu0 0.0
    %5341 = vmatpush.msra.mxu0 %v5321
    %5342 = vmatmul.f32.gmra.mxu0 %v5324
    %v5343 = vpop.f32.mrf.mxu0
    %v5344 = vadd.f32 0.0, %v5343
    %5345 = vdwg.mxu0
    %5362 = vrot.lane.b32.xlu0 %v2475, 16
    %v5363 = vpop.permute.xlu0 %5362
    %5364 = vrot.lane.b32.xlu0 %v2502, 16
    %v5365 = vpop.permute.xlu0 %5364
    %5366 = vrot.lane.b32.xlu0 %v2529, 16
    %v5367 = vpop.permute.xlu0 %5366
    %5368 = vrot.lane.b32.xlu0 %v2556, 16
    %v5369 = vpop.permute.xlu0 %5368
    %5370 = vrot.lane.b32.xlu0 %v2583, 16
    %v5371 = vpop.permute.xlu0 %5370
    %5372 = vrot.lane.b32.xlu0 %v2610, 16
    %v5373 = vpop.permute.xlu0 %5372
    %5374 = vrot.lane.b32.xlu0 %v2637, 16
    %v5375 = vpop.permute.xlu0 %5374
    %5376 = vrot.lane.b32.xlu0 %v2664, 16
    %v5377 = vpop.permute.xlu0 %5376
    %5378 = vrot.lane.b32.xlu0 %v2691, 16
    %v5379 = vpop.permute.xlu0 %5378
    %5380 = vrot.lane.b32.xlu0 %v2718, 16
    %v5381 = vpop.permute.xlu0 %5380
    %5382 = vrot.lane.b32.xlu0 %v2745, 16
    %v5383 = vpop.permute.xlu0 %5382
    %5384 = vrot.lane.b32.xlu0 %v2772, 16
    %v5385 = vpop.permute.xlu0 %5384
    %5386 = vrot.lane.b32.xlu0 %v2799, 16
    %v5387 = vpop.permute.xlu0 %5386
    %5388 = vrot.lane.b32.xlu0 %v2826, 16
    %v5389 = vpop.permute.xlu0 %5388
    %5390 = vrot.lane.b32.xlu0 %v2853, 16
    %v5391 = vpop.permute.xlu0 %5390
    %5392 = vrot.lane.b32.xlu0 %v2880, 16
    %v5393 = vpop.permute.xlu0 %5392
    %5426 = vrot.lane.b32.xlu0 %v3722, 32
    %v5427 = vpop.permute.xlu0 %5426
    %5428 = vrot.lane.b32.xlu0 %v3748, 32
    %v5429 = vpop.permute.xlu0 %5428
    %5430 = vrot.lane.b32.xlu0 %v3774, 32
    %v5431 = vpop.permute.xlu0 %5430
    %5432 = vrot.lane.b32.xlu0 %v3800, 32
    %v5433 = vpop.permute.xlu0 %5432
    %5434 = vrot.lane.b32.xlu0 %v3826, 32
    %v5435 = vpop.permute.xlu0 %5434
    %5436 = vrot.lane.b32.xlu0 %v3852, 32
    %v5437 = vpop.permute.xlu0 %5436
    %5438 = vrot.lane.b32.xlu0 %v3878, 32
    %v5439 = vpop.permute.xlu0 %5438
    %5440 = vrot.lane.b32.xlu0 %v3904, 32
    %v5441 = vpop.permute.xlu0 %5440
    %5442 = vrot.lane.b32.xlu0 %v3930, 32
    %v5443 = vpop.permute.xlu0 %5442
    %5444 = vrot.lane.b32.xlu0 %v3956, 32
    %v5445 = vpop.permute.xlu0 %5444
    %5446 = vrot.lane.b32.xlu0 %v3982, 32
    %v5447 = vpop.permute.xlu0 %5446
    %5448 = vrot.lane.b32.xlu0 %v4008, 32
    %v5449 = vpop.permute.xlu0 %5448
    %5450 = vrot.lane.b32.xlu0 %v4034, 32
    %v5451 = vpop.permute.xlu0 %5450
    %5452 = vrot.lane.b32.xlu0 %v4060, 32
    %v5453 = vpop.permute.xlu0 %5452
    %5454 = vrot.lane.b32.xlu0 %v4086, 32
    %v5455 = vpop.permute.xlu0 %5454
    %5456 = vrot.lane.b32.xlu0 %v4112, 32
    %v5457 = vpop.permute.xlu0 %5456
    %5490 = vrot.lane.b32.xlu0 %v4954, 48
    %v5491 = vpop.permute.xlu0 %5490
    %5492 = vrot.lane.b32.xlu0 %v4980, 48
    %v5493 = vpop.permute.xlu0 %5492
    %5494 = vrot.lane.b32.xlu0 %v5006, 48
    %v5495 = vpop.permute.xlu0 %5494
    %5496 = vrot.lane.b32.xlu0 %v5032, 48
    %v5497 = vpop.permute.xlu0 %5496
    %5498 = vrot.lane.b32.xlu0 %v5058, 48
    %v5499 = vpop.permute.xlu0 %5498
    %5500 = vrot.lane.b32.xlu0 %v5084, 48
    %v5501 = vpop.permute.xlu0 %5500
    %5502 = vrot.lane.b32.xlu0 %v5110, 48
    %v5503 = vpop.permute.xlu0 %5502
    %5504 = vrot.lane.b32.xlu0 %v5136, 48
    %v5505 = vpop.permute.xlu0 %5504
    %5506 = vrot.lane.b32.xlu0 %v5162, 48
    %v5507 = vpop.permute.xlu0 %5506
    %5508 = vrot.lane.b32.xlu0 %v5188, 48
    %v5509 = vpop.permute.xlu0 %5508
    %5510 = vrot.lane.b32.xlu0 %v5214, 48
    %v5511 = vpop.permute.xlu0 %5510
    %5512 = vrot.lane.b32.xlu0 %v5240, 48
    %v5513 = vpop.permute.xlu0 %5512
    %5514 = vrot.lane.b32.xlu0 %v5266, 48
    %v5515 = vpop.permute.xlu0 %5514
    %5516 = vrot.lane.b32.xlu0 %v5292, 48
    %v5517 = vpop.permute.xlu0 %5516
    %5518 = vrot.lane.b32.xlu0 %v5318, 48
    %v5519 = vpop.permute.xlu0 %5518
    %5520 = vrot.lane.b32.xlu0 %v5344, 48
    %v5521 = vpop.permute.xlu0 %5520
    %v5538 = vsel %vm467, %v1287, %v5363
    %v5539 = vsel %vm467, %v1310, %v5365
    %v5540 = vsel %vm467, %v1333, %v5367
    %v5541 = vsel %vm467, %v1356, %v5369
    %v5542 = vsel %vm467, %v1379, %v5371
    %v5543 = vsel %vm467, %v1402, %v5373
    %v5544 = vsel %vm467, %v1425, %v5375
    %v5545 = vsel %vm467, %v1448, %v5377
    %v5546 = vsel %vm467, %v1471, %v5379
    %v5547 = vsel %vm467, %v1494, %v5381
    %v5548 = vsel %vm467, %v1517, %v5383
    %v5549 = vsel %vm467, %v1540, %v5385
    %v5550 = vsel %vm467, %v1563, %v5387
    %v5551 = vsel %vm467, %v1586, %v5389
    %v5552 = vsel %vm467, %v1609, %v5391
    %v5553 = vsel %vm467, %v1632, %v5393
    %vm5554 = vcmask 261120
    %v5555 = vsel %vm5554, %v5538, %v5427
    %v5556 = vsel %vm5554, %v5539, %v5429
    %v5557 = vsel %vm5554, %v5540, %v5431
    %v5558 = vsel %vm5554, %v5541, %v5433
    %v5559 = vsel %vm5554, %v5542, %v5435
    %v5560 = vsel %vm5554, %v5543, %v5437
    %v5561 = vsel %vm5554, %v5544, %v5439
    %v5562 = vsel %vm5554, %v5545, %v5441
    %v5563 = vsel %vm5554, %v5546, %v5443
    %v5564 = vsel %vm5554, %v5547, %v5445
    %v5565 = vsel %vm5554, %v5548, %v5447
    %v5566 = vsel %vm5554, %v5549, %v5449
    %v5567 = vsel %vm5554, %v5550, %v5451
    %v5568 = vsel %vm5554, %v5551, %v5453
    %v5569 = vsel %vm5554, %v5552, %v5455
    %v5570 = vsel %vm5554, %v5553, %v5457
    %vm5571 = vcmask 392192
    %v5572 = vsel %vm5571, %v5555, %v5491
    %v5573 = vsel %vm5571, %v5556, %v5493
    %v5574 = vsel %vm5571, %v5557, %v5495
    %v5575 = vsel %vm5571, %v5558, %v5497
    %v5576 = vsel %vm5571, %v5559, %v5499
    %v5577 = vsel %vm5571, %v5560, %v5501
    %v5578 = vsel %vm5571, %v5561, %v5503
    %v5579 = vsel %vm5571, %v5562, %v5505
    %v5580 = vsel %vm5571, %v5563, %v5507
    %v5581 = vsel %vm5571, %v5564, %v5509
    %v5582 = vsel %vm5571, %v5565, %v5511
    %v5583 = vsel %vm5571, %v5566, %v5513
    %v5584 = vsel %vm5571, %v5567, %v5515
    %v5585 = vsel %vm5571, %v5568, %v5517
    %v5586 = vsel %vm5571, %v5569, %v5519
    %v5587 = vsel %vm5571, %v5570, %v5521
    %v5588 = vld [vmem:[%s4] sm:$0x1]
    %v5589 = vld [vmem:[%s4 + $0x1] sm:$0x1]
    %v5590 = vld [vmem:[%s3] sm:$0xff]
    %v5591 = vld [vmem:[%s3 + $0x8] sm:$0xff]
    %v5592 = vld [vmem:[%s3 + $0x10] sm:$0xff]
    %v5593 = vld [vmem:[%s3 + $0x18] sm:$0xff]
    %v5594 = vld [vmem:[%s3 + $0x20] sm:$0xff]
    %v5595 = vld [vmem:[%s3 + $0x28] sm:$0xff]
    %v5596 = vld [vmem:[%s3 + $0x30] sm:$0xff]
    %v5597 = vld [vmem:[%s3 + $0x38] sm:$0xff]
    %v5598 = vperm.slane %v5588, 0
    %v5600 = vsel %vm89, %v5572, 0
    %v5603 = vsel %vm89, %v5573, 0
    %v5606 = vsel %vm89, %v5574, 0
    %v5609 = vsel %vm89, %v5575, 0
    %v5612 = vsel %vm89, %v5576, 0
    %v5615 = vsel %vm89, %v5577, 0
    %v5618 = vsel %vm89, %v5578, 0
    %v5621 = vsel %vm89, %v5579, 0
    %v5624 = vsel %vm89, %v5580, 0
    %v5627 = vsel %vm89, %v5581, 0
    %v5630 = vsel %vm89, %v5582, 0
    %v5633 = vsel %vm89, %v5583, 0
    %v5636 = vsel %vm89, %v5584, 0
    %v5639 = vsel %vm89, %v5585, 0
    %v5642 = vsel %vm89, %v5586, 0
    %v5645 = vsel %vm89, %v5587, 0
    %5647 = vmatpush.msra.mxu0 0.0
    %5648 = vmatpush.msra.mxu0 0.0
    %5649 = vmatpush.msra.mxu0 0.0
    %5650 = vmatpush.msra.mxu0 0.0
    %5651 = vmatpush.msra.mxu0 0.0
    %5652 = vmatpush.msra.mxu0 0.0
    %5653 = vmatpush.msra.mxu0 0.0
    %5654 = vmatpush.msra.mxu0 0.0
    %5655 = vmatpush.msra.mxu0 %v5597
    %5656 = vmatpush.msra.mxu0 %v5596
    %5657 = vmatpush.msra.mxu0 %v5595
    %5658 = vmatpush.msra.mxu0 %v5594
    %5659 = vmatpush.msra.mxu0 %v5593
    %5660 = vmatpush.msra.mxu0 %v5592
    %5661 = vmatpush.msra.mxu0 %v5591
    %5662 = vmatpush.msra.mxu0 %v5590
    %5663 = vmatmul.f32.gmra.mxu0 %v5600
    %v5664 = vpop.f32.mrf.mxu0
    %v5665 = vadd.f32 %v5598, %v5664
    %5666 = vmatmul.f32.gmra.mxu0 %v5603
    %v5667 = vpop.f32.mrf.mxu0
    %v5668 = vadd.f32 %v5598, %v5667
    %5669 = vmatmul.f32.gmra.mxu0 %v5606
    %v5670 = vpop.f32.mrf.mxu0
    %v5671 = vadd.f32 %v5598, %v5670
    %5672 = vmatmul.f32.gmra.mxu0 %v5609
    %v5673 = vpop.f32.mrf.mxu0
    %v5674 = vadd.f32 %v5598, %v5673
    %5675 = vmatmul.f32.gmra.mxu0 %v5612
    %v5676 = vpop.f32.mrf.mxu0
    %v5677 = vadd.f32 %v5598, %v5676
    %5678 = vmatmul.f32.gmra.mxu0 %v5615
    %v5679 = vpop.f32.mrf.mxu0
    %v5680 = vadd.f32 %v5598, %v5679
    %5681 = vmatmul.f32.gmra.mxu0 %v5618
    %v5682 = vpop.f32.mrf.mxu0
    %v5683 = vadd.f32 %v5598, %v5682
    %5684 = vmatmul.f32.gmra.mxu0 %v5621
    %v5685 = vpop.f32.mrf.mxu0
    %v5686 = vadd.f32 %v5598, %v5685
    %5687 = vmatmul.f32.gmra.mxu0 %v5624
    %v5688 = vpop.f32.mrf.mxu0
    %v5689 = vadd.f32 %v5598, %v5688
    %5690 = vmatmul.f32.gmra.mxu0 %v5627
    %v5691 = vpop.f32.mrf.mxu0
    %v5692 = vadd.f32 %v5598, %v5691
    %5693 = vmatmul.f32.gmra.mxu0 %v5630
    %v5694 = vpop.f32.mrf.mxu0
    %v5695 = vadd.f32 %v5598, %v5694
    %5696 = vmatmul.f32.gmra.mxu0 %v5633
    %v5697 = vpop.f32.mrf.mxu0
    %v5698 = vadd.f32 %v5598, %v5697
    %5699 = vmatmul.f32.gmra.mxu0 %v5636
    %v5700 = vpop.f32.mrf.mxu0
    %v5701 = vadd.f32 %v5598, %v5700
    %5702 = vmatmul.f32.gmra.mxu0 %v5639
    %v5703 = vpop.f32.mrf.mxu0
    %v5704 = vadd.f32 %v5598, %v5703
    %5705 = vmatmul.f32.gmra.mxu0 %v5642
    %v5706 = vpop.f32.mrf.mxu0
    %v5707 = vadd.f32 %v5598, %v5706
    %5708 = vmatmul.f32.gmra.mxu0 %v5645
    %v5709 = vpop.f32.mrf.mxu0
    %v5710 = vadd.f32 %v5598, %v5709
    %5711 = vdwg.mxu0
    %v5712 = vtanh.pop %v5665
    %v5713 = vtanh.pop %v5668
    %v5714 = vtanh.pop %v5671
    %v5715 = vtanh.pop %v5674
    %v5716 = vtanh.pop %v5677
    %v5717 = vtanh.pop %v5680
    %v5718 = vtanh.pop %v5683
    %v5719 = vtanh.pop %v5686
    %v5720 = vtanh.pop %v5689
    %v5721 = vtanh.pop %v5692
    %v5722 = vtanh.pop %v5695
    %v5723 = vtanh.pop %v5698
    %v5724 = vtanh.pop %v5701
    %v5725 = vtanh.pop %v5704
    %v5726 = vtanh.pop %v5707
    %v5727 = vtanh.pop %v5710
    %v5728 = vperm.slane %v5589, 0
    %v5729 = vmul.f32 %v5712, %v5728
    %v5730 = vmul.f32 %v5713, %v5728
    %v5731 = vmul.f32 %v5714, %v5728
    %v5732 = vmul.f32 %v5715, %v5728
    %v5733 = vmul.f32 %v5716, %v5728
    %v5734 = vmul.f32 %v5717, %v5728
    %v5735 = vmul.f32 %v5718, %v5728
    %v5736 = vmul.f32 %v5719, %v5728
    %v5737 = vmul.f32 %v5720, %v5728
    %v5738 = vmul.f32 %v5721, %v5728
    %v5739 = vmul.f32 %v5722, %v5728
    %v5740 = vmul.f32 %v5723, %v5728
    %v5741 = vmul.f32 %v5724, %v5728
    %v5742 = vmul.f32 %v5725, %v5728
    %v5743 = vmul.f32 %v5726, %v5728
    %v5744 = vmul.f32 %v5727, %v5728
    %v5745 = vsel %vm5554, %v5729, 0.0
    %5746 = vadd.xlane.f32.xlu0 %v5745
    %v5747 = vpop.xlane.xlu0 %5746
    %v5748 = vsel %vm5554, %v5730, 0.0
    %5749 = vadd.xlane.f32.xlu0 %v5748
    %v5750 = vpop.xlane.xlu0 %5749
    %v5751 = vsel %vm5554, %v5731, 0.0
    %5752 = vadd.xlane.f32.xlu0 %v5751
    %v5753 = vpop.xlane.xlu0 %5752
    %v5754 = vsel %vm5554, %v5732, 0.0
    %5755 = vadd.xlane.f32.xlu0 %v5754
    %v5756 = vpop.xlane.xlu0 %5755
    %v5757 = vsel %vm5554, %v5733, 0.0
    %5758 = vadd.xlane.f32.xlu0 %v5757
    %v5759 = vpop.xlane.xlu0 %5758
    %v5760 = vsel %vm5554, %v5734, 0.0
    %5761 = vadd.xlane.f32.xlu0 %v5760
    %v5762 = vpop.xlane.xlu0 %5761
    %v5763 = vsel %vm5554, %v5735, 0.0
    %5764 = vadd.xlane.f32.xlu0 %v5763
    %v5765 = vpop.xlane.xlu0 %5764
    %v5766 = vsel %vm5554, %v5736, 0.0
    %5767 = vadd.xlane.f32.xlu0 %v5766
    %v5768 = vpop.xlane.xlu0 %5767
    %v5769 = vsel %vm5554, %v5737, 0.0
    %5770 = vadd.xlane.f32.xlu0 %v5769
    %v5771 = vpop.xlane.xlu0 %5770
    %v5772 = vsel %vm5554, %v5738, 0.0
    %5773 = vadd.xlane.f32.xlu0 %v5772
    %v5774 = vpop.xlane.xlu0 %5773
    %v5775 = vsel %vm5554, %v5739, 0.0
    %5776 = vadd.xlane.f32.xlu0 %v5775
    %v5777 = vpop.xlane.xlu0 %5776
    %v5778 = vsel %vm5554, %v5740, 0.0
    %5779 = vadd.xlane.f32.xlu0 %v5778
    %v5780 = vpop.xlane.xlu0 %5779
    %v5781 = vsel %vm5554, %v5741, 0.0
    %5782 = vadd.xlane.f32.xlu0 %v5781
    %v5783 = vpop.xlane.xlu0 %5782
    %v5784 = vsel %vm5554, %v5742, 0.0
    %5785 = vadd.xlane.f32.xlu0 %v5784
    %v5786 = vpop.xlane.xlu0 %5785
    %v5787 = vsel %vm5554, %v5743, 0.0
    %5788 = vadd.xlane.f32.xlu0 %v5787
    %v5789 = vpop.xlane.xlu0 %5788
    %v5790 = vsel %vm5554, %v5744, 0.0
    %5791 = vadd.xlane.f32.xlu0 %v5790
    %v5792 = vpop.xlane.xlu0 %5791
    %s5793 = sld [smem:[#allocation2]]
    %v5794 = vstv %s5793
    %v5795 = vadd.f32 %v5747, %v5794
    %v5796 = vadd.f32 %v5750, %v5794
    %v5797 = vadd.f32 %v5753, %v5794
    %v5798 = vadd.f32 %v5756, %v5794
    %v5799 = vadd.f32 %v5759, %v5794
    %v5800 = vadd.f32 %v5762, %v5794
    %v5801 = vadd.f32 %v5765, %v5794
    %v5802 = vadd.f32 %v5768, %v5794
    %v5803 = vadd.f32 %v5771, %v5794
    %v5804 = vadd.f32 %v5774, %v5794
    %v5805 = vadd.f32 %v5777, %v5794
    %v5806 = vadd.f32 %v5780, %v5794
    %v5807 = vadd.f32 %v5783, %v5794
    %v5808 = vadd.f32 %v5786, %v5794
    %v5809 = vadd.f32 %v5789, %v5794
    %v5810 = vadd.f32 %v5792, %v5794
    %v5811 = vmul.f32 %v5795, 1.442695
    %v5812 = vpow.pop %v5811
    %v5813 = vmul.f32 %v5796, 1.442695
    %v5814 = vpow.pop %v5813
    %v5815 = vmul.f32 %v5797, 1.442695
    %v5816 = vpow.pop %v5815
    %v5817 = vmul.f32 %v5798, 1.442695
    %v5818 = vpow.pop %v5817
    %v5819 = vmul.f32 %v5799, 1.442695
    %v5820 = vpow.pop %v5819
    %v5821 = vmul.f32 %v5800, 1.442695
    %v5822 = vpow.pop %v5821
    %v5823 = vmul.f32 %v5801, 1.442695
    %v5824 = vpow.pop %v5823
    %v5825 = vmul.f32 %v5802, 1.442695
    %v5826 = vpow.pop %v5825
    %v5827 = vmul.f32 %v5803, 1.442695
    %v5828 = vpow.pop %v5827
    %v5829 = vmul.f32 %v5804, 1.442695
    %v5830 = vpow.pop %v5829
    %v5831 = vmul.f32 %v5805, 1.442695
    %v5832 = vpow.pop %v5831
    %v5833 = vmul.f32 %v5806, 1.442695
    %v5834 = vpow.pop %v5833
    %v5835 = vmul.f32 %v5807, 1.442695
    %v5836 = vpow.pop %v5835
    %v5837 = vmul.f32 %v5808, 1.442695
    %v5838 = vpow.pop %v5837
    %v5839 = vmul.f32 %v5809, 1.442695
    %v5840 = vpow.pop %v5839
    %v5841 = vmul.f32 %v5810, 1.442695
    %v5842 = vpow.pop %v5841
    %v5843 = vmul.f32 %v5812, %v448
    %v5844 = vmul.f32 %v5814, %v449
    %v5845 = vmul.f32 %v5816, %v450
    %v5846 = vmul.f32 %v5818, %v451
    %v5847 = vmul.f32 %v5820, %v452
    %v5848 = vmul.f32 %v5822, %v453
    %v5849 = vmul.f32 %v5824, %v454
    %v5850 = vmul.f32 %v5826, %v455
    %v5851 = vmul.f32 %v5828, %v456
    %v5852 = vmul.f32 %v5830, %v457
    %v5853 = vmul.f32 %v5832, %v458
    %v5854 = vmul.f32 %v5834, %v459
    %v5855 = vmul.f32 %v5836, %v460
    %v5856 = vmul.f32 %v5838, %v461
    %v5857 = vmul.f32 %v5840, %v462
    %v5858 = vmul.f32 %v5842, %v463
    %vm5859 = vcmask 7168
    %v5860 = vsel %vm5859, %v5843, 0.0
    %v5861 = vrot.slane %v5860, 4
    %v5862 = vadd.f32 %v5860, %v5861
    %v5863 = vrot.slane %v5862, 2
    %v5864 = vadd.f32 %v5862, %v5863
    %v5865 = vrot.slane %v5864, 1
    %v5866 = vadd.f32 %v5864, %v5865
    %v5867 = vsel %vm5859, %v5844, 0.0
    %v5868 = vrot.slane %v5867, 4
    %v5869 = vadd.f32 %v5867, %v5868
    %v5870 = vrot.slane %v5869, 2
    %v5871 = vadd.f32 %v5869, %v5870
    %v5872 = vrot.slane %v5871, 1
    %v5873 = vadd.f32 %v5871, %v5872
    %v5874 = vsel %vm5859, %v5845, 0.0
    %v5875 = vrot.slane %v5874, 4
    %v5876 = vadd.f32 %v5874, %v5875
    %v5877 = vrot.slane %v5876, 2
    %v5878 = vadd.f32 %v5876, %v5877
    %v5879 = vrot.slane %v5878, 1
    %v5880 = vadd.f32 %v5878, %v5879
    %v5881 = vsel %vm5859, %v5846, 0.0
    %v5882 = vrot.slane %v5881, 4
    %v5883 = vadd.f32 %v5881, %v5882
    %v5884 = vrot.slane %v5883, 2
    %v5885 = vadd.f32 %v5883, %v5884
    %v5886 = vrot.slane %v5885, 1
    %v5887 = vadd.f32 %v5885, %v5886
    %v5888 = vsel %vm5859, %v5847, 0.0
    %v5889 = vrot.slane %v5888, 4
    %v5890 = vadd.f32 %v5888, %v5889
    %v5891 = vrot.slane %v5890, 2
    %v5892 = vadd.f32 %v5890, %v5891
    %v5893 = vrot.slane %v5892, 1
    %v5894 = vadd.f32 %v5892, %v5893
    %v5895 = vsel %vm5859, %v5848, 0.0
    %v5896 = vrot.slane %v5895, 4
    %v5897 = vadd.f32 %v5895, %v5896
    %v5898 = vrot.slane %v5897, 2
    %v5899 = vadd.f32 %v5897, %v5898
    %v5900 = vrot.slane %v5899, 1
    %v5901 = vadd.f32 %v5899, %v5900
    %v5902 = vsel %vm5859, %v5849, 0.0
    %v5903 = vrot.slane %v5902, 4
    %v5904 = vadd.f32 %v5902, %v5903
    %v5905 = vrot.slane %v5904, 2
    %v5906 = vadd.f32 %v5904, %v5905
    %v5907 = vrot.slane %v5906, 1
    %v5908 = vadd.f32 %v5906, %v5907
    %v5909 = vsel %vm5859, %v5850, 0.0
    %v5910 = vrot.slane %v5909, 4
    %v5911 = vadd.f32 %v5909, %v5910
    %v5912 = vrot.slane %v5911, 2
    %v5913 = vadd.f32 %v5911, %v5912
    %v5914 = vrot.slane %v5913, 1
    %v5915 = vadd.f32 %v5913, %v5914
    %v5916 = vsel %vm5859, %v5851, 0.0
    %v5917 = vrot.slane %v5916, 4
    %v5918 = vadd.f32 %v5916, %v5917
    %v5919 = vrot.slane %v5918, 2
    %v5920 = vadd.f32 %v5918, %v5919
    %v5921 = vrot.slane %v5920, 1
    %v5922 = vadd.f32 %v5920, %v5921
    %v5923 = vsel %vm5859, %v5852, 0.0
    %v5924 = vrot.slane %v5923, 4
    %v5925 = vadd.f32 %v5923, %v5924
    %v5926 = vrot.slane %v5925, 2
    %v5927 = vadd.f32 %v5925, %v5926
    %v5928 = vrot.slane %v5927, 1
    %v5929 = vadd.f32 %v5927, %v5928
    %v5930 = vsel %vm5859, %v5853, 0.0
    %v5931 = vrot.slane %v5930, 4
    %v5932 = vadd.f32 %v5930, %v5931
    %v5933 = vrot.slane %v5932, 2
    %v5934 = vadd.f32 %v5932, %v5933
    %v5935 = vrot.slane %v5934, 1
    %v5936 = vadd.f32 %v5934, %v5935
    %v5937 = vsel %vm5859, %v5854, 0.0
    %v5938 = vrot.slane %v5937, 4
    %v5939 = vadd.f32 %v5937, %v5938
    %v5940 = vrot.slane %v5939, 2
    %v5941 = vadd.f32 %v5939, %v5940
    %v5942 = vrot.slane %v5941, 1
    %v5943 = vadd.f32 %v5941, %v5942
    %v5944 = vsel %vm5859, %v5855, 0.0
    %v5945 = vrot.slane %v5944, 4
    %v5946 = vadd.f32 %v5944, %v5945
    %v5947 = vrot.slane %v5946, 2
    %v5948 = vadd.f32 %v5946, %v5947
    %v5949 = vrot.slane %v5948, 1
    %v5950 = vadd.f32 %v5948, %v5949
    %v5951 = vsel %vm5859, %v5856, 0.0
    %v5952 = vrot.slane %v5951, 4
    %v5953 = vadd.f32 %v5951, %v5952
    %v5954 = vrot.slane %v5953, 2
    %v5955 = vadd.f32 %v5953, %v5954
    %v5956 = vrot.slane %v5955, 1
    %v5957 = vadd.f32 %v5955, %v5956
    %v5958 = vsel %vm5859, %v5857, 0.0
    %v5959 = vrot.slane %v5958, 4
    %v5960 = vadd.f32 %v5958, %v5959
    %v5961 = vrot.slane %v5960, 2
    %v5962 = vadd.f32 %v5960, %v5961
    %v5963 = vrot.slane %v5962, 1
    %v5964 = vadd.f32 %v5962, %v5963
    %v5965 = vsel %vm5859, %v5858, 0.0
    %v5966 = vrot.slane %v5965, 4
    %v5967 = vadd.f32 %v5965, %v5966
    %v5968 = vrot.slane %v5967, 2
    %v5969 = vadd.f32 %v5967, %v5968
    %v5970 = vrot.slane %v5969, 1
    %v5971 = vadd.f32 %v5969, %v5970
    %v5972 = vadd.f32 %v5866, 1e-08
    %v5973 = vadd.f32 %v5873, 1e-08
    %v5974 = vadd.f32 %v5880, 1e-08
    %v5975 = vadd.f32 %v5887, 1e-08
    %v5976 = vadd.f32 %v5894, 1e-08
    %v5977 = vadd.f32 %v5901, 1e-08
    %v5978 = vadd.f32 %v5908, 1e-08
    %v5979 = vadd.f32 %v5915, 1e-08
    %v5980 = vadd.f32 %v5922, 1e-08
    %v5981 = vadd.f32 %v5929, 1e-08
    %v5982 = vadd.f32 %v5936, 1e-08
    %v5983 = vadd.f32 %v5943, 1e-08
    %v5984 = vadd.f32 %v5950, 1e-08
    %v5985 = vadd.f32 %v5957, 1e-08
    %v5986 = vadd.f32 %v5964, 1e-08
    %v5987 = vadd.f32 %v5971, 1e-08
    %v5988 = vrcp.pop %v5972
    %v5989 = vmul.f32 %v5972, %v5988
    %v5990 = vsub.f32 1.0, %v5989
    %v5991 = vmul.f32 %v5988, %v5990
    %v5992 = vadd.f32 %v5988, %v5991
    %vm5993 = vweird.f32 %v5972
    %vm5994 = vweird.f32 %v5988
    %vm5995 = vmor %vm5993, %vm5994
    %v5996 = vsel %vm5995, %v5988, %v5992
    %v5997 = vand.u32 2147483647, %v5972
    %vm5998 = vcmp.eq.f32.partialorder %v5997, 8.507059e+37
    %v5999 = vand.u32 %v5972, 2147483648
    %v6000 = vor.u32 1.1754944e-38, %v5999
    %v6001 = vsel %vm5998, %v6000, %v5996
    %v6002 = vrcp.pop %v5973
    %v6003 = vmul.f32 %v5973, %v6002
    %v6004 = vsub.f32 1.0, %v6003
    %v6005 = vmul.f32 %v6002, %v6004
    %v6006 = vadd.f32 %v6002, %v6005
    %vm6007 = vweird.f32 %v5973
    %vm6008 = vweird.f32 %v6002
    %vm6009 = vmor %vm6007, %vm6008
    %v6010 = vsel %vm6009, %v6002, %v6006
    %v6011 = vand.u32 2147483647, %v5973
    %vm6012 = vcmp.eq.f32.partialorder %v6011, 8.507059e+37
    %v6013 = vand.u32 %v5973, 2147483648
    %v6014 = vor.u32 1.1754944e-38, %v6013
    %v6015 = vsel %vm6012, %v6014, %v6010
    %v6016 = vrcp.pop %v5974
    %v6017 = vmul.f32 %v5974, %v6016
    %v6018 = vsub.f32 1.0, %v6017
    %v6019 = vmul.f32 %v6016, %v6018
    %v6020 = vadd.f32 %v6016, %v6019
    %vm6021 = vweird.f32 %v5974
    %vm6022 = vweird.f32 %v6016
    %vm6023 = vmor %vm6021, %vm6022
    %v6024 = vsel %vm6023, %v6016, %v6020
    %v6025 = vand.u32 2147483647, %v5974
    %vm6026 = vcmp.eq.f32.partialorder %v6025, 8.507059e+37
    %v6027 = vand.u32 %v5974, 2147483648
    %v6028 = vor.u32 1.1754944e-38, %v6027
    %v6029 = vsel %vm6026, %v6028, %v6024
    %v6030 = vrcp.pop %v5975
    %v6031 = vmul.f32 %v5975, %v6030
    %v6032 = vsub.f32 1.0, %v6031
    %v6033 = vmul.f32 %v6030, %v6032
    %v6034 = vadd.f32 %v6030, %v6033
    %vm6035 = vweird.f32 %v5975
    %vm6036 = vweird.f32 %v6030
    %vm6037 = vmor %vm6035, %vm6036
    %v6038 = vsel %vm6037, %v6030, %v6034
    %v6039 = vand.u32 2147483647, %v5975
    %vm6040 = vcmp.eq.f32.partialorder %v6039, 8.507059e+37
    %v6041 = vand.u32 %v5975, 2147483648
    %v6042 = vor.u32 1.1754944e-38, %v6041
    %v6043 = vsel %vm6040, %v6042, %v6038
    %v6044 = vrcp.pop %v5976
    %v6045 = vmul.f32 %v5976, %v6044
    %v6046 = vsub.f32 1.0, %v6045
    %v6047 = vmul.f32 %v6044, %v6046
    %v6048 = vadd.f32 %v6044, %v6047
    %vm6049 = vweird.f32 %v5976
    %vm6050 = vweird.f32 %v6044
    %vm6051 = vmor %vm6049, %vm6050
    %v6052 = vsel %vm6051, %v6044, %v6048
    %v6053 = vand.u32 2147483647, %v5976
    %vm6054 = vcmp.eq.f32.partialorder %v6053, 8.507059e+37
    %v6055 = vand.u32 %v5976, 2147483648
    %v6056 = vor.u32 1.1754944e-38, %v6055
    %v6057 = vsel %vm6054, %v6056, %v6052
    %v6058 = vrcp.pop %v5977
    %v6059 = vmul.f32 %v5977, %v6058
    %v6060 = vsub.f32 1.0, %v6059
    %v6061 = vmul.f32 %v6058, %v6060
    %v6062 = vadd.f32 %v6058, %v6061
    %vm6063 = vweird.f32 %v5977
    %vm6064 = vweird.f32 %v6058
    %vm6065 = vmor %vm6063, %vm6064
    %v6066 = vsel %vm6065, %v6058, %v6062
    %v6067 = vand.u32 2147483647, %v5977
    %vm6068 = vcmp.eq.f32.partialorder %v6067, 8.507059e+37
    %v6069 = vand.u32 %v5977, 2147483648
    %v6070 = vor.u32 1.1754944e-38, %v6069
    %v6071 = vsel %vm6068, %v6070, %v6066
    %v6072 = vrcp.pop %v5978
    %v6073 = vmul.f32 %v5978, %v6072
    %v6074 = vsub.f32 1.0, %v6073
    %v6075 = vmul.f32 %v6072, %v6074
    %v6076 = vadd.f32 %v6072, %v6075
    %vm6077 = vweird.f32 %v5978
    %vm6078 = vweird.f32 %v6072
    %vm6079 = vmor %vm6077, %vm6078
    %v6080 = vsel %vm6079, %v6072, %v6076
    %v6081 = vand.u32 2147483647, %v5978
    %vm6082 = vcmp.eq.f32.partialorder %v6081, 8.507059e+37
    %v6083 = vand.u32 %v5978, 2147483648
    %v6084 = vor.u32 1.1754944e-38, %v6083
    %v6085 = vsel %vm6082, %v6084, %v6080
    %v6086 = vrcp.pop %v5979
    %v6087 = vmul.f32 %v5979, %v6086
    %v6088 = vsub.f32 1.0, %v6087
    %v6089 = vmul.f32 %v6086, %v6088
    %v6090 = vadd.f32 %v6086, %v6089
    %vm6091 = vweird.f32 %v5979
    %vm6092 = vweird.f32 %v6086
    %vm6093 = vmor %vm6091, %vm6092
    %v6094 = vsel %vm6093, %v6086, %v6090
    %v6095 = vand.u32 2147483647, %v5979
    %vm6096 = vcmp.eq.f32.partialorder %v6095, 8.507059e+37
    %v6097 = vand.u32 %v5979, 2147483648
    %v6098 = vor.u32 1.1754944e-38, %v6097
    %v6099 = vsel %vm6096, %v6098, %v6094
    %v6100 = vrcp.pop %v5980
    %v6101 = vmul.f32 %v5980, %v6100
    %v6102 = vsub.f32 1.0, %v6101
    %v6103 = vmul.f32 %v6100, %v6102
    %v6104 = vadd.f32 %v6100, %v6103
    %vm6105 = vweird.f32 %v5980
    %vm6106 = vweird.f32 %v6100
    %vm6107 = vmor %vm6105, %vm6106
    %v6108 = vsel %vm6107, %v6100, %v6104
    %v6109 = vand.u32 2147483647, %v5980
    %vm6110 = vcmp.eq.f32.partialorder %v6109, 8.507059e+37
    %v6111 = vand.u32 %v5980, 2147483648
    %v6112 = vor.u32 1.1754944e-38, %v6111
    %v6113 = vsel %vm6110, %v6112, %v6108
    %v6114 = vrcp.pop %v5981
    %v6115 = vmul.f32 %v5981, %v6114
    %v6116 = vsub.f32 1.0, %v6115
    %v6117 = vmul.f32 %v6114, %v6116
    %v6118 = vadd.f32 %v6114, %v6117
    %vm6119 = vweird.f32 %v5981
    %vm6120 = vweird.f32 %v6114
    %vm6121 = vmor %vm6119, %vm6120
    %v6122 = vsel %vm6121, %v6114, %v6118
    %v6123 = vand.u32 2147483647, %v5981
    %vm6124 = vcmp.eq.f32.partialorder %v6123, 8.507059e+37
    %v6125 = vand.u32 %v5981, 2147483648
    %v6126 = vor.u32 1.1754944e-38, %v6125
    %v6127 = vsel %vm6124, %v6126, %v6122
    %v6128 = vrcp.pop %v5982
    %v6129 = vmul.f32 %v5982, %v6128
    %v6130 = vsub.f32 1.0, %v6129
    %v6131 = vmul.f32 %v6128, %v6130
    %v6132 = vadd.f32 %v6128, %v6131
    %vm6133 = vweird.f32 %v5982
    %vm6134 = vweird.f32 %v6128
    %vm6135 = vmor %vm6133, %vm6134
    %v6136 = vsel %vm6135, %v6128, %v6132
    %v6137 = vand.u32 2147483647, %v5982
    %vm6138 = vcmp.eq.f32.partialorder %v6137, 8.507059e+37
    %v6139 = vand.u32 %v5982, 2147483648
    %v6140 = vor.u32 1.1754944e-38, %v6139
    %v6141 = vsel %vm6138, %v6140, %v6136
    %v6142 = vrcp.pop %v5983
    %v6143 = vmul.f32 %v5983, %v6142
    %v6144 = vsub.f32 1.0, %v6143
    %v6145 = vmul.f32 %v6142, %v6144
    %v6146 = vadd.f32 %v6142, %v6145
    %vm6147 = vweird.f32 %v5983
    %vm6148 = vweird.f32 %v6142
    %vm6149 = vmor %vm6147, %vm6148
    %v6150 = vsel %vm6149, %v6142, %v6146
    %v6151 = vand.u32 2147483647, %v5983
    %vm6152 = vcmp.eq.f32.partialorder %v6151, 8.507059e+37
    %v6153 = vand.u32 %v5983, 2147483648
    %v6154 = vor.u32 1.1754944e-38, %v6153
    %v6155 = vsel %vm6152, %v6154, %v6150
    %v6156 = vrcp.pop %v5984
    %v6157 = vmul.f32 %v5984, %v6156
    %v6158 = vsub.f32 1.0, %v6157
    %v6159 = vmul.f32 %v6156, %v6158
    %v6160 = vadd.f32 %v6156, %v6159
    %vm6161 = vweird.f32 %v5984
    %vm6162 = vweird.f32 %v6156
    %vm6163 = vmor %vm6161, %vm6162
    %v6164 = vsel %vm6163, %v6156, %v6160
    %v6165 = vand.u32 2147483647, %v5984
    %vm6166 = vcmp.eq.f32.partialorder %v6165, 8.507059e+37
    %v6167 = vand.u32 %v5984, 2147483648
    %v6168 = vor.u32 1.1754944e-38, %v6167
    %v6169 = vsel %vm6166, %v6168, %v6164
    %v6170 = vrcp.pop %v5985
    %v6171 = vmul.f32 %v5985, %v6170
    %v6172 = vsub.f32 1.0, %v6171
    %v6173 = vmul.f32 %v6170, %v6172
    %v6174 = vadd.f32 %v6170, %v6173
    %vm6175 = vweird.f32 %v5985
    %vm6176 = vweird.f32 %v6170
    %vm6177 = vmor %vm6175, %vm6176
    %v6178 = vsel %vm6177, %v6170, %v6174
    %v6179 = vand.u32 2147483647, %v5985
    %vm6180 = vcmp.eq.f32.partialorder %v6179, 8.507059e+37
    %v6181 = vand.u32 %v5985, 2147483648
    %v6182 = vor.u32 1.1754944e-38, %v6181
    %v6183 = vsel %vm6180, %v6182, %v6178
    %v6184 = vrcp.pop %v5986
    %v6185 = vmul.f32 %v5986, %v6184
    %v6186 = vsub.f32 1.0, %v6185
    %v6187 = vmul.f32 %v6184, %v6186
    %v6188 = vadd.f32 %v6184, %v6187
    %vm6189 = vweird.f32 %v5986
    %vm6190 = vweird.f32 %v6184
    %vm6191 = vmor %vm6189, %vm6190
    %v6192 = vsel %vm6191, %v6184, %v6188
    %v6193 = vand.u32 2147483647, %v5986
    %vm6194 = vcmp.eq.f32.partialorder %v6193, 8.507059e+37
    %v6195 = vand.u32 %v5986, 2147483648
    %v6196 = vor.u32 1.1754944e-38, %v6195
    %v6197 = vsel %vm6194, %v6196, %v6192
    %v6198 = vrcp.pop %v5987
    %v6199 = vmul.f32 %v5987, %v6198
    %v6200 = vsub.f32 1.0, %v6199
    %v6201 = vmul.f32 %v6198, %v6200
    %v6202 = vadd.f32 %v6198, %v6201
    %vm6203 = vweird.f32 %v5987
    %vm6204 = vweird.f32 %v6198
    %vm6205 = vmor %vm6203, %vm6204
    %v6206 = vsel %vm6205, %v6198, %v6202
    %v6207 = vand.u32 2147483647, %v5987
    %vm6208 = vcmp.eq.f32.partialorder %v6207, 8.507059e+37
    %v6209 = vand.u32 %v5987, 2147483648
    %v6210 = vor.u32 1.1754944e-38, %v6209
    %v6211 = vsel %vm6208, %v6210, %v6206
    %v6212 = vmul.f32 %v5843, %v6001
    %v6213 = vmul.f32 %v5844, %v6015
    %v6214 = vmul.f32 %v5845, %v6029
    %v6215 = vmul.f32 %v5846, %v6043
    %v6216 = vmul.f32 %v5847, %v6057
    %v6217 = vmul.f32 %v5848, %v6071
    %v6218 = vmul.f32 %v5849, %v6085
    %v6219 = vmul.f32 %v5850, %v6099
    %v6220 = vmul.f32 %v5851, %v6113
    %v6221 = vmul.f32 %v5852, %v6127
    %v6222 = vmul.f32 %v5853, %v6141
    %v6223 = vmul.f32 %v5854, %v6155
    %v6224 = vmul.f32 %v5855, %v6169
    %v6225 = vmul.f32 %v5856, %v6183
    %v6226 = vmul.f32 %v5857, %v6197
    %v6227 = vmul.f32 %v5858, %v6211
    %6229 = vset.pattern.permute.xlu0 0
    %6230 = vperm.xlu0 %6229, %v6212
    %v6231 = vpop.permute.xlu0 %6230
    %6234 = vset.pattern.permute.xlu0 0
    %6235 = vperm.xlu0 %6234, %v6213
    %v6236 = vpop.permute.xlu0 %6235
    %6239 = vset.pattern.permute.xlu0 0
    %6240 = vperm.xlu0 %6239, %v6214
    %v6241 = vpop.permute.xlu0 %6240
    %6244 = vset.pattern.permute.xlu0 0
    %6245 = vperm.xlu0 %6244, %v6215
    %v6246 = vpop.permute.xlu0 %6245
    %6249 = vset.pattern.permute.xlu0 0
    %6250 = vperm.xlu0 %6249, %v6216
    %v6251 = vpop.permute.xlu0 %6250
    %6254 = vset.pattern.permute.xlu0 0
    %6255 = vperm.xlu0 %6254, %v6217
    %v6256 = vpop.permute.xlu0 %6255
    %6259 = vset.pattern.permute.xlu0 0
    %6260 = vperm.xlu0 %6259, %v6218
    %v6261 = vpop.permute.xlu0 %6260
    %6264 = vset.pattern.permute.xlu0 0
    %6265 = vperm.xlu0 %6264, %v6219
    %v6266 = vpop.permute.xlu0 %6265
    %6269 = vset.pattern.permute.xlu0 0
    %6270 = vperm.xlu0 %6269, %v6220
    %v6271 = vpop.permute.xlu0 %6270
    %6274 = vset.pattern.permute.xlu0 0
    %6275 = vperm.xlu0 %6274, %v6221
    %v6276 = vpop.permute.xlu0 %6275
    %6279 = vset.pattern.permute.xlu0 0
    %6280 = vperm.xlu0 %6279, %v6222
    %v6281 = vpop.permute.xlu0 %6280
    %6284 = vset.pattern.permute.xlu0 0
    %6285 = vperm.xlu0 %6284, %v6223
    %v6286 = vpop.permute.xlu0 %6285
    %6289 = vset.pattern.permute.xlu0 0
    %6290 = vperm.xlu0 %6289, %v6224
    %v6291 = vpop.permute.xlu0 %6290
    %6294 = vset.pattern.permute.xlu0 0
    %6295 = vperm.xlu0 %6294, %v6225
    %v6296 = vpop.permute.xlu0 %6295
    %6299 = vset.pattern.permute.xlu0 0
    %6300 = vperm.xlu0 %6299, %v6226
    %v6301 = vpop.permute.xlu0 %6300
    %6304 = vset.pattern.permute.xlu0 0
    %6305 = vperm.xlu0 %6304, %v6227
    %v6306 = vpop.permute.xlu0 %6305
    %v6308 = vmul.f32 %v5572, %v6231
    %v6309 = vmul.f32 %v5573, %v6236
    %v6310 = vmul.f32 %v5574, %v6241
    %v6311 = vmul.f32 %v5575, %v6246
    %v6312 = vmul.f32 %v5576, %v6251
    %v6313 = vmul.f32 %v5577, %v6256
    %v6314 = vmul.f32 %v5578, %v6261
    %v6315 = vmul.f32 %v5579, %v6266
    %v6316 = vmul.f32 %v5580, %v6271
    %v6317 = vmul.f32 %v5581, %v6276
    %v6318 = vmul.f32 %v5582, %v6281
    %v6319 = vmul.f32 %v5583, %v6286
    %v6320 = vmul.f32 %v5584, %v6291
    %v6321 = vmul.f32 %v5585, %v6296
    %v6322 = vmul.f32 %v5586, %v6301
    %v6323 = vmul.f32 %v5587, %v6306
    %v6324 = vsel %vm89, %v6308, 0.0
    %v6325 = vrot.slane %v6324, 4
    %v6326 = vadd.f32 %v6324, %v6325
    %v6327 = vrot.slane %v6326, 2
    %v6328 = vadd.f32 %v6326, %v6327
    %v6329 = vrot.slane %v6328, 1
    %v6330 = vadd.f32 %v6328, %v6329
    %v6331 = vsel %vm89, %v6309, 0.0
    %v6332 = vrot.slane %v6331, 4
    %v6333 = vadd.f32 %v6331, %v6332
    %v6334 = vrot.slane %v6333, 2
    %v6335 = vadd.f32 %v6333, %v6334
    %v6336 = vrot.slane %v6335, 1
    %v6337 = vadd.f32 %v6335, %v6336
    %v6338 = vsel %vm89, %v6310, 0.0
    %v6339 = vrot.slane %v6338, 4
    %v6340 = vadd.f32 %v6338, %v6339
    %v6341 = vrot.slane %v6340, 2
    %v6342 = vadd.f32 %v6340, %v6341
    %v6343 = vrot.slane %v6342, 1
    %v6344 = vadd.f32 %v6342, %v6343
    %v6345 = vsel %vm89, %v6311, 0.0
    %v6346 = vrot.slane %v6345, 4
    %v6347 = vadd.f32 %v6345, %v6346
    %v6348 = vrot.slane %v6347, 2
    %v6349 = vadd.f32 %v6347, %v6348
    %v6350 = vrot.slane %v6349, 1
    %v6351 = vadd.f32 %v6349, %v6350
    %v6352 = vsel %vm89, %v6312, 0.0
    %v6353 = vrot.slane %v6352, 4
    %v6354 = vadd.f32 %v6352, %v6353
    %v6355 = vrot.slane %v6354, 2
    %v6356 = vadd.f32 %v6354, %v6355
    %v6357 = vrot.slane %v6356, 1
    %v6358 = vadd.f32 %v6356, %v6357
    %v6359 = vsel %vm89, %v6313, 0.0
    %v6360 = vrot.slane %v6359, 4
    %v6361 = vadd.f32 %v6359, %v6360
    %v6362 = vrot.slane %v6361, 2
    %v6363 = vadd.f32 %v6361, %v6362
    %v6364 = vrot.slane %v6363, 1
    %v6365 = vadd.f32 %v6363, %v6364
    %v6366 = vsel %vm89, %v6314, 0.0
    %v6367 = vrot.slane %v6366, 4
    %v6368 = vadd.f32 %v6366, %v6367
    %v6369 = vrot.slane %v6368, 2
    %v6370 = vadd.f32 %v6368, %v6369
    %v6371 = vrot.slane %v6370, 1
    %v6372 = vadd.f32 %v6370, %v6371
    %v6373 = vsel %vm89, %v6315, 0.0
    %v6374 = vrot.slane %v6373, 4
    %v6375 = vadd.f32 %v6373, %v6374
    %v6376 = vrot.slane %v6375, 2
    %v6377 = vadd.f32 %v6375, %v6376
    %v6378 = vrot.slane %v6377, 1
    %v6379 = vadd.f32 %v6377, %v6378
    %v6380 = vsel %vm89, %v6316, 0.0
    %v6381 = vrot.slane %v6380, 4
    %v6382 = vadd.f32 %v6380, %v6381
    %v6383 = vrot.slane %v6382, 2
    %v6384 = vadd.f32 %v6382, %v6383
    %v6385 = vrot.slane %v6384, 1
    %v6386 = vadd.f32 %v6384, %v6385
    %v6387 = vsel %vm89, %v6317, 0.0
    %v6388 = vrot.slane %v6387, 4
    %v6389 = vadd.f32 %v6387, %v6388
    %v6390 = vrot.slane %v6389, 2
    %v6391 = vadd.f32 %v6389, %v6390
    %v6392 = vrot.slane %v6391, 1
    %v6393 = vadd.f32 %v6391, %v6392
    %v6394 = vsel %vm89, %v6318, 0.0
    %v6395 = vrot.slane %v6394, 4
    %v6396 = vadd.f32 %v6394, %v6395
    %v6397 = vrot.slane %v6396, 2
    %v6398 = vadd.f32 %v6396, %v6397
    %v6399 = vrot.slane %v6398, 1
    %v6400 = vadd.f32 %v6398, %v6399
    %v6401 = vsel %vm89, %v6319, 0.0
    %v6402 = vrot.slane %v6401, 4
    %v6403 = vadd.f32 %v6401, %v6402
    %v6404 = vrot.slane %v6403, 2
    %v6405 = vadd.f32 %v6403, %v6404
    %v6406 = vrot.slane %v6405, 1
    %v6407 = vadd.f32 %v6405, %v6406
    %v6408 = vsel %vm89, %v6320, 0.0
    %v6409 = vrot.slane %v6408, 4
    %v6410 = vadd.f32 %v6408, %v6409
    %v6411 = vrot.slane %v6410, 2
    %v6412 = vadd.f32 %v6410, %v6411
    %v6413 = vrot.slane %v6412, 1
    %v6414 = vadd.f32 %v6412, %v6413
    %v6415 = vsel %vm89, %v6321, 0.0
    %v6416 = vrot.slane %v6415, 4
    %v6417 = vadd.f32 %v6415, %v6416
    %v6418 = vrot.slane %v6417, 2
    %v6419 = vadd.f32 %v6417, %v6418
    %v6420 = vrot.slane %v6419, 1
    %v6421 = vadd.f32 %v6419, %v6420
    %v6422 = vsel %vm89, %v6322, 0.0
    %v6423 = vrot.slane %v6422, 4
    %v6424 = vadd.f32 %v6422, %v6423
    %v6425 = vrot.slane %v6424, 2
    %v6426 = vadd.f32 %v6424, %v6425
    %v6427 = vrot.slane %v6426, 1
    %v6428 = vadd.f32 %v6426, %v6427
    %v6429 = vsel %vm89, %v6323, 0.0
    %v6430 = vrot.slane %v6429, 4
    %v6431 = vadd.f32 %v6429, %v6430
    %v6432 = vrot.slane %v6431, 2
    %v6433 = vadd.f32 %v6431, %v6432
    %v6434 = vrot.slane %v6433, 1
    %v6435 = vadd.f32 %v6433, %v6434
    %vm6452 = vcmask 1041409
    %v6453 = vsel %vm6452, %v6337, %v6330
    %vm6454 = vcmask 1042434
    %v6455 = vsel %vm6454, %v6344, %v6453
    %vm6456 = vcmask 1043459
    %v6457 = vsel %vm6456, %v6351, %v6455
    %vm6458 = vcmask 1044484
    %v6459 = vsel %vm6458, %v6358, %v6457
    %vm6460 = vcmask 1045509
    %v6461 = vsel %vm6460, %v6365, %v6459
    %vm6462 = vcmask 1046534
    %v6463 = vsel %vm6462, %v6372, %v6461
    %vm6464 = vcmask 1047559
    %v6465 = vsel %vm6464, %v6379, %v6463
    %v6466 = vsel %vm6452, %v6393, %v6386
    %v6467 = vsel %vm6454, %v6400, %v6466
    %v6468 = vsel %vm6456, %v6407, %v6467
    %v6469 = vsel %vm6458, %v6414, %v6468
    %v6470 = vsel %vm6460, %v6421, %v6469
    %v6471 = vsel %vm6462, %v6428, %v6470
    %v6472 = vsel %vm6464, %v6435, %v6471
    %6475 = vst.msk [vmem:[#allocation8] sm:$0xff] %vm89, %v6465
    %6476 = vst.msk [vmem:[#allocation8 + $0x8] sm:$0xff] %vm89, %v6472
    // Predicated region
    $region34: #{tpu_custom_call.1} parent=1 // pred_check
      _
    $region35: #{tpu_custom_call.1} parent=1 // pred_check_branch
      %6478 = sbr.rel (0) target = $region37
    $region36: #{tpu_custom_call.1} parent=1 // pred_region
      %6480 = vsyncadd [#allocation5], 0
      %s6481 = sshll.u32 [#allocation8], 4
      %s6482 = int_to_ptr.vmem [resolvable:$true] %s6481
      %s6483 = sshll.u32 %s6, 4
      %s6484 = int_to_ptr.hbm [resolvable:$true] %s6483
      %6489 = dma.vmem_to_hbm [thread:$0]  %s6482, 256, %s6484, [#allocation5], 128, 128, 8
    $region37: #{tpu_custom_call.1} parent=1 // pred_fallthru
      _
    // Predicated region
    $region38: #{tpu_custom_call.1} parent=1 // pred_check
      _
    $region39: #{tpu_custom_call.1} parent=1 // pred_check_branch
      %6491 = sbr.rel (0) target = $region41
    $region40: #{tpu_custom_call.1} parent=1 // pred_region
      %6493 = dma.done [#allocation5], 256
    $region41: #{tpu_custom_call.1} parent=1 // pred_fallthru
      _
    %6494 = vsyncpa [#allocation4], 1
    %6495 = vsyncpa [#allocation7], 1
    %6496 = vsyncpa [#allocation5], 1

</llo_original>
